<compile_context>
chip_gen: v7x
topology: tpu7x:2x2x1
jax: 0.10.0
libtpu: 0.0.40
codegen_flags: <defaults>
</compile_context>

<pallas_src>
import math

import jax
import jax.numpy as jnp
import numpy as np
from jax.experimental import pallas as pl
from jax.experimental.pallas import tpu as pltpu


# ----------------------------------------------------------------------------
# Pallas kernel
# ----------------------------------------------------------------------------
def _han_word_kernel(
    x_ref,            # (B, M, D)   embedded words, time-major, M = S_BLK * A
    wih_ref,          # (D, 6H)     [fwd r|z|n, bwd r|z|n] input weights
    bi_ref,           # (1, 6H)     folded input biases (b_ih+b_hh for r/z, b_ih for n)
    whh_f_ref,        # (H, 3H)     fwd hidden weights, gates concatenated
    whh_b_ref,        # (H, 3H)
    bhh_f_ref,        # (1, 3H)     [0, 0, b_hh_n]  (b_hh_n is multiplied by r)
    bhh_b_ref,        # (1, 3H)
    wl_ref,           # (2, H, 2H)  attention linear split by fwd/bwd half of h
    bl_ref,           # (1, 2H)
    ctx_ref,          # (1, 2H)     word context weights
    out_ref,          # (B, S_BLK, 2H): fwd half [..., :H], bwd half [..., H:]
    hf_scr, hb_scr,       # hidden scratch: (B, M, H) each
    gif_scr, gib_scr,     # precomputed input gates: (B, M, 3H) each
):
    B, M, D = x_ref.shape
    H = hf_scr.shape[-1]
    G3 = 3 * H
    S_BLK = out_ref.shape[1]
    A = M // S_BLK
    f32 = jnp.float32

    # ---- hoisted input projections: ONE (B*M, D) @ (D, 6H) matmul -----------
    x2 = x_ref[...].reshape(B * M, D)
    g_all = jnp.dot(x2, wih_ref[...], preferred_element_type=f32) + bi_ref[...]
    g_all = g_all.reshape(B, M, 2 * G3)
    gif_scr[...] = g_all[:, :, :G3]          # fwd gates, lane-dense (B, M, 3H)
    gib_scr[...] = g_all[:, :, G3:]          # bwd gates

    whh_f = whh_f_ref[...]
    whh_b = whh_b_ref[...]
    # hoist the (1,3H)->(M,3H) n-gate bias broadcasts out of the unrolled loop
    bhh_f = jnp.broadcast_to(bhh_f_ref[...], (M, G3))
    bhh_b = jnp.broadcast_to(bhh_b_ref[...], (M, G3))

    def gru_step(h_prev, gi, whh, bhh):
        # PyTorch GRU cell, gate order [r, z, n]; gi already includes
        # b_ih+b_hh for r/z and b_ih for n; bhh carries b_hh_n in the n slot.
        gh = jnp.dot(h_prev.astype(whh.dtype), whh,
                     preferred_element_type=f32) + bhh          # (M, 3H)
        r = jax.nn.sigmoid(gi[:, :H] + gh[:, :H])
        z = jax.nn.sigmoid(gi[:, H:2 * H] + gh[:, H:2 * H])
        n = jnp.tanh(gi[:, 2 * H:] + r * gh[:, 2 * H:])
        return n + z * (h_prev - n)          # == (1-z)*n + z*h_prev

    # ---- interleaved fwd / bwd recurrence (two independent chains) ----------
    hf = jnp.zeros((M, H), f32)
    hb = jnp.zeros((M, H), f32)
    for t in range(B):
        tb = B - 1 - t
        hf = gru_step(hf, gif_scr[t, :, :], whh_f, bhh_f)
        hb = gru_step(hb, gib_scr[tb, :, :], whh_b, bhh_b)
        hf_scr[t, :, :] = hf                 # full-tile (M, H) stores
        hb_scr[tb, :, :] = hb
    # TODO(synk): if S_BLK*A is pushed past ~128 and the bundle dump shows vreg
    # spills, switch this unrolled loop to lax.fori_loop with (hf, hb) carries.

    # ---- vectorized attention epilogue --------------------------------------
    hf_all = hf_scr[...]                     # (B, M, H)
    hb_all = hb_scr[...]
    cdt = wl_ref.dtype
    hf2 = hf_all.reshape(B * M, H).astype(cdt)
    hb2 = hb_all.reshape(B * M, H).astype(cdt)
    u = jnp.tanh(
        jnp.dot(hf2, wl_ref[0, :, :], preferred_element_type=f32)
        + jnp.dot(hb2, wl_ref[1, :, :], preferred_element_type=f32)
        + bl_ref[...]
    )                                        # (B*M, 2H)
    s = jnp.sum(u * ctx_ref[...], axis=-1, keepdims=True)       # (B*M, 1)
    s = s.reshape(B, S_BLK, A, 1)

    # softmax over A, per (time position b, sentence s_local)
    m = jnp.max(s, axis=2, keepdims=True)                        # (B, S_BLK, 1, 1)
    e = jnp.exp(s - m)
    alpha = e / jnp.sum(e, axis=2, keepdims=True)                # (B, S_BLK, A, 1)

    hf4 = hf_all.reshape(B, S_BLK, A, H)
    hb4 = hb_all.reshape(B, S_BLK, A, H)
    wf = jnp.sum(hf4 * alpha, axis=2)                            # (B, S_BLK, H)
    wb = jnp.sum(hb4 * alpha, axis=2)
    # write the two halves directly into lane ranges (no concatenate)
    out_ref[:, :, :H] = wf.astype(out_ref.dtype)
    out_ref[:, :, H:] = wb.astype(out_ref.dtype)


# ----------------------------------------------------------------------------
# Weight preparation
# ----------------------------------------------------------------------------
def _prep_weights(params, H, matmul_dtype):
    """Split/concat GRU weights per gate, fold biases, transpose for x @ W form."""
    twoH = 2 * H
    G3 = 3 * H

    def split_dir(w_ih, w_hh, b_ih, b_hh):
        w_ih = jnp.asarray(w_ih, jnp.float32)
        w_hh = jnp.asarray(w_hh, jnp.float32)
        b_ih = jnp.asarray(b_ih, jnp.float32)
        b_hh = jnp.asarray(b_hh, jnp.float32)
        wih = w_ih.T                                            # (D, 3H) cols [r|z|n]
        whh = w_hh.T                                            # (H, 3H)
        # r,z: fold both biases into the hoisted input projection; n: b_ih only.
        bi = jnp.concatenate([b_ih[:twoH] + b_hh[:twoH], b_ih[twoH:]]).reshape(1, G3)
        # hidden-side bias: zeros for r,z; b_hh_n for n (it sits inside r * (...)).
        bhh = jnp.concatenate([jnp.zeros((twoH,), jnp.float32),
                               b_hh[twoH:]]).reshape(1, G3)
        return wih, whh, bi, bhh

    wih_f, whh_f, bi_f, bhh_f = split_dir(params["w_ih_f"], params["w_hh_f"],
                                          params["b_ih_f"], params["b_hh_f"])
    wih_b, whh_b, bi_b, bhh_b = split_dir(params["w_ih_b"], params["w_hh_b"],
                                          params["b_ih_b"], params["b_hh_b"])

    wih_all = jnp.concatenate([wih_f, wih_b], axis=1)           # (D, 6H)
    bi_all = jnp.concatenate([bi_f, bi_b], axis=1)              # (1, 6H)

    wlT = jnp.asarray(params["w_l"], jnp.float32).T             # (2H, 2H) = W_l.T
    wl = jnp.stack([wlT[:H, :], wlT[H:, :]])                    # (2, H, 2H)
    bl = jnp.asarray(params["b_l"], jnp.float32).reshape(1, twoH)
    ctx = jnp.asarray(params["ctx"], jnp.float32).reshape(1, twoH)

    # Matmul operands optionally bf16 (MXU-native on v6e/v7x); biases stay f32.
    return [
        wih_all.astype(matmul_dtype),
        bi_all,
        whh_f.astype(matmul_dtype), whh_b.astype(matmul_dtype),
        bhh_f, bhh_b,
        wl.astype(matmul_dtype),
        bl, ctx,
    ]


# ----------------------------------------------------------------------------
# Wrapper
# ----------------------------------------------------------------------------
def word_level_rnn_pallas(x_ids, params, *, matmul_dtype=jnp.float32,
                          rows_target=128):
    """x_ids: (A, B) word indices (module semantics) or (S, A, B) batched.

    rows_target: desired M = S_BLK*A rows per recurrence matmul (128 suits
    v5e's 128-wide MXU and keeps vreg pressure low; 256 is reasonable on
    v6e/v7x when S is large).
    """
    vectors = jnp.asarray(params["vectors"], jnp.float32)
    H = params["w_hh_f"].shape[1]
    D = vectors.shape[1]
    twoH = 2 * H

    if x_ids.ndim == 2:
        x_ids = x_ids[None]                                     # (1, A, B)
    S, A, B = x_ids.shape

    # ---- sentence blocking: fold S_BLK sentences into the GRU batch dim ----
    s_blk = max(1, rows_target // A)
    s_blk = min(s_blk, S)
    if S > 1:
        # keep >= 2 grid steps so both TensorCores get work on v7x megacore
        s_blk = min(s_blk, -(-S // 2))
    num_blocks = -(-S // s_blk)
    S_pad = num_blocks * s_blk
    M = s_blk * A

    if S_pad != S:
        pad = jnp.zeros((S_pad - S, A, B), x_ids.dtype)
        x_ids = jnp.concatenate([x_ids, pad], axis=0)

    # Transpose/block the tiny int32 index array (not the embedded tensor):
    # idx[g, b, m] with m = s_local*A + a.
    idx = x_ids.reshape(num_blocks, s_blk, A, B)
    idx = jnp.transpose(idx, (0, 3, 1, 2)).reshape(num_blocks, B, M)
    # Embedding gather in plain JAX (data-dependent gather).
    # TODO(synk): for large vocab/D, fuse the gather into the kernel via a
    # manual DMA gather from a pl.ANY vectors ref instead of materializing emb.
    emb = jnp.take(vectors, idx, axis=0).astype(matmul_dtype)   # (nb, B, M, D)

    weights = _prep_weights(params, H, matmul_dtype)

    def const_spec(shape):
        nd = len(shape)
        return pl.BlockSpec(tuple(shape), lambda g, _nd=nd: (0,) * _nd)

    in_specs = [pl.BlockSpec((None, B, M, D), lambda g: (g, 0, 0, 0))]
    in_specs += [const_spec(w.shape) for w in weights]          # weights stay resident

    out_shape = jax.ShapeDtypeStruct((num_blocks, B, s_blk, twoH), jnp.float32)
    out_specs = pl.BlockSpec((None, B, s_blk, twoH), lambda g: (g, 0, 0, 0))

    scratch_shapes = [
        pltpu.VMEM((B, M, H), jnp.float32),                     # fwd hidden states
        pltpu.VMEM((B, M, H), jnp.float32),                     # bwd hidden states
        pltpu.VMEM((B, M, 3 * H), jnp.float32),                 # fwd input gates
        pltpu.VMEM((B, M, 3 * H), jnp.float32),                 # bwd input gates
    ]

    # Explicit VMEM budget: 2x-buffered in/out blocks + weights + scratch,
    # with 2x margin, capped at 48 MiB (safe under v7x's 64 MiB physical VMEM).
    c_item = jnp.dtype(matmul_dtype).itemsize
    emb_blk_bytes = B * M * D * c_item
    out_blk_bytes = B * s_blk * twoH * 4
    weight_bytes = sum(int(np.prod(w.shape)) * w.dtype.itemsize for w in weights)
    scratch_bytes = (2 * B * M * H + 2 * B * M * 3 * H) * 4
    vmem_need = 2 * emb_blk_bytes + 2 * out_blk_bytes + weight_bytes + scratch_bytes
    vmem_limit = int(min(max(2 * vmem_need, 32 * 1024 * 1024), 48 * 1024 * 1024))

    grid_spec = pltpu.PrefetchScalarGridSpec(
        num_scalar_prefetch=0,
        grid=(num_blocks,),
        in_specs=in_specs,
        out_specs=out_specs,
        scratch_shapes=scratch_shapes,
    )

    out = pl.pallas_call(
        _han_word_kernel,
        out_shape=out_shape,
        grid_spec=grid_spec,
        compiler_params=pltpu.CompilerParams(
            dimension_semantics=("parallel",),                  # sentence blocks independent
            vmem_limit_bytes=vmem_limit,
        ),
    )(emb, *weights)

    # (nb, B, s_blk, 2H) -> (S_pad, B, 2H) -> drop padded sentences.
    out = jnp.transpose(out, (0, 2, 1, 3)).reshape(S_pad, B, twoH)[:S]
    return out                               # (1, B, 2H) for 2-D input, else (S, B, 2H)


# ----------------------------------------------------------------------------
# Pure-JAX reference (mirrors the PyTorch forward exactly)
# ----------------------------------------------------------------------------
def word_level_rnn_ref(x_ids, params):
    emb = params["vectors"][x_ids]                       # (A, B, D)
    A, B = x_ids.shape
    H = params["w_hh_f"].shape[1]

    def run_dir(Wih, Whh, bih, bhh, reverse):
        h = jnp.zeros((A, H), jnp.float32)
        outs = [None] * B
        order = range(B - 1, -1, -1) if reverse else range(B)
        for t in order:
            gi = emb[:, t] @ Wih.T + bih
            gh = h @ Whh.T + bhh
            r = jax.nn.sigmoid(gi[:, :H] + gh[:, :H])
            z = jax.nn.sigmoid(gi[:, H:2 * H] + gh[:, H:2 * H])
            n = jnp.tanh(gi[:, 2 * H:] + r * gh[:, 2 * H:])
            h = (1.0 - z) * n + z * h
            outs[t] = h
        return jnp.stack(outs, axis=1)                   # (A, B, H)

    hf = run_dir(params["w_ih_f"], params["w_hh_f"], params["b_ih_f"], params["b_hh_f"], False)
    hb = run_dir(params["w_ih_b"], params["w_hh_b"], params["b_ih_b"], params["b_hh_b"], True)
    h = jnp.concatenate([hf, hb], axis=-1)               # (A, B, 2H)

    u = jnp.tanh(h @ params["w_l"].T + params["b_l"])    # (A, B, 2H)
    s = (u @ params["ctx"])[..., 0]                      # (A, B)
    alpha = jax.nn.softmax(s.T, axis=-1)                 # (B, A): softmax over A
    weighted = h * alpha.T[:, :, None]                   # (A, B, 2H)
    return jnp.sum(weighted, axis=0)[None]               # (1, B, 2H)


# ----------------------------------------------------------------------------
# Main
# ----------------------------------------------------------------------------
if __name__ == "__main__":
    vocab, D, H = 64, 32, 32
    A, B = 8, 8                                          # x shape: (A, B) word indices

    key = jax.random.PRNGKey(0)
    ks = jax.random.split(key, 16)
    stdv = 1.0 / math.sqrt(H)
    stdv2 = 1.0 / math.sqrt(2 * H)

    def unif(k, shape, s):
        return jax.random.uniform(k, shape, jnp.float32, -s, s)

    params = dict(
        vectors=jax.random.normal(ks[0], (vocab, D), jnp.float32) * 0.5,
        w_ih_f=unif(ks[1], (3 * H, D), stdv),
        w_hh_f=unif(ks[2], (3 * H, H), stdv),
        b_ih_f=unif(ks[3], (3 * H,), stdv),
        b_hh_f=unif(ks[4], (3 * H,), stdv),
        w_ih_b=unif(ks[5], (3 * H, D), stdv),
        w_hh_b=unif(ks[6], (3 * H, H), stdv),
        b_ih_b=unif(ks[7], (3 * H,), stdv),
        b_hh_b=unif(ks[8], (3 * H,), stdv),
        w_l=unif(ks[9], (2 * H, 2 * H), stdv2),
        b_l=unif(ks[10], (2 * H,), stdv2),
        ctx=jax.random.normal(ks[11], (2 * H, 1), jnp.float32) * stdv2,
    )
    x_ids = jax.random.randint(ks[12], (A, B), 0, vocab, dtype=jnp.int32)

    # --- single sentence: exact module semantics (f32, tight tolerance) ---
    out = jax.block_until_ready(word_level_rnn_pallas(x_ids, params))
    ref = jax.block_until_ready(word_level_rnn_ref(x_ids, params))
    assert out.shape == (1, B, 2 * H), out.shape
    if not np.allclose(np.asarray(out), np.asarray(ref), rtol=1e-4, atol=1e-5):
        raise AssertionError("Pallas kernel (f32) does not match reference (single)")

    # --- batched sentences: exercises sentence blocking, padding and grid>1 ---
    S = 5                                               # -> s_blk=3, 2 grid steps, 1 padded sentence
    xb = jax.random.randint(ks[13], (S, A, B), 0, vocab, dtype=jnp.int32)
    outb = jax.block_until_ready(word_level_rnn_pallas(xb, params))
    refb = jnp.stack([word_level_rnn_ref(xb[i], params)[0] for i in range(S)])
    assert outb.shape == (S, B, 2 * H), outb.shape
    if not np.allclose(np.asarray(outb), np.asarray(refb), rtol=1e-4, atol=1e-5):
        raise AssertionError("Batched Pallas kernel (f32) does not match reference")

    # --- bf16 matmul-operand fast path (MXU-native on v6e/v7x), looser tol ---
    outb16 = jax.block_until_ready(
        word_level_rnn_pallas(xb, params, matmul_dtype=jnp.bfloat16))
    if not np.allclose(np.asarray(outb16), np.asarray(refb), rtol=1e-1, atol=1e-1):
        raise AssertionError("Batched Pallas kernel (bf16 operands) diverged from reference")

    print("KERNEL_OK")
</pallas_src>

<mosaic_0001>
module attributes {stable_mosaic.version = 11 : i64} {
  func.func @_han_word_kernel(%arg0: i32, %arg1: memref<1x8x8x32xf32, #tpu.memory_space<vmem>>, %arg2: memref<32x192xf32, #tpu.memory_space<vmem>>, %arg3: memref<1x192xf32, #tpu.memory_space<vmem>>, %arg4: memref<32x96xf32, #tpu.memory_space<vmem>>, %arg5: memref<32x96xf32, #tpu.memory_space<vmem>>, %arg6: memref<1x96xf32, #tpu.memory_space<vmem>>, %arg7: memref<1x96xf32, #tpu.memory_space<vmem>>, %arg8: memref<2x32x64xf32, #tpu.memory_space<vmem>>, %arg9: memref<1x64xf32, #tpu.memory_space<vmem>>, %arg10: memref<1x64xf32, #tpu.memory_space<vmem>>, %arg11: memref<1x8x1x64xf32, #tpu.memory_space<vmem>>, %arg12: memref<8x8x32xf32, #tpu.memory_space<vmem>>, %arg13: memref<8x8x32xf32, #tpu.memory_space<vmem>>, %arg14: memref<8x8x96xf32, #tpu.memory_space<vmem>>, %arg15: memref<8x8x96xf32, #tpu.memory_space<vmem>>) attributes {dimension_semantics = [#tpu.dimension_semantics<parallel>], iteration_bounds = array<i64: 1>, scalar_prefetch = 0 : i64, scratch_operands = 4 : i64, tpu.core_type = #tpu.core_type<tc>, window_params = [{transform_indices = @transform_0, window_bounds = array<i64: 1, 8, 8, 32>}, {pipeline_mode = #tpu.pipeline_mode<synchronous>, transform_indices = @transform_1, window_bounds = array<i64: 32, 192>}, {pipeline_mode = #tpu.pipeline_mode<synchronous>, transform_indices = @transform_2, window_bounds = array<i64: 1, 192>}, {pipeline_mode = #tpu.pipeline_mode<synchronous>, transform_indices = @transform_3, window_bounds = array<i64: 32, 96>}, {pipeline_mode = #tpu.pipeline_mode<synchronous>, transform_indices = @transform_4, window_bounds = array<i64: 32, 96>}, {pipeline_mode = #tpu.pipeline_mode<synchronous>, transform_indices = @transform_5, window_bounds = array<i64: 1, 96>}, {pipeline_mode = #tpu.pipeline_mode<synchronous>, transform_indices = @transform_6, window_bounds = array<i64: 1, 96>}, {pipeline_mode = #tpu.pipeline_mode<synchronous>, transform_indices = @transform_7, window_bounds = array<i64: 2, 32, 64>}, {pipeline_mode = #tpu.pipeline_mode<synchronous>, transform_indices = @transform_8, window_bounds = array<i64: 1, 64>}, {pipeline_mode = #tpu.pipeline_mode<synchronous>, transform_indices = @transform_9, window_bounds = array<i64: 1, 64>}, {transform_indices = @transform_10, window_bounds = array<i64: 1, 8, 1, 64>}]} {
    %c0 = arith.constant 0 : index
    %c0_0 = arith.constant 0 : index
    %c0_1 = arith.constant 0 : index
    %c0_2 = arith.constant 0 : index
    %0 = vector.load %arg1[%c0, %c0_0, %c0_1, %c0_2] : memref<1x8x8x32xf32, #tpu.memory_space<vmem>>, vector<1x8x8x32xf32>
    %1 = vector.shape_cast %0 : vector<1x8x8x32xf32> to vector<8x8x32xf32>
    %2 = vector.shape_cast %1 : vector<8x8x32xf32> to vector<64x32xf32>
    %c0_3 = arith.constant 0 : index
    %c0_4 = arith.constant 0 : index
    %3 = vector.load %arg2[%c0_3, %c0_4] : memref<32x192xf32, #tpu.memory_space<vmem>>, vector<32x192xf32>
    %cst = arith.constant dense<0.000000e+00> : vector<64x192xf32>
    %4 = tpu.matmul %2, %3, %cst {dimension_numbers = #tpu.dot_dimension_numbers<[1], [0], [0], [1], [0, 0, 1, 1], [], []>} : vector<64x32xf32>, vector<32x192xf32>, vector<64x192xf32> -> vector<64x192xf32>
    %c0_5 = arith.constant 0 : index
    %c0_6 = arith.constant 0 : index
    %5 = vector.load %arg3[%c0_5, %c0_6] : memref<1x192xf32, #tpu.memory_space<vmem>>, vector<1x192xf32>
    %6 = vector.broadcast %5 : vector<1x192xf32> to vector<64x192xf32>
    %7 = arith.addf %4, %6 : vector<64x192xf32>
    %8 = vector.shape_cast %7 : vector<64x192xf32> to vector<8x8x192xf32>
    %9 = vector.extract_strided_slice %8 {offsets = [0, 0, 0], sizes = [8, 8, 96], strides = [1, 1, 1]} : vector<8x8x192xf32> to vector<8x8x96xf32>
    %c0_7 = arith.constant 0 : index
    %c0_8 = arith.constant 0 : index
    %c0_9 = arith.constant 0 : index
    %10 = vector.load %arg14[%c0_7, %c0_8, %c0_9] : memref<8x8x96xf32, #tpu.memory_space<vmem>>, vector<8x8x96xf32>
    tpu.vector_store %arg14[%c0_7, %c0_8, %c0_9], %9 {strides = array<i32>} : memref<8x8x96xf32, #tpu.memory_space<vmem>>, vector<8x8x96xf32>,
    %11 = vector.extract_strided_slice %8 {offsets = [0, 0, 96], sizes = [8, 8, 96], strides = [1, 1, 1]} : vector<8x8x192xf32> to vector<8x8x96xf32>
    %c0_10 = arith.constant 0 : index
    %c0_11 = arith.constant 0 : index
    %c0_12 = arith.constant 0 : index
    %12 = vector.load %arg15[%c0_10, %c0_11, %c0_12] : memref<8x8x96xf32, #tpu.memory_space<vmem>>, vector<8x8x96xf32>
    tpu.vector_store %arg15[%c0_10, %c0_11, %c0_12], %11 {strides = array<i32>} : memref<8x8x96xf32, #tpu.memory_space<vmem>>, vector<8x8x96xf32>,
    %c0_13 = arith.constant 0 : index
    %c0_14 = arith.constant 0 : index
    %13 = vector.load %arg4[%c0_13, %c0_14] : memref<32x96xf32, #tpu.memory_space<vmem>>, vector<32x96xf32>
    %c0_15 = arith.constant 0 : index
    %c0_16 = arith.constant 0 : index
    %14 = vector.load %arg5[%c0_15, %c0_16] : memref<32x96xf32, #tpu.memory_space<vmem>>, vector<32x96xf32>
    %c0_17 = arith.constant 0 : index
    %c0_18 = arith.constant 0 : index
    %15 = vector.load %arg6[%c0_17, %c0_18] : memref<1x96xf32, #tpu.memory_space<vmem>>, vector<1x96xf32>
    %16 = vector.shape_cast %15 : vector<1x96xf32> to vector<1x96xf32>
    %17 = vector.broadcast %16 : vector<1x96xf32> to vector<8x96xf32>
    %c0_19 = arith.constant 0 : index
    %c0_20 = arith.constant 0 : index
    %18 = vector.load %arg7[%c0_19, %c0_20] : memref<1x96xf32, #tpu.memory_space<vmem>>, vector<1x96xf32>
    %19 = vector.shape_cast %18 : vector<1x96xf32> to vector<1x96xf32>
    %20 = vector.broadcast %19 : vector<1x96xf32> to vector<8x96xf32>
    %cst_21 = arith.constant 0.000000e+00 : f32
    %21 = vector.broadcast %cst_21 : f32 to vector<8x32xf32>
    %cst_22 = arith.constant 0.000000e+00 : f32
    %22 = vector.broadcast %cst_22 : f32 to vector<8x32xf32>
    %c0_23 = arith.constant 0 : index
    %c0_24 = arith.constant 0 : index
    %c0_25 = arith.constant 0 : index
    %23 = vector.load %arg14[%c0_23, %c0_24, %c0_25] : memref<8x8x96xf32, #tpu.memory_space<vmem>>, vector<1x8x96xf32>
    %24 = vector.shape_cast %23 : vector<1x8x96xf32> to vector<8x96xf32>
    %cst_26 = arith.constant dense<0.000000e+00> : vector<8x96xf32>
    %25 = tpu.matmul %21, %13, %cst_26 {dimension_numbers = #tpu.dot_dimension_numbers<[1], [0], [0], [1], [0, 0, 1, 1], [], []>} : vector<8x32xf32>, vector<32x96xf32>, vector<8x96xf32> -> vector<8x96xf32>
    %26 = arith.addf %25, %17 : vector<8x96xf32>
    %27 = vector.extract_strided_slice %24 {offsets = [0, 0], sizes = [8, 32], strides = [1, 1]} : vector<8x96xf32> to vector<8x32xf32>
    %28 = vector.extract_strided_slice %26 {offsets = [0, 0], sizes = [8, 32], strides = [1, 1]} : vector<8x96xf32> to vector<8x32xf32>
    %29 = arith.addf %27, %28 : vector<8x32xf32>
    %30 = arith.negf %29 : vector<8x32xf32>
    %31 = math.exp %30 : vector<8x32xf32>
    %cst_27 = arith.constant 1.000000e+00 : f32
    %32 = vector.broadcast %cst_27 : f32 to vector<8x32xf32>
    %33 = arith.addf %32, %31 : vector<8x32xf32>
    %34 = arith.divf %32, %33 : vector<8x32xf32>
    %35 = vector.extract_strided_slice %24 {offsets = [0, 32], sizes = [8, 32], strides = [1, 1]} : vector<8x96xf32> to vector<8x32xf32>
    %36 = vector.extract_strided_slice %26 {offsets = [0, 32], sizes = [8, 32], strides = [1, 1]} : vector<8x96xf32> to vector<8x32xf32>
    %37 = arith.addf %35, %36 : vector<8x32xf32>
    %38 = arith.negf %37 : vector<8x32xf32>
    %39 = math.exp %38 : vector<8x32xf32>
    %cst_28 = arith.constant 1.000000e+00 : f32
    %40 = vector.broadcast %cst_28 : f32 to vector<8x32xf32>
    %41 = arith.addf %40, %39 : vector<8x32xf32>
    %42 = arith.divf %40, %41 : vector<8x32xf32>
    %43 = vector.extract_strided_slice %24 {offsets = [0, 64], sizes = [8, 32], strides = [1, 1]} : vector<8x96xf32> to vector<8x32xf32>
    %44 = vector.extract_strided_slice %26 {offsets = [0, 64], sizes = [8, 32], strides = [1, 1]} : vector<8x96xf32> to vector<8x32xf32>
    %45 = arith.mulf %34, %44 : vector<8x32xf32>
    %46 = arith.addf %43, %45 : vector<8x32xf32>
    %47 = math.tanh %46 : vector<8x32xf32>
    %48 = arith.subf %21, %47 : vector<8x32xf32>
    %49 = arith.mulf %42, %48 : vector<8x32xf32>
    %50 = arith.addf %47, %49 : vector<8x32xf32>
    %c7 = arith.constant 7 : index
    %c0_29 = arith.constant 0 : index
    %c0_30 = arith.constant 0 : index
    %51 = vector.load %arg15[%c7, %c0_29, %c0_30] : memref<8x8x96xf32, #tpu.memory_space<vmem>>, vector<1x8x96xf32>
    %52 = vector.shape_cast %51 : vector<1x8x96xf32> to vector<8x96xf32>
    %cst_31 = arith.constant dense<0.000000e+00> : vector<8x96xf32>
    %53 = tpu.matmul %22, %14, %cst_31 {dimension_numbers = #tpu.dot_dimension_numbers<[1], [0], [0], [1], [0, 0, 1, 1], [], []>} : vector<8x32xf32>, vector<32x96xf32>, vector<8x96xf32> -> vector<8x96xf32>
    %54 = arith.addf %53, %20 : vector<8x96xf32>
    %55 = vector.extract_strided_slice %52 {offsets = [0, 0], sizes = [8, 32], strides = [1, 1]} : vector<8x96xf32> to vector<8x32xf32>
    %56 = vector.extract_strided_slice %54 {offsets = [0, 0], sizes = [8, 32], strides = [1, 1]} : vector<8x96xf32> to vector<8x32xf32>
    %57 = arith.addf %55, %56 : vector<8x32xf32>
    %58 = arith.negf %57 : vector<8x32xf32>
    %59 = math.exp %58 : vector<8x32xf32>
    %cst_32 = arith.constant 1.000000e+00 : f32
    %60 = vector.broadcast %cst_32 : f32 to vector<8x32xf32>
    %61 = arith.addf %60, %59 : vector<8x32xf32>
    %62 = arith.divf %60, %61 : vector<8x32xf32>
    %63 = vector.extract_strided_slice %52 {offsets = [0, 32], sizes = [8, 32], strides = [1, 1]} : vector<8x96xf32> to vector<8x32xf32>
    %64 = vector.extract_strided_slice %54 {offsets = [0, 32], sizes = [8, 32], strides = [1, 1]} : vector<8x96xf32> to vector<8x32xf32>
    %65 = arith.addf %63, %64 : vector<8x32xf32>
    %66 = arith.negf %65 : vector<8x32xf32>
    %67 = math.exp %66 : vector<8x32xf32>
    %cst_33 = arith.constant 1.000000e+00 : f32
    %68 = vector.broadcast %cst_33 : f32 to vector<8x32xf32>
    %69 = arith.addf %68, %67 : vector<8x32xf32>
    %70 = arith.divf %68, %69 : vector<8x32xf32>
    %71 = vector.extract_strided_slice %52 {offsets = [0, 64], sizes = [8, 32], strides = [1, 1]} : vector<8x96xf32> to vector<8x32xf32>
    %72 = vector.extract_strided_slice %54 {offsets = [0, 64], sizes = [8, 32], strides = [1, 1]} : vector<8x96xf32> to vector<8x32xf32>
    %73 = arith.mulf %62, %72 : vector<8x32xf32>
    %74 = arith.addf %71, %73 : vector<8x32xf32>
    %75 = math.tanh %74 : vector<8x32xf32>
    %76 = arith.subf %22, %75 : vector<8x32xf32>
    %77 = arith.mulf %70, %76 : vector<8x32xf32>
    %78 = arith.addf %75, %77 : vector<8x32xf32>
    %c0_34 = arith.constant 0 : index
    %c0_35 = arith.constant 0 : index
    %c0_36 = arith.constant 0 : index
    %79 = vector.load %arg12[%c0_34, %c0_35, %c0_36] : memref<8x8x32xf32, #tpu.memory_space<vmem>>, vector<1x8x32xf32>
    %80 = vector.shape_cast %79 : vector<1x8x32xf32> to vector<8x32xf32>
    %81 = vector.shape_cast %50 : vector<8x32xf32> to vector<1x8x32xf32>
    tpu.vector_store %arg12[%c0_34, %c0_35, %c0_36], %81 {strides = array<i32>} : memref<8x8x32xf32, #tpu.memory_space<vmem>>, vector<1x8x32xf32>,
    %c7_37 = arith.constant 7 : index
    %c0_38 = arith.constant 0 : index
    %c0_39 = arith.constant 0 : index
    %82 = vector.load %arg13[%c7_37, %c0_38, %c0_39] : memref<8x8x32xf32, #tpu.memory_space<vmem>>, vector<1x8x32xf32>
    %83 = vector.shape_cast %82 : vector<1x8x32xf32> to vector<8x32xf32>
    %84 = vector.shape_cast %78 : vector<8x32xf32> to vector<1x8x32xf32>
    tpu.vector_store %arg13[%c7_37, %c0_38, %c0_39], %84 {strides = array<i32>} : memref<8x8x32xf32, #tpu.memory_space<vmem>>, vector<1x8x32xf32>,
    %c1 = arith.constant 1 : index
    %c0_40 = arith.constant 0 : index
    %c0_41 = arith.constant 0 : index
    %85 = vector.load %arg14[%c1, %c0_40, %c0_41] : memref<8x8x96xf32, #tpu.memory_space<vmem>>, vector<1x8x96xf32>
    %86 = vector.shape_cast %85 : vector<1x8x96xf32> to vector<8x96xf32>
    %cst_42 = arith.constant dense<0.000000e+00> : vector<8x96xf32>
    %87 = tpu.matmul %50, %13, %cst_42 {dimension_numbers = #tpu.dot_dimension_numbers<[1], [0], [0], [1], [0, 0, 1, 1], [], []>} : vector<8x32xf32>, vector<32x96xf32>, vector<8x96xf32> -> vector<8x96xf32>
    %88 = arith.addf %87, %17 : vector<8x96xf32>
    %89 = vector.extract_strided_slice %86 {offsets = [0, 0], sizes = [8, 32], strides = [1, 1]} : vector<8x96xf32> to vector<8x32xf32>
    %90 = vector.extract_strided_slice %88 {offsets = [0, 0], sizes = [8, 32], strides = [1, 1]} : vector<8x96xf32> to vector<8x32xf32>
    %91 = arith.addf %89, %90 : vector<8x32xf32>
    %92 = arith.negf %91 : vector<8x32xf32>
    %93 = math.exp %92 : vector<8x32xf32>
    %cst_43 = arith.constant 1.000000e+00 : f32
    %94 = vector.broadcast %cst_43 : f32 to vector<8x32xf32>
    %95 = arith.addf %94, %93 : vector<8x32xf32>
    %96 = arith.divf %94, %95 : vector<8x32xf32>
    %97 = vector.extract_strided_slice %86 {offsets = [0, 32], sizes = [8, 32], strides = [1, 1]} : vector<8x96xf32> to vector<8x32xf32>
    %98 = vector.extract_strided_slice %88 {offsets = [0, 32], sizes = [8, 32], strides = [1, 1]} : vector<8x96xf32> to vector<8x32xf32>
    %99 = arith.addf %97, %98 : vector<8x32xf32>
    %100 = arith.negf %99 : vector<8x32xf32>
    %101 = math.exp %100 : vector<8x32xf32>
    %cst_44 = arith.constant 1.000000e+00 : f32
    %102 = vector.broadcast %cst_44 : f32 to vector<8x32xf32>
    %103 = arith.addf %102, %101 : vector<8x32xf32>
    %104 = arith.divf %102, %103 : vector<8x32xf32>
    %105 = vector.extract_strided_slice %86 {offsets = [0, 64], sizes = [8, 32], strides = [1, 1]} : vector<8x96xf32> to vector<8x32xf32>
    %106 = vector.extract_strided_slice %88 {offsets = [0, 64], sizes = [8, 32], strides = [1, 1]} : vector<8x96xf32> to vector<8x32xf32>
    %107 = arith.mulf %96, %106 : vector<8x32xf32>
    %108 = arith.addf %105, %107 : vector<8x32xf32>
    %109 = math.tanh %108 : vector<8x32xf32>
    %110 = arith.subf %50, %109 : vector<8x32xf32>
    %111 = arith.mulf %104, %110 : vector<8x32xf32>
    %112 = arith.addf %109, %111 : vector<8x32xf32>
    %c6 = arith.constant 6 : index
    %c0_45 = arith.constant 0 : index
    %c0_46 = arith.constant 0 : index
    %113 = vector.load %arg15[%c6, %c0_45, %c0_46] : memref<8x8x96xf32, #tpu.memory_space<vmem>>, vector<1x8x96xf32>
    %114 = vector.shape_cast %113 : vector<1x8x96xf32> to vector<8x96xf32>
    %cst_47 = arith.constant dense<0.000000e+00> : vector<8x96xf32>
    %115 = tpu.matmul %78, %14, %cst_47 {dimension_numbers = #tpu.dot_dimension_numbers<[1], [0], [0], [1], [0, 0, 1, 1], [], []>} : vector<8x32xf32>, vector<32x96xf32>, vector<8x96xf32> -> vector<8x96xf32>
    %116 = arith.addf %115, %20 : vector<8x96xf32>
    %117 = vector.extract_strided_slice %114 {offsets = [0, 0], sizes = [8, 32], strides = [1, 1]} : vector<8x96xf32> to vector<8x32xf32>
    %118 = vector.extract_strided_slice %116 {offsets = [0, 0], sizes = [8, 32], strides = [1, 1]} : vector<8x96xf32> to vector<8x32xf32>
    %119 = arith.addf %117, %118 : vector<8x32xf32>
    %120 = arith.negf %119 : vector<8x32xf32>
    %121 = math.exp %120 : vector<8x32xf32>
    %cst_48 = arith.constant 1.000000e+00 : f32
    %122 = vector.broadcast %cst_48 : f32 to vector<8x32xf32>
    %123 = arith.addf %122, %121 : vector<8x32xf32>
    %124 = arith.divf %122, %123 : vector<8x32xf32>
    %125 = vector.extract_strided_slice %114 {offsets = [0, 32], sizes = [8, 32], strides = [1, 1]} : vector<8x96xf32> to vector<8x32xf32>
    %126 = vector.extract_strided_slice %116 {offsets = [0, 32], sizes = [8, 32], strides = [1, 1]} : vector<8x96xf32> to vector<8x32xf32>
    %127 = arith.addf %125, %126 : vector<8x32xf32>
    %128 = arith.negf %127 : vector<8x32xf32>
    %129 = math.exp %128 : vector<8x32xf32>
    %cst_49 = arith.constant 1.000000e+00 : f32
    %130 = vector.broadcast %cst_49 : f32 to vector<8x32xf32>
    %131 = arith.addf %130, %129 : vector<8x32xf32>
    %132 = arith.divf %130, %131 : vector<8x32xf32>
    %133 = vector.extract_strided_slice %114 {offsets = [0, 64], sizes = [8, 32], strides = [1, 1]} : vector<8x96xf32> to vector<8x32xf32>
    %134 = vector.extract_strided_slice %116 {offsets = [0, 64], sizes = [8, 32], strides = [1, 1]} : vector<8x96xf32> to vector<8x32xf32>
    %135 = arith.mulf %124, %134 : vector<8x32xf32>
    %136 = arith.addf %133, %135 : vector<8x32xf32>
    %137 = math.tanh %136 : vector<8x32xf32>
    %138 = arith.subf %78, %137 : vector<8x32xf32>
    %139 = arith.mulf %132, %138 : vector<8x32xf32>
    %140 = arith.addf %137, %139 : vector<8x32xf32>
    %c1_50 = arith.constant 1 : index
    %c0_51 = arith.constant 0 : index
    %c0_52 = arith.constant 0 : index
    %141 = vector.load %arg12[%c1_50, %c0_51, %c0_52] : memref<8x8x32xf32, #tpu.memory_space<vmem>>, vector<1x8x32xf32>
    %142 = vector.shape_cast %141 : vector<1x8x32xf32> to vector<8x32xf32>
    %143 = vector.shape_cast %112 : vector<8x32xf32> to vector<1x8x32xf32>
    tpu.vector_store %arg12[%c1_50, %c0_51, %c0_52], %143 {strides = array<i32>} : memref<8x8x32xf32, #tpu.memory_space<vmem>>, vector<1x8x32xf32>,
    %c6_53 = arith.constant 6 : index
    %c0_54 = arith.constant 0 : index
    %c0_55 = arith.constant 0 : index
    %144 = vector.load %arg13[%c6_53, %c0_54, %c0_55] : memref<8x8x32xf32, #tpu.memory_space<vmem>>, vector<1x8x32xf32>
    %145 = vector.shape_cast %144 : vector<1x8x32xf32> to vector<8x32xf32>
    %146 = vector.shape_cast %140 : vector<8x32xf32> to vector<1x8x32xf32>
    tpu.vector_store %arg13[%c6_53, %c0_54, %c0_55], %146 {strides = array<i32>} : memref<8x8x32xf32, #tpu.memory_space<vmem>>, vector<1x8x32xf32>,
    %c2 = arith.constant 2 : index
    %c0_56 = arith.constant 0 : index
    %c0_57 = arith.constant 0 : index
    %147 = vector.load %arg14[%c2, %c0_56, %c0_57] : memref<8x8x96xf32, #tpu.memory_space<vmem>>, vector<1x8x96xf32>
    %148 = vector.shape_cast %147 : vector<1x8x96xf32> to vector<8x96xf32>
    %cst_58 = arith.constant dense<0.000000e+00> : vector<8x96xf32>
    %149 = tpu.matmul %112, %13, %cst_58 {dimension_numbers = #tpu.dot_dimension_numbers<[1], [0], [0], [1], [0, 0, 1, 1], [], []>} : vector<8x32xf32>, vector<32x96xf32>, vector<8x96xf32> -> vector<8x96xf32>
    %150 = arith.addf %149, %17 : vector<8x96xf32>
    %151 = vector.extract_strided_slice %148 {offsets = [0, 0], sizes = [8, 32], strides = [1, 1]} : vector<8x96xf32> to vector<8x32xf32>
    %152 = vector.extract_strided_slice %150 {offsets = [0, 0], sizes = [8, 32], strides = [1, 1]} : vector<8x96xf32> to vector<8x32xf32>
    %153 = arith.addf %151, %152 : vector<8x32xf32>
    %154 = arith.negf %153 : vector<8x32xf32>
    %155 = math.exp %154 : vector<8x32xf32>
    %cst_59 = arith.constant 1.000000e+00 : f32
    %156 = vector.broadcast %cst_59 : f32 to vector<8x32xf32>
    %157 = arith.addf %156, %155 : vector<8x32xf32>
    %158 = arith.divf %156, %157 : vector<8x32xf32>
    %159 = vector.extract_strided_slice %148 {offsets = [0, 32], sizes = [8, 32], strides = [1, 1]} : vector<8x96xf32> to vector<8x32xf32>
    %160 = vector.extract_strided_slice %150 {offsets = [0, 32], sizes = [8, 32], strides = [1, 1]} : vector<8x96xf32> to vector<8x32xf32>
    %161 = arith.addf %159, %160 : vector<8x32xf32>
    %162 = arith.negf %161 : vector<8x32xf32>
    %163 = math.exp %162 : vector<8x32xf32>
    %cst_60 = arith.constant 1.000000e+00 : f32
    %164 = vector.broadcast %cst_60 : f32 to vector<8x32xf32>
    %165 = arith.addf %164, %163 : vector<8x32xf32>
    %166 = arith.divf %164, %165 : vector<8x32xf32>
    %167 = vector.extract_strided_slice %148 {offsets = [0, 64], sizes = [8, 32], strides = [1, 1]} : vector<8x96xf32> to vector<8x32xf32>
    %168 = vector.extract_strided_slice %150 {offsets = [0, 64], sizes = [8, 32], strides = [1, 1]} : vector<8x96xf32> to vector<8x32xf32>
    %169 = arith.mulf %158, %168 : vector<8x32xf32>
    %170 = arith.addf %167, %169 : vector<8x32xf32>
    %171 = math.tanh %170 : vector<8x32xf32>
    %172 = arith.subf %112, %171 : vector<8x32xf32>
    %173 = arith.mulf %166, %172 : vector<8x32xf32>
    %174 = arith.addf %171, %173 : vector<8x32xf32>
    %c5 = arith.constant 5 : index
    %c0_61 = arith.constant 0 : index
    %c0_62 = arith.constant 0 : index
    %175 = vector.load %arg15[%c5, %c0_61, %c0_62] : memref<8x8x96xf32, #tpu.memory_space<vmem>>, vector<1x8x96xf32>
    %176 = vector.shape_cast %175 : vector<1x8x96xf32> to vector<8x96xf32>
    %cst_63 = arith.constant dense<0.000000e+00> : vector<8x96xf32>
    %177 = tpu.matmul %140, %14, %cst_63 {dimension_numbers = #tpu.dot_dimension_numbers<[1], [0], [0], [1], [0, 0, 1, 1], [], []>} : vector<8x32xf32>, vector<32x96xf32>, vector<8x96xf32> -> vector<8x96xf32>
    %178 = arith.addf %177, %20 : vector<8x96xf32>
    %179 = vector.extract_strided_slice %176 {offsets = [0, 0], sizes = [8, 32], strides = [1, 1]} : vector<8x96xf32> to vector<8x32xf32>
    %180 = vector.extract_strided_slice %178 {offsets = [0, 0], sizes = [8, 32], strides = [1, 1]} : vector<8x96xf32> to vector<8x32xf32>
    %181 = arith.addf %179, %180 : vector<8x32xf32>
    %182 = arith.negf %181 : vector<8x32xf32>
    %183 = math.exp %182 : vector<8x32xf32>
    %cst_64 = arith.constant 1.000000e+00 : f32
    %184 = vector.broadcast %cst_64 : f32 to vector<8x32xf32>
    %185 = arith.addf %184, %183 : vector<8x32xf32>
    %186 = arith.divf %184, %185 : vector<8x32xf32>
    %187 = vector.extract_strided_slice %176 {offsets = [0, 32], sizes = [8, 32], strides = [1, 1]} : vector<8x96xf32> to vector<8x32xf32>
    %188 = vector.extract_strided_slice %178 {offsets = [0, 32], sizes = [8, 32], strides = [1, 1]} : vector<8x96xf32> to vector<8x32xf32>
    %189 = arith.addf %187, %188 : vector<8x32xf32>
    %190 = arith.negf %189 : vector<8x32xf32>
    %191 = math.exp %190 : vector<8x32xf32>
    %cst_65 = arith.constant 1.000000e+00 : f32
    %192 = vector.broadcast %cst_65 : f32 to vector<8x32xf32>
    %193 = arith.addf %192, %191 : vector<8x32xf32>
    %194 = arith.divf %192, %193 : vector<8x32xf32>
    %195 = vector.extract_strided_slice %176 {offsets = [0, 64], sizes = [8, 32], strides = [1, 1]} : vector<8x96xf32> to vector<8x32xf32>
    %196 = vector.extract_strided_slice %178 {offsets = [0, 64], sizes = [8, 32], strides = [1, 1]} : vector<8x96xf32> to vector<8x32xf32>
    %197 = arith.mulf %186, %196 : vector<8x32xf32>
    %198 = arith.addf %195, %197 : vector<8x32xf32>
    %199 = math.tanh %198 : vector<8x32xf32>
    %200 = arith.subf %140, %199 : vector<8x32xf32>
    %201 = arith.mulf %194, %200 : vector<8x32xf32>
    %202 = arith.addf %199, %201 : vector<8x32xf32>
    %c2_66 = arith.constant 2 : index
    %c0_67 = arith.constant 0 : index
    %c0_68 = arith.constant 0 : index
    %203 = vector.load %arg12[%c2_66, %c0_67, %c0_68] : memref<8x8x32xf32, #tpu.memory_space<vmem>>, vector<1x8x32xf32>
    %204 = vector.shape_cast %203 : vector<1x8x32xf32> to vector<8x32xf32>
    %205 = vector.shape_cast %174 : vector<8x32xf32> to vector<1x8x32xf32>
    tpu.vector_store %arg12[%c2_66, %c0_67, %c0_68], %205 {strides = array<i32>} : memref<8x8x32xf32, #tpu.memory_space<vmem>>, vector<1x8x32xf32>,
    %c5_69 = arith.constant 5 : index
    %c0_70 = arith.constant 0 : index
    %c0_71 = arith.constant 0 : index
    %206 = vector.load %arg13[%c5_69, %c0_70, %c0_71] : memref<8x8x32xf32, #tpu.memory_space<vmem>>, vector<1x8x32xf32>
    %207 = vector.shape_cast %206 : vector<1x8x32xf32> to vector<8x32xf32>
    %208 = vector.shape_cast %202 : vector<8x32xf32> to vector<1x8x32xf32>
    tpu.vector_store %arg13[%c5_69, %c0_70, %c0_71], %208 {strides = array<i32>} : memref<8x8x32xf32, #tpu.memory_space<vmem>>, vector<1x8x32xf32>,
    %c3 = arith.constant 3 : index
    %c0_72 = arith.constant 0 : index
    %c0_73 = arith.constant 0 : index
    %209 = vector.load %arg14[%c3, %c0_72, %c0_73] : memref<8x8x96xf32, #tpu.memory_space<vmem>>, vector<1x8x96xf32>
    %210 = vector.shape_cast %209 : vector<1x8x96xf32> to vector<8x96xf32>
    %cst_74 = arith.constant dense<0.000000e+00> : vector<8x96xf32>
    %211 = tpu.matmul %174, %13, %cst_74 {dimension_numbers = #tpu.dot_dimension_numbers<[1], [0], [0], [1], [0, 0, 1, 1], [], []>} : vector<8x32xf32>, vector<32x96xf32>, vector<8x96xf32> -> vector<8x96xf32>
    %212 = arith.addf %211, %17 : vector<8x96xf32>
    %213 = vector.extract_strided_slice %210 {offsets = [0, 0], sizes = [8, 32], strides = [1, 1]} : vector<8x96xf32> to vector<8x32xf32>
    %214 = vector.extract_strided_slice %212 {offsets = [0, 0], sizes = [8, 32], strides = [1, 1]} : vector<8x96xf32> to vector<8x32xf32>
    %215 = arith.addf %213, %214 : vector<8x32xf32>
    %216 = arith.negf %215 : vector<8x32xf32>
    %217 = math.exp %216 : vector<8x32xf32>
    %cst_75 = arith.constant 1.000000e+00 : f32
    %218 = vector.broadcast %cst_75 : f32 to vector<8x32xf32>
    %219 = arith.addf %218, %217 : vector<8x32xf32>
    %220 = arith.divf %218, %219 : vector<8x32xf32>
    %221 = vector.extract_strided_slice %210 {offsets = [0, 32], sizes = [8, 32], strides = [1, 1]} : vector<8x96xf32> to vector<8x32xf32>
    %222 = vector.extract_strided_slice %212 {offsets = [0, 32], sizes = [8, 32], strides = [1, 1]} : vector<8x96xf32> to vector<8x32xf32>
    %223 = arith.addf %221, %222 : vector<8x32xf32>
    %224 = arith.negf %223 : vector<8x32xf32>
    %225 = math.exp %224 : vector<8x32xf32>
    %cst_76 = arith.constant 1.000000e+00 : f32
    %226 = vector.broadcast %cst_76 : f32 to vector<8x32xf32>
    %227 = arith.addf %226, %225 : vector<8x32xf32>
    %228 = arith.divf %226, %227 : vector<8x32xf32>
    %229 = vector.extract_strided_slice %210 {offsets = [0, 64], sizes = [8, 32], strides = [1, 1]} : vector<8x96xf32> to vector<8x32xf32>
    %230 = vector.extract_strided_slice %212 {offsets = [0, 64], sizes = [8, 32], strides = [1, 1]} : vector<8x96xf32> to vector<8x32xf32>
    %231 = arith.mulf %220, %230 : vector<8x32xf32>
    %232 = arith.addf %229, %231 : vector<8x32xf32>
    %233 = math.tanh %232 : vector<8x32xf32>
    %234 = arith.subf %174, %233 : vector<8x32xf32>
    %235 = arith.mulf %228, %234 : vector<8x32xf32>
    %236 = arith.addf %233, %235 : vector<8x32xf32>
    %c4 = arith.constant 4 : index
    %c0_77 = arith.constant 0 : index
    %c0_78 = arith.constant 0 : index
    %237 = vector.load %arg15[%c4, %c0_77, %c0_78] : memref<8x8x96xf32, #tpu.memory_space<vmem>>, vector<1x8x96xf32>
    %238 = vector.shape_cast %237 : vector<1x8x96xf32> to vector<8x96xf32>
    %cst_79 = arith.constant dense<0.000000e+00> : vector<8x96xf32>
    %239 = tpu.matmul %202, %14, %cst_79 {dimension_numbers = #tpu.dot_dimension_numbers<[1], [0], [0], [1], [0, 0, 1, 1], [], []>} : vector<8x32xf32>, vector<32x96xf32>, vector<8x96xf32> -> vector<8x96xf32>
    %240 = arith.addf %239, %20 : vector<8x96xf32>
    %241 = vector.extract_strided_slice %238 {offsets = [0, 0], sizes = [8, 32], strides = [1, 1]} : vector<8x96xf32> to vector<8x32xf32>
    %242 = vector.extract_strided_slice %240 {offsets = [0, 0], sizes = [8, 32], strides = [1, 1]} : vector<8x96xf32> to vector<8x32xf32>
    %243 = arith.addf %241, %242 : vector<8x32xf32>
    %244 = arith.negf %243 : vector<8x32xf32>
    %245 = math.exp %244 : vector<8x32xf32>
    %cst_80 = arith.constant 1.000000e+00 : f32
    %246 = vector.broadcast %cst_80 : f32 to vector<8x32xf32>
    %247 = arith.addf %246, %245 : vector<8x32xf32>
    %248 = arith.divf %246, %247 : vector<8x32xf32>
    %249 = vector.extract_strided_slice %238 {offsets = [0, 32], sizes = [8, 32], strides = [1, 1]} : vector<8x96xf32> to vector<8x32xf32>
    %250 = vector.extract_strided_slice %240 {offsets = [0, 32], sizes = [8, 32], strides = [1, 1]} : vector<8x96xf32> to vector<8x32xf32>
    %251 = arith.addf %249, %250 : vector<8x32xf32>
    %252 = arith.negf %251 : vector<8x32xf32>
    %253 = math.exp %252 : vector<8x32xf32>
    %cst_81 = arith.constant 1.000000e+00 : f32
    %254 = vector.broadcast %cst_81 : f32 to vector<8x32xf32>
    %255 = arith.addf %254, %253 : vector<8x32xf32>
    %256 = arith.divf %254, %255 : vector<8x32xf32>
    %257 = vector.extract_strided_slice %238 {offsets = [0, 64], sizes = [8, 32], strides = [1, 1]} : vector<8x96xf32> to vector<8x32xf32>
    %258 = vector.extract_strided_slice %240 {offsets = [0, 64], sizes = [8, 32], strides = [1, 1]} : vector<8x96xf32> to vector<8x32xf32>
    %259 = arith.mulf %248, %258 : vector<8x32xf32>
    %260 = arith.addf %257, %259 : vector<8x32xf32>
    %261 = math.tanh %260 : vector<8x32xf32>
    %262 = arith.subf %202, %261 : vector<8x32xf32>
    %263 = arith.mulf %256, %262 : vector<8x32xf32>
    %264 = arith.addf %261, %263 : vector<8x32xf32>
    %c3_82 = arith.constant 3 : index
    %c0_83 = arith.constant 0 : index
    %c0_84 = arith.constant 0 : index
    %265 = vector.load %arg12[%c3_82, %c0_83, %c0_84] : memref<8x8x32xf32, #tpu.memory_space<vmem>>, vector<1x8x32xf32>
    %266 = vector.shape_cast %265 : vector<1x8x32xf32> to vector<8x32xf32>
    %267 = vector.shape_cast %236 : vector<8x32xf32> to vector<1x8x32xf32>
    tpu.vector_store %arg12[%c3_82, %c0_83, %c0_84], %267 {strides = array<i32>} : memref<8x8x32xf32, #tpu.memory_space<vmem>>, vector<1x8x32xf32>,
    %c4_85 = arith.constant 4 : index
    %c0_86 = arith.constant 0 : index
    %c0_87 = arith.constant 0 : index
    %268 = vector.load %arg13[%c4_85, %c0_86, %c0_87] : memref<8x8x32xf32, #tpu.memory_space<vmem>>, vector<1x8x32xf32>
    %269 = vector.shape_cast %268 : vector<1x8x32xf32> to vector<8x32xf32>
    %270 = vector.shape_cast %264 : vector<8x32xf32> to vector<1x8x32xf32>
    tpu.vector_store %arg13[%c4_85, %c0_86, %c0_87], %270 {strides = array<i32>} : memref<8x8x32xf32, #tpu.memory_space<vmem>>, vector<1x8x32xf32>,
    %c4_88 = arith.constant 4 : index
    %c0_89 = arith.constant 0 : index
    %c0_90 = arith.constant 0 : index
    %271 = vector.load %arg14[%c4_88, %c0_89, %c0_90] : memref<8x8x96xf32, #tpu.memory_space<vmem>>, vector<1x8x96xf32>
    %272 = vector.shape_cast %271 : vector<1x8x96xf32> to vector<8x96xf32>
    %cst_91 = arith.constant dense<0.000000e+00> : vector<8x96xf32>
    %273 = tpu.matmul %236, %13, %cst_91 {dimension_numbers = #tpu.dot_dimension_numbers<[1], [0], [0], [1], [0, 0, 1, 1], [], []>} : vector<8x32xf32>, vector<32x96xf32>, vector<8x96xf32> -> vector<8x96xf32>
    %274 = arith.addf %273, %17 : vector<8x96xf32>
    %275 = vector.extract_strided_slice %272 {offsets = [0, 0], sizes = [8, 32], strides = [1, 1]} : vector<8x96xf32> to vector<8x32xf32>
    %276 = vector.extract_strided_slice %274 {offsets = [0, 0], sizes = [8, 32], strides = [1, 1]} : vector<8x96xf32> to vector<8x32xf32>
    %277 = arith.addf %275, %276 : vector<8x32xf32>
    %278 = arith.negf %277 : vector<8x32xf32>
    %279 = math.exp %278 : vector<8x32xf32>
    %cst_92 = arith.constant 1.000000e+00 : f32
    %280 = vector.broadcast %cst_92 : f32 to vector<8x32xf32>
    %281 = arith.addf %280, %279 : vector<8x32xf32>
    %282 = arith.divf %280, %281 : vector<8x32xf32>
    %283 = vector.extract_strided_slice %272 {offsets = [0, 32], sizes = [8, 32], strides = [1, 1]} : vector<8x96xf32> to vector<8x32xf32>
    %284 = vector.extract_strided_slice %274 {offsets = [0, 32], sizes = [8, 32], strides = [1, 1]} : vector<8x96xf32> to vector<8x32xf32>
    %285 = arith.addf %283, %284 : vector<8x32xf32>
    %286 = arith.negf %285 : vector<8x32xf32>
    %287 = math.exp %286 : vector<8x32xf32>
    %cst_93 = arith.constant 1.000000e+00 : f32
    %288 = vector.broadcast %cst_93 : f32 to vector<8x32xf32>
    %289 = arith.addf %288, %287 : vector<8x32xf32>
    %290 = arith.divf %288, %289 : vector<8x32xf32>
    %291 = vector.extract_strided_slice %272 {offsets = [0, 64], sizes = [8, 32], strides = [1, 1]} : vector<8x96xf32> to vector<8x32xf32>
    %292 = vector.extract_strided_slice %274 {offsets = [0, 64], sizes = [8, 32], strides = [1, 1]} : vector<8x96xf32> to vector<8x32xf32>
    %293 = arith.mulf %282, %292 : vector<8x32xf32>
    %294 = arith.addf %291, %293 : vector<8x32xf32>
    %295 = math.tanh %294 : vector<8x32xf32>
    %296 = arith.subf %236, %295 : vector<8x32xf32>
    %297 = arith.mulf %290, %296 : vector<8x32xf32>
    %298 = arith.addf %295, %297 : vector<8x32xf32>
    %c3_94 = arith.constant 3 : index
    %c0_95 = arith.constant 0 : index
    %c0_96 = arith.constant 0 : index
    %299 = vector.load %arg15[%c3_94, %c0_95, %c0_96] : memref<8x8x96xf32, #tpu.memory_space<vmem>>, vector<1x8x96xf32>
    %300 = vector.shape_cast %299 : vector<1x8x96xf32> to vector<8x96xf32>
    %cst_97 = arith.constant dense<0.000000e+00> : vector<8x96xf32>
    %301 = tpu.matmul %264, %14, %cst_97 {dimension_numbers = #tpu.dot_dimension_numbers<[1], [0], [0], [1], [0, 0, 1, 1], [], []>} : vector<8x32xf32>, vector<32x96xf32>, vector<8x96xf32> -> vector<8x96xf32>
    %302 = arith.addf %301, %20 : vector<8x96xf32>
    %303 = vector.extract_strided_slice %300 {offsets = [0, 0], sizes = [8, 32], strides = [1, 1]} : vector<8x96xf32> to vector<8x32xf32>
    %304 = vector.extract_strided_slice %302 {offsets = [0, 0], sizes = [8, 32], strides = [1, 1]} : vector<8x96xf32> to vector<8x32xf32>
    %305 = arith.addf %303, %304 : vector<8x32xf32>
    %306 = arith.negf %305 : vector<8x32xf32>
    %307 = math.exp %306 : vector<8x32xf32>
    %cst_98 = arith.constant 1.000000e+00 : f32
    %308 = vector.broadcast %cst_98 : f32 to vector<8x32xf32>
    %309 = arith.addf %308, %307 : vector<8x32xf32>
    %310 = arith.divf %308, %309 : vector<8x32xf32>
    %311 = vector.extract_strided_slice %300 {offsets = [0, 32], sizes = [8, 32], strides = [1, 1]} : vector<8x96xf32> to vector<8x32xf32>
    %312 = vector.extract_strided_slice %302 {offsets = [0, 32], sizes = [8, 32], strides = [1, 1]} : vector<8x96xf32> to vector<8x32xf32>
    %313 = arith.addf %311, %312 : vector<8x32xf32>
    %314 = arith.negf %313 : vector<8x32xf32>
    %315 = math.exp %314 : vector<8x32xf32>
    %cst_99 = arith.constant 1.000000e+00 : f32
    %316 = vector.broadcast %cst_99 : f32 to vector<8x32xf32>
    %317 = arith.addf %316, %315 : vector<8x32xf32>
    %318 = arith.divf %316, %317 : vector<8x32xf32>
    %319 = vector.extract_strided_slice %300 {offsets = [0, 64], sizes = [8, 32], strides = [1, 1]} : vector<8x96xf32> to vector<8x32xf32>
    %320 = vector.extract_strided_slice %302 {offsets = [0, 64], sizes = [8, 32], strides = [1, 1]} : vector<8x96xf32> to vector<8x32xf32>
    %321 = arith.mulf %310, %320 : vector<8x32xf32>
    %322 = arith.addf %319, %321 : vector<8x32xf32>
    %323 = math.tanh %322 : vector<8x32xf32>
    %324 = arith.subf %264, %323 : vector<8x32xf32>
    %325 = arith.mulf %318, %324 : vector<8x32xf32>
    %326 = arith.addf %323, %325 : vector<8x32xf32>
    %c4_100 = arith.constant 4 : index
    %c0_101 = arith.constant 0 : index
    %c0_102 = arith.constant 0 : index
    %327 = vector.load %arg12[%c4_100, %c0_101, %c0_102] : memref<8x8x32xf32, #tpu.memory_space<vmem>>, vector<1x8x32xf32>
    %328 = vector.shape_cast %327 : vector<1x8x32xf32> to vector<8x32xf32>
    %329 = vector.shape_cast %298 : vector<8x32xf32> to vector<1x8x32xf32>
    tpu.vector_store %arg12[%c4_100, %c0_101, %c0_102], %329 {strides = array<i32>} : memref<8x8x32xf32, #tpu.memory_space<vmem>>, vector<1x8x32xf32>,
    %c3_103 = arith.constant 3 : index
    %c0_104 = arith.constant 0 : index
    %c0_105 = arith.constant 0 : index
    %330 = vector.load %arg13[%c3_103, %c0_104, %c0_105] : memref<8x8x32xf32, #tpu.memory_space<vmem>>, vector<1x8x32xf32>
    %331 = vector.shape_cast %330 : vector<1x8x32xf32> to vector<8x32xf32>
    %332 = vector.shape_cast %326 : vector<8x32xf32> to vector<1x8x32xf32>
    tpu.vector_store %arg13[%c3_103, %c0_104, %c0_105], %332 {strides = array<i32>} : memref<8x8x32xf32, #tpu.memory_space<vmem>>, vector<1x8x32xf32>,
    %c5_106 = arith.constant 5 : index
    %c0_107 = arith.constant 0 : index
    %c0_108 = arith.constant 0 : index
    %333 = vector.load %arg14[%c5_106, %c0_107, %c0_108] : memref<8x8x96xf32, #tpu.memory_space<vmem>>, vector<1x8x96xf32>
    %334 = vector.shape_cast %333 : vector<1x8x96xf32> to vector<8x96xf32>
    %cst_109 = arith.constant dense<0.000000e+00> : vector<8x96xf32>
    %335 = tpu.matmul %298, %13, %cst_109 {dimension_numbers = #tpu.dot_dimension_numbers<[1], [0], [0], [1], [0, 0, 1, 1], [], []>} : vector<8x32xf32>, vector<32x96xf32>, vector<8x96xf32> -> vector<8x96xf32>
    %336 = arith.addf %335, %17 : vector<8x96xf32>
    %337 = vector.extract_strided_slice %334 {offsets = [0, 0], sizes = [8, 32], strides = [1, 1]} : vector<8x96xf32> to vector<8x32xf32>
    %338 = vector.extract_strided_slice %336 {offsets = [0, 0], sizes = [8, 32], strides = [1, 1]} : vector<8x96xf32> to vector<8x32xf32>
    %339 = arith.addf %337, %338 : vector<8x32xf32>
    %340 = arith.negf %339 : vector<8x32xf32>
    %341 = math.exp %340 : vector<8x32xf32>
    %cst_110 = arith.constant 1.000000e+00 : f32
    %342 = vector.broadcast %cst_110 : f32 to vector<8x32xf32>
    %343 = arith.addf %342, %341 : vector<8x32xf32>
    %344 = arith.divf %342, %343 : vector<8x32xf32>
    %345 = vector.extract_strided_slice %334 {offsets = [0, 32], sizes = [8, 32], strides = [1, 1]} : vector<8x96xf32> to vector<8x32xf32>
    %346 = vector.extract_strided_slice %336 {offsets = [0, 32], sizes = [8, 32], strides = [1, 1]} : vector<8x96xf32> to vector<8x32xf32>
    %347 = arith.addf %345, %346 : vector<8x32xf32>
    %348 = arith.negf %347 : vector<8x32xf32>
    %349 = math.exp %348 : vector<8x32xf32>
    %cst_111 = arith.constant 1.000000e+00 : f32
    %350 = vector.broadcast %cst_111 : f32 to vector<8x32xf32>
    %351 = arith.addf %350, %349 : vector<8x32xf32>
    %352 = arith.divf %350, %351 : vector<8x32xf32>
    %353 = vector.extract_strided_slice %334 {offsets = [0, 64], sizes = [8, 32], strides = [1, 1]} : vector<8x96xf32> to vector<8x32xf32>
    %354 = vector.extract_strided_slice %336 {offsets = [0, 64], sizes = [8, 32], strides = [1, 1]} : vector<8x96xf32> to vector<8x32xf32>
    %355 = arith.mulf %344, %354 : vector<8x32xf32>
    %356 = arith.addf %353, %355 : vector<8x32xf32>
    %357 = math.tanh %356 : vector<8x32xf32>
    %358 = arith.subf %298, %357 : vector<8x32xf32>
    %359 = arith.mulf %352, %358 : vector<8x32xf32>
    %360 = arith.addf %357, %359 : vector<8x32xf32>
    %c2_112 = arith.constant 2 : index
    %c0_113 = arith.constant 0 : index
    %c0_114 = arith.constant 0 : index
    %361 = vector.load %arg15[%c2_112, %c0_113, %c0_114] : memref<8x8x96xf32, #tpu.memory_space<vmem>>, vector<1x8x96xf32>
    %362 = vector.shape_cast %361 : vector<1x8x96xf32> to vector<8x96xf32>
    %cst_115 = arith.constant dense<0.000000e+00> : vector<8x96xf32>
    %363 = tpu.matmul %326, %14, %cst_115 {dimension_numbers = #tpu.dot_dimension_numbers<[1], [0], [0], [1], [0, 0, 1, 1], [], []>} : vector<8x32xf32>, vector<32x96xf32>, vector<8x96xf32> -> vector<8x96xf32>
    %364 = arith.addf %363, %20 : vector<8x96xf32>
    %365 = vector.extract_strided_slice %362 {offsets = [0, 0], sizes = [8, 32], strides = [1, 1]} : vector<8x96xf32> to vector<8x32xf32>
    %366 = vector.extract_strided_slice %364 {offsets = [0, 0], sizes = [8, 32], strides = [1, 1]} : vector<8x96xf32> to vector<8x32xf32>
    %367 = arith.addf %365, %366 : vector<8x32xf32>
    %368 = arith.negf %367 : vector<8x32xf32>
    %369 = math.exp %368 : vector<8x32xf32>
    %cst_116 = arith.constant 1.000000e+00 : f32
    %370 = vector.broadcast %cst_116 : f32 to vector<8x32xf32>
    %371 = arith.addf %370, %369 : vector<8x32xf32>
    %372 = arith.divf %370, %371 : vector<8x32xf32>
    %373 = vector.extract_strided_slice %362 {offsets = [0, 32], sizes = [8, 32], strides = [1, 1]} : vector<8x96xf32> to vector<8x32xf32>
    %374 = vector.extract_strided_slice %364 {offsets = [0, 32], sizes = [8, 32], strides = [1, 1]} : vector<8x96xf32> to vector<8x32xf32>
    %375 = arith.addf %373, %374 : vector<8x32xf32>
    %376 = arith.negf %375 : vector<8x32xf32>
    %377 = math.exp %376 : vector<8x32xf32>
    %cst_117 = arith.constant 1.000000e+00 : f32
    %378 = vector.broadcast %cst_117 : f32 to vector<8x32xf32>
    %379 = arith.addf %378, %377 : vector<8x32xf32>
    %380 = arith.divf %378, %379 : vector<8x32xf32>
    %381 = vector.extract_strided_slice %362 {offsets = [0, 64], sizes = [8, 32], strides = [1, 1]} : vector<8x96xf32> to vector<8x32xf32>
    %382 = vector.extract_strided_slice %364 {offsets = [0, 64], sizes = [8, 32], strides = [1, 1]} : vector<8x96xf32> to vector<8x32xf32>
    %383 = arith.mulf %372, %382 : vector<8x32xf32>
    %384 = arith.addf %381, %383 : vector<8x32xf32>
    %385 = math.tanh %384 : vector<8x32xf32>
    %386 = arith.subf %326, %385 : vector<8x32xf32>
    %387 = arith.mulf %380, %386 : vector<8x32xf32>
    %388 = arith.addf %385, %387 : vector<8x32xf32>
    %c5_118 = arith.constant 5 : index
    %c0_119 = arith.constant 0 : index
    %c0_120 = arith.constant 0 : index
    %389 = vector.load %arg12[%c5_118, %c0_119, %c0_120] : memref<8x8x32xf32, #tpu.memory_space<vmem>>, vector<1x8x32xf32>
    %390 = vector.shape_cast %389 : vector<1x8x32xf32> to vector<8x32xf32>
    %391 = vector.shape_cast %360 : vector<8x32xf32> to vector<1x8x32xf32>
    tpu.vector_store %arg12[%c5_118, %c0_119, %c0_120], %391 {strides = array<i32>} : memref<8x8x32xf32, #tpu.memory_space<vmem>>, vector<1x8x32xf32>,
    %c2_121 = arith.constant 2 : index
    %c0_122 = arith.constant 0 : index
    %c0_123 = arith.constant 0 : index
    %392 = vector.load %arg13[%c2_121, %c0_122, %c0_123] : memref<8x8x32xf32, #tpu.memory_space<vmem>>, vector<1x8x32xf32>
    %393 = vector.shape_cast %392 : vector<1x8x32xf32> to vector<8x32xf32>
    %394 = vector.shape_cast %388 : vector<8x32xf32> to vector<1x8x32xf32>
    tpu.vector_store %arg13[%c2_121, %c0_122, %c0_123], %394 {strides = array<i32>} : memref<8x8x32xf32, #tpu.memory_space<vmem>>, vector<1x8x32xf32>,
    %c6_124 = arith.constant 6 : index
    %c0_125 = arith.constant 0 : index
    %c0_126 = arith.constant 0 : index
    %395 = vector.load %arg14[%c6_124, %c0_125, %c0_126] : memref<8x8x96xf32, #tpu.memory_space<vmem>>, vector<1x8x96xf32>
    %396 = vector.shape_cast %395 : vector<1x8x96xf32> to vector<8x96xf32>
    %cst_127 = arith.constant dense<0.000000e+00> : vector<8x96xf32>
    %397 = tpu.matmul %360, %13, %cst_127 {dimension_numbers = #tpu.dot_dimension_numbers<[1], [0], [0], [1], [0, 0, 1, 1], [], []>} : vector<8x32xf32>, vector<32x96xf32>, vector<8x96xf32> -> vector<8x96xf32>
    %398 = arith.addf %397, %17 : vector<8x96xf32>
    %399 = vector.extract_strided_slice %396 {offsets = [0, 0], sizes = [8, 32], strides = [1, 1]} : vector<8x96xf32> to vector<8x32xf32>
    %400 = vector.extract_strided_slice %398 {offsets = [0, 0], sizes = [8, 32], strides = [1, 1]} : vector<8x96xf32> to vector<8x32xf32>
    %401 = arith.addf %399, %400 : vector<8x32xf32>
    %402 = arith.negf %401 : vector<8x32xf32>
    %403 = math.exp %402 : vector<8x32xf32>
    %cst_128 = arith.constant 1.000000e+00 : f32
    %404 = vector.broadcast %cst_128 : f32 to vector<8x32xf32>
    %405 = arith.addf %404, %403 : vector<8x32xf32>
    %406 = arith.divf %404, %405 : vector<8x32xf32>
    %407 = vector.extract_strided_slice %396 {offsets = [0, 32], sizes = [8, 32], strides = [1, 1]} : vector<8x96xf32> to vector<8x32xf32>
    %408 = vector.extract_strided_slice %398 {offsets = [0, 32], sizes = [8, 32], strides = [1, 1]} : vector<8x96xf32> to vector<8x32xf32>
    %409 = arith.addf %407, %408 : vector<8x32xf32>
    %410 = arith.negf %409 : vector<8x32xf32>
    %411 = math.exp %410 : vector<8x32xf32>
    %cst_129 = arith.constant 1.000000e+00 : f32
    %412 = vector.broadcast %cst_129 : f32 to vector<8x32xf32>
    %413 = arith.addf %412, %411 : vector<8x32xf32>
    %414 = arith.divf %412, %413 : vector<8x32xf32>
    %415 = vector.extract_strided_slice %396 {offsets = [0, 64], sizes = [8, 32], strides = [1, 1]} : vector<8x96xf32> to vector<8x32xf32>
    %416 = vector.extract_strided_slice %398 {offsets = [0, 64], sizes = [8, 32], strides = [1, 1]} : vector<8x96xf32> to vector<8x32xf32>
    %417 = arith.mulf %406, %416 : vector<8x32xf32>
    %418 = arith.addf %415, %417 : vector<8x32xf32>
    %419 = math.tanh %418 : vector<8x32xf32>
    %420 = arith.subf %360, %419 : vector<8x32xf32>
    %421 = arith.mulf %414, %420 : vector<8x32xf32>
    %422 = arith.addf %419, %421 : vector<8x32xf32>
    %c1_130 = arith.constant 1 : index
    %c0_131 = arith.constant 0 : index
    %c0_132 = arith.constant 0 : index
    %423 = vector.load %arg15[%c1_130, %c0_131, %c0_132] : memref<8x8x96xf32, #tpu.memory_space<vmem>>, vector<1x8x96xf32>
    %424 = vector.shape_cast %423 : vector<1x8x96xf32> to vector<8x96xf32>
    %cst_133 = arith.constant dense<0.000000e+00> : vector<8x96xf32>
    %425 = tpu.matmul %388, %14, %cst_133 {dimension_numbers = #tpu.dot_dimension_numbers<[1], [0], [0], [1], [0, 0, 1, 1], [], []>} : vector<8x32xf32>, vector<32x96xf32>, vector<8x96xf32> -> vector<8x96xf32>
    %426 = arith.addf %425, %20 : vector<8x96xf32>
    %427 = vector.extract_strided_slice %424 {offsets = [0, 0], sizes = [8, 32], strides = [1, 1]} : vector<8x96xf32> to vector<8x32xf32>
    %428 = vector.extract_strided_slice %426 {offsets = [0, 0], sizes = [8, 32], strides = [1, 1]} : vector<8x96xf32> to vector<8x32xf32>
    %429 = arith.addf %427, %428 : vector<8x32xf32>
    %430 = arith.negf %429 : vector<8x32xf32>
    %431 = math.exp %430 : vector<8x32xf32>
    %cst_134 = arith.constant 1.000000e+00 : f32
    %432 = vector.broadcast %cst_134 : f32 to vector<8x32xf32>
    %433 = arith.addf %432, %431 : vector<8x32xf32>
    %434 = arith.divf %432, %433 : vector<8x32xf32>
    %435 = vector.extract_strided_slice %424 {offsets = [0, 32], sizes = [8, 32], strides = [1, 1]} : vector<8x96xf32> to vector<8x32xf32>
    %436 = vector.extract_strided_slice %426 {offsets = [0, 32], sizes = [8, 32], strides = [1, 1]} : vector<8x96xf32> to vector<8x32xf32>
    %437 = arith.addf %435, %436 : vector<8x32xf32>
    %438 = arith.negf %437 : vector<8x32xf32>
    %439 = math.exp %438 : vector<8x32xf32>
    %cst_135 = arith.constant 1.000000e+00 : f32
    %440 = vector.broadcast %cst_135 : f32 to vector<8x32xf32>
    %441 = arith.addf %440, %439 : vector<8x32xf32>
    %442 = arith.divf %440, %441 : vector<8x32xf32>
    %443 = vector.extract_strided_slice %424 {offsets = [0, 64], sizes = [8, 32], strides = [1, 1]} : vector<8x96xf32> to vector<8x32xf32>
    %444 = vector.extract_strided_slice %426 {offsets = [0, 64], sizes = [8, 32], strides = [1, 1]} : vector<8x96xf32> to vector<8x32xf32>
    %445 = arith.mulf %434, %444 : vector<8x32xf32>
    %446 = arith.addf %443, %445 : vector<8x32xf32>
    %447 = math.tanh %446 : vector<8x32xf32>
    %448 = arith.subf %388, %447 : vector<8x32xf32>
    %449 = arith.mulf %442, %448 : vector<8x32xf32>
    %450 = arith.addf %447, %449 : vector<8x32xf32>
    %c6_136 = arith.constant 6 : index
    %c0_137 = arith.constant 0 : index
    %c0_138 = arith.constant 0 : index
    %451 = vector.load %arg12[%c6_136, %c0_137, %c0_138] : memref<8x8x32xf32, #tpu.memory_space<vmem>>, vector<1x8x32xf32>
    %452 = vector.shape_cast %451 : vector<1x8x32xf32> to vector<8x32xf32>
    %453 = vector.shape_cast %422 : vector<8x32xf32> to vector<1x8x32xf32>
    tpu.vector_store %arg12[%c6_136, %c0_137, %c0_138], %453 {strides = array<i32>} : memref<8x8x32xf32, #tpu.memory_space<vmem>>, vector<1x8x32xf32>,
    %c1_139 = arith.constant 1 : index
    %c0_140 = arith.constant 0 : index
    %c0_141 = arith.constant 0 : index
    %454 = vector.load %arg13[%c1_139, %c0_140, %c0_141] : memref<8x8x32xf32, #tpu.memory_space<vmem>>, vector<1x8x32xf32>
    %455 = vector.shape_cast %454 : vector<1x8x32xf32> to vector<8x32xf32>
    %456 = vector.shape_cast %450 : vector<8x32xf32> to vector<1x8x32xf32>
    tpu.vector_store %arg13[%c1_139, %c0_140, %c0_141], %456 {strides = array<i32>} : memref<8x8x32xf32, #tpu.memory_space<vmem>>, vector<1x8x32xf32>,
    %c7_142 = arith.constant 7 : index
    %c0_143 = arith.constant 0 : index
    %c0_144 = arith.constant 0 : index
    %457 = vector.load %arg14[%c7_142, %c0_143, %c0_144] : memref<8x8x96xf32, #tpu.memory_space<vmem>>, vector<1x8x96xf32>
    %458 = vector.shape_cast %457 : vector<1x8x96xf32> to vector<8x96xf32>
    %cst_145 = arith.constant dense<0.000000e+00> : vector<8x96xf32>
    %459 = tpu.matmul %422, %13, %cst_145 {dimension_numbers = #tpu.dot_dimension_numbers<[1], [0], [0], [1], [0, 0, 1, 1], [], []>} : vector<8x32xf32>, vector<32x96xf32>, vector<8x96xf32> -> vector<8x96xf32>
    %460 = arith.addf %459, %17 : vector<8x96xf32>
    %461 = vector.extract_strided_slice %458 {offsets = [0, 0], sizes = [8, 32], strides = [1, 1]} : vector<8x96xf32> to vector<8x32xf32>
    %462 = vector.extract_strided_slice %460 {offsets = [0, 0], sizes = [8, 32], strides = [1, 1]} : vector<8x96xf32> to vector<8x32xf32>
    %463 = arith.addf %461, %462 : vector<8x32xf32>
    %464 = arith.negf %463 : vector<8x32xf32>
    %465 = math.exp %464 : vector<8x32xf32>
    %cst_146 = arith.constant 1.000000e+00 : f32
    %466 = vector.broadcast %cst_146 : f32 to vector<8x32xf32>
    %467 = arith.addf %466, %465 : vector<8x32xf32>
    %468 = arith.divf %466, %467 : vector<8x32xf32>
    %469 = vector.extract_strided_slice %458 {offsets = [0, 32], sizes = [8, 32], strides = [1, 1]} : vector<8x96xf32> to vector<8x32xf32>
    %470 = vector.extract_strided_slice %460 {offsets = [0, 32], sizes = [8, 32], strides = [1, 1]} : vector<8x96xf32> to vector<8x32xf32>
    %471 = arith.addf %469, %470 : vector<8x32xf32>
    %472 = arith.negf %471 : vector<8x32xf32>
    %473 = math.exp %472 : vector<8x32xf32>
    %cst_147 = arith.constant 1.000000e+00 : f32
    %474 = vector.broadcast %cst_147 : f32 to vector<8x32xf32>
    %475 = arith.addf %474, %473 : vector<8x32xf32>
    %476 = arith.divf %474, %475 : vector<8x32xf32>
    %477 = vector.extract_strided_slice %458 {offsets = [0, 64], sizes = [8, 32], strides = [1, 1]} : vector<8x96xf32> to vector<8x32xf32>
    %478 = vector.extract_strided_slice %460 {offsets = [0, 64], sizes = [8, 32], strides = [1, 1]} : vector<8x96xf32> to vector<8x32xf32>
    %479 = arith.mulf %468, %478 : vector<8x32xf32>
    %480 = arith.addf %477, %479 : vector<8x32xf32>
    %481 = math.tanh %480 : vector<8x32xf32>
    %482 = arith.subf %422, %481 : vector<8x32xf32>
    %483 = arith.mulf %476, %482 : vector<8x32xf32>
    %484 = arith.addf %481, %483 : vector<8x32xf32>
    %c0_148 = arith.constant 0 : index
    %c0_149 = arith.constant 0 : index
    %c0_150 = arith.constant 0 : index
    %485 = vector.load %arg15[%c0_148, %c0_149, %c0_150] : memref<8x8x96xf32, #tpu.memory_space<vmem>>, vector<1x8x96xf32>
    %486 = vector.shape_cast %485 : vector<1x8x96xf32> to vector<8x96xf32>
    %cst_151 = arith.constant dense<0.000000e+00> : vector<8x96xf32>
    %487 = tpu.matmul %450, %14, %cst_151 {dimension_numbers = #tpu.dot_dimension_numbers<[1], [0], [0], [1], [0, 0, 1, 1], [], []>} : vector<8x32xf32>, vector<32x96xf32>, vector<8x96xf32> -> vector<8x96xf32>
    %488 = arith.addf %487, %20 : vector<8x96xf32>
    %489 = vector.extract_strided_slice %486 {offsets = [0, 0], sizes = [8, 32], strides = [1, 1]} : vector<8x96xf32> to vector<8x32xf32>
    %490 = vector.extract_strided_slice %488 {offsets = [0, 0], sizes = [8, 32], strides = [1, 1]} : vector<8x96xf32> to vector<8x32xf32>
    %491 = arith.addf %489, %490 : vector<8x32xf32>
    %492 = arith.negf %491 : vector<8x32xf32>
    %493 = math.exp %492 : vector<8x32xf32>
    %cst_152 = arith.constant 1.000000e+00 : f32
    %494 = vector.broadcast %cst_152 : f32 to vector<8x32xf32>
    %495 = arith.addf %494, %493 : vector<8x32xf32>
    %496 = arith.divf %494, %495 : vector<8x32xf32>
    %497 = vector.extract_strided_slice %486 {offsets = [0, 32], sizes = [8, 32], strides = [1, 1]} : vector<8x96xf32> to vector<8x32xf32>
    %498 = vector.extract_strided_slice %488 {offsets = [0, 32], sizes = [8, 32], strides = [1, 1]} : vector<8x96xf32> to vector<8x32xf32>
    %499 = arith.addf %497, %498 : vector<8x32xf32>
    %500 = arith.negf %499 : vector<8x32xf32>
    %501 = math.exp %500 : vector<8x32xf32>
    %cst_153 = arith.constant 1.000000e+00 : f32
    %502 = vector.broadcast %cst_153 : f32 to vector<8x32xf32>
    %503 = arith.addf %502, %501 : vector<8x32xf32>
    %504 = arith.divf %502, %503 : vector<8x32xf32>
    %505 = vector.extract_strided_slice %486 {offsets = [0, 64], sizes = [8, 32], strides = [1, 1]} : vector<8x96xf32> to vector<8x32xf32>
    %506 = vector.extract_strided_slice %488 {offsets = [0, 64], sizes = [8, 32], strides = [1, 1]} : vector<8x96xf32> to vector<8x32xf32>
    %507 = arith.mulf %496, %506 : vector<8x32xf32>
    %508 = arith.addf %505, %507 : vector<8x32xf32>
    %509 = math.tanh %508 : vector<8x32xf32>
    %510 = arith.subf %450, %509 : vector<8x32xf32>
    %511 = arith.mulf %504, %510 : vector<8x32xf32>
    %512 = arith.addf %509, %511 : vector<8x32xf32>
    %c7_154 = arith.constant 7 : index
    %c0_155 = arith.constant 0 : index
    %c0_156 = arith.constant 0 : index
    %513 = vector.load %arg12[%c7_154, %c0_155, %c0_156] : memref<8x8x32xf32, #tpu.memory_space<vmem>>, vector<1x8x32xf32>
    %514 = vector.shape_cast %513 : vector<1x8x32xf32> to vector<8x32xf32>
    %515 = vector.shape_cast %484 : vector<8x32xf32> to vector<1x8x32xf32>
    tpu.vector_store %arg12[%c7_154, %c0_155, %c0_156], %515 {strides = array<i32>} : memref<8x8x32xf32, #tpu.memory_space<vmem>>, vector<1x8x32xf32>,
    %c0_157 = arith.constant 0 : index
    %c0_158 = arith.constant 0 : index
    %c0_159 = arith.constant 0 : index
    %516 = vector.load %arg13[%c0_157, %c0_158, %c0_159] : memref<8x8x32xf32, #tpu.memory_space<vmem>>, vector<1x8x32xf32>
    %517 = vector.shape_cast %516 : vector<1x8x32xf32> to vector<8x32xf32>
    %518 = vector.shape_cast %512 : vector<8x32xf32> to vector<1x8x32xf32>
    tpu.vector_store %arg13[%c0_157, %c0_158, %c0_159], %518 {strides = array<i32>} : memref<8x8x32xf32, #tpu.memory_space<vmem>>, vector<1x8x32xf32>,
    %c0_160 = arith.constant 0 : index
    %c0_161 = arith.constant 0 : index
    %c0_162 = arith.constant 0 : index
    %519 = vector.load %arg12[%c0_160, %c0_161, %c0_162] : memref<8x8x32xf32, #tpu.memory_space<vmem>>, vector<8x8x32xf32>
    %c0_163 = arith.constant 0 : index
    %c0_164 = arith.constant 0 : index
    %c0_165 = arith.constant 0 : index
    %520 = vector.load %arg13[%c0_163, %c0_164, %c0_165] : memref<8x8x32xf32, #tpu.memory_space<vmem>>, vector<8x8x32xf32>
    %521 = vector.shape_cast %519 : vector<8x8x32xf32> to vector<64x32xf32>
    %522 = vector.shape_cast %520 : vector<8x8x32xf32> to vector<64x32xf32>
    %c0_166 = arith.constant 0 : index
    %c0_167 = arith.constant 0 : index
    %c0_168 = arith.constant 0 : index
    %523 = vector.load %arg8[%c0_166, %c0_167, %c0_168] : memref<2x32x64xf32, #tpu.memory_space<vmem>>, vector<1x32x64xf32>
    %524 = vector.shape_cast %523 : vector<1x32x64xf32> to vector<32x64xf32>
    %cst_169 = arith.constant dense<0.000000e+00> : vector<64x64xf32>
    %525 = tpu.matmul %521, %524, %cst_169 {dimension_numbers = #tpu.dot_dimension_numbers<[1], [0], [0], [1], [0, 0, 1, 1], [], []>} : vector<64x32xf32>, vector<32x64xf32>, vector<64x64xf32> -> vector<64x64xf32>
    %c1_170 = arith.constant 1 : index
    %c0_171 = arith.constant 0 : index
    %c0_172 = arith.constant 0 : index
    %526 = vector.load %arg8[%c1_170, %c0_171, %c0_172] : memref<2x32x64xf32, #tpu.memory_space<vmem>>, vector<1x32x64xf32>
    %527 = vector.shape_cast %526 : vector<1x32x64xf32> to vector<32x64xf32>
    %cst_173 = arith.constant dense<0.000000e+00> : vector<64x64xf32>
    %528 = tpu.matmul %522, %527, %cst_173 {dimension_numbers = #tpu.dot_dimension_numbers<[1], [0], [0], [1], [0, 0, 1, 1], [], []>} : vector<64x32xf32>, vector<32x64xf32>, vector<64x64xf32> -> vector<64x64xf32>
    %529 = arith.addf %525, %528 : vector<64x64xf32>
    %c0_174 = arith.constant 0 : index
    %c0_175 = arith.constant 0 : index
    %530 = vector.load %arg9[%c0_174, %c0_175] : memref<1x64xf32, #tpu.memory_space<vmem>>, vector<1x64xf32>
    %531 = vector.broadcast %530 : vector<1x64xf32> to vector<64x64xf32>
    %532 = arith.addf %529, %531 : vector<64x64xf32>
    %533 = math.tanh %532 : vector<64x64xf32>
    %c0_176 = arith.constant 0 : index
    %c0_177 = arith.constant 0 : index
    %534 = vector.load %arg10[%c0_176, %c0_177] : memref<1x64xf32, #tpu.memory_space<vmem>>, vector<1x64xf32>
    %535 = vector.broadcast %534 : vector<1x64xf32> to vector<64x64xf32>
    %536 = arith.mulf %533, %535 : vector<64x64xf32>
    %cst_178 = arith.constant dense<0.000000e+00> : vector<64xf32>
    %537 = vector.multi_reduction <add>, %536, %cst_178 [1] : vector<64x64xf32> to vector<64xf32>
    %538 = vector.shape_cast %537 : vector<64xf32> to vector<64x1xf32>
    %539 = vector.shape_cast %538 : vector<64x1xf32> to vector<8x1x8x1xf32>
    %cst_179 = arith.constant dense<0xFF800000> : vector<8x1x1xf32>
    %540 = vector.multi_reduction <maximumf>, %539, %cst_179 [2] : vector<8x1x8x1xf32> to vector<8x1x1xf32>
    %541 = vector.shape_cast %540 : vector<8x1x1xf32> to vector<8x1x1x1xf32>
    %542 = vector.broadcast %541 : vector<8x1x1x1xf32> to vector<8x1x8x1xf32>
    %543 = arith.subf %539, %542 : vector<8x1x8x1xf32>
    %544 = math.exp %543 : vector<8x1x8x1xf32>
    %cst_180 = arith.constant dense<0.000000e+00> : vector<8x1x1xf32>
    %545 = vector.multi_reduction <add>, %544, %cst_180 [2] : vector<8x1x8x1xf32> to vector<8x1x1xf32>
    %546 = vector.shape_cast %545 : vector<8x1x1xf32> to vector<8x1x1x1xf32>
    %547 = vector.broadcast %546 : vector<8x1x1x1xf32> to vector<8x1x8x1xf32>
    %548 = arith.divf %544, %547 : vector<8x1x8x1xf32>
    %549 = vector.shape_cast %519 : vector<8x8x32xf32> to vector<8x1x8x32xf32>
    %550 = vector.shape_cast %520 : vector<8x8x32xf32> to vector<8x1x8x32xf32>
    %551 = vector.broadcast %548 : vector<8x1x8x1xf32> to vector<8x1x8x32xf32>
    %552 = arith.mulf %549, %551 : vector<8x1x8x32xf32>
    %cst_181 = arith.constant dense<0.000000e+00> : vector<8x1x32xf32>
    %553 = vector.multi_reduction <add>, %552, %cst_181 [2] : vector<8x1x8x32xf32> to vector<8x1x32xf32>
    %554 = vector.broadcast %548 : vector<8x1x8x1xf32> to vector<8x1x8x32xf32>
    %555 = arith.mulf %550, %554 : vector<8x1x8x32xf32>
    %cst_182 = arith.constant dense<0.000000e+00> : vector<8x1x32xf32>
    %556 = vector.multi_reduction <add>, %555, %cst_182 [2] : vector<8x1x8x32xf32> to vector<8x1x32xf32>
    %c0_183 = arith.constant 0 : index
    %c0_184 = arith.constant 0 : index
    %c0_185 = arith.constant 0 : index
    %c0_186 = arith.constant 0 : index
    %557 = vector.load %arg11[%c0_183, %c0_184, %c0_185, %c0_186] : memref<1x8x1x64xf32, #tpu.memory_space<vmem>>, vector<1x8x1x32xf32>
    %558 = vector.shape_cast %557 : vector<1x8x1x32xf32> to vector<8x1x32xf32>
    %559 = vector.shape_cast %553 : vector<8x1x32xf32> to vector<1x8x1x32xf32>
    tpu.vector_store %arg11[%c0_183, %c0_184, %c0_185, %c0_186], %559 {strides = array<i32>} : memref<1x8x1x64xf32, #tpu.memory_space<vmem>>, vector<1x8x1x32xf32>,
    %c0_187 = arith.constant 0 : index
    %c0_188 = arith.constant 0 : index
    %c0_189 = arith.constant 0 : index
    %c32 = arith.constant 32 : index
    %560 = vector.load %arg11[%c0_187, %c0_188, %c0_189, %c32] : memref<1x8x1x64xf32, #tpu.memory_space<vmem>>, vector<1x8x1x32xf32>
    %561 = vector.shape_cast %560 : vector<1x8x1x32xf32> to vector<8x1x32xf32>
    %562 = vector.shape_cast %556 : vector<8x1x32xf32> to vector<1x8x1x32xf32>
    tpu.vector_store %arg11[%c0_187, %c0_188, %c0_189, %c32], %562 {strides = array<i32>} : memref<1x8x1x64xf32, #tpu.memory_space<vmem>>, vector<1x8x1x32xf32>,
    return
  }
  func.func @transform_0(%arg0: i32) -> (i32, i32, i32, i32) {
    %c0_i32 = arith.constant 0 : i32
    %c0_i32_0 = arith.constant 0 : i32
    %c0_i32_1 = arith.constant 0 : i32
    %c0_i32_2 = arith.constant 0 : i32
    return %arg0, %c0_i32, %c0_i32_0, %c0_i32_1 : i32, i32, i32, i32
  }
  func.func @transform_1(%arg0: i32) -> (i32, i32) {
    %c0_i32 = arith.constant 0 : i32
    %c0_i32_0 = arith.constant 0 : i32
    %c0_i32_1 = arith.constant 0 : i32
    return %c0_i32, %c0_i32_0 : i32, i32
  }
  func.func @transform_2(%arg0: i32) -> (i32, i32) {
    %c0_i32 = arith.constant 0 : i32
    %c0_i32_0 = arith.constant 0 : i32
    %c0_i32_1 = arith.constant 0 : i32
    return %c0_i32, %c0_i32_0 : i32, i32
  }
  func.func @transform_3(%arg0: i32) -> (i32, i32) {
    %c0_i32 = arith.constant 0 : i32
    %c0_i32_0 = arith.constant 0 : i32
    %c0_i32_1 = arith.constant 0 : i32
    return %c0_i32, %c0_i32_0 : i32, i32
  }
  func.func @transform_4(%arg0: i32) -> (i32, i32) {
    %c0_i32 = arith.constant 0 : i32
    %c0_i32_0 = arith.constant 0 : i32
    %c0_i32_1 = arith.constant 0 : i32
    return %c0_i32, %c0_i32_0 : i32, i32
  }
  func.func @transform_5(%arg0: i32) -> (i32, i32) {
    %c0_i32 = arith.constant 0 : i32
    %c0_i32_0 = arith.constant 0 : i32
    %c0_i32_1 = arith.constant 0 : i32
    return %c0_i32, %c0_i32_0 : i32, i32
  }
  func.func @transform_6(%arg0: i32) -> (i32, i32) {
    %c0_i32 = arith.constant 0 : i32
    %c0_i32_0 = arith.constant 0 : i32
    %c0_i32_1 = arith.constant 0 : i32
    return %c0_i32, %c0_i32_0 : i32, i32
  }
  func.func @transform_7(%arg0: i32) -> (i32, i32, i32) {
    %c0_i32 = arith.constant 0 : i32
    %c0_i32_0 = arith.constant 0 : i32
    %c0_i32_1 = arith.constant 0 : i32
    %c0_i32_2 = arith.constant 0 : i32
    return %c0_i32, %c0_i32_0, %c0_i32_1 : i32, i32, i32
  }
  func.func @transform_8(%arg0: i32) -> (i32, i32) {
    %c0_i32 = arith.constant 0 : i32
    %c0_i32_0 = arith.constant 0 : i32
    %c0_i32_1 = arith.constant 0 : i32
    return %c0_i32, %c0_i32_0 : i32, i32
  }
  func.func @transform_9(%arg0: i32) -> (i32, i32) {
    %c0_i32 = arith.constant 0 : i32
    %c0_i32_0 = arith.constant 0 : i32
    %c0_i32_1 = arith.constant 0 : i32
    return %c0_i32, %c0_i32_0 : i32, i32
  }
  func.func @transform_10(%arg0: i32) -> (i32, i32, i32, i32) {
    %c0_i32 = arith.constant 0 : i32
    %c0_i32_0 = arith.constant 0 : i32
    %c0_i32_1 = arith.constant 0 : i32
    %c0_i32_2 = arith.constant 0 : i32
    return %arg0, %c0_i32, %c0_i32_0, %c0_i32_1 : i32, i32, i32, i32
  }
}

</mosaic_0001>

<llo_original>
// kernel: tpu_custom_call.1
$region0: #{tpu_custom_call.1}
  #allocation0 [shape = 'u32[]', space=smem, size = 0x4, offset = 0x4, fixed_abs, tag = 'smem constant byte address 0x4 - core index']
  #allocation1 [shape = 'u32[144,128]{1,0:T(1,128)}', space=vmem, size = 0x12000, scoped, tag = 'internal scratch']
  #allocation2 [shape = 'f32[8,8,32]{2,1,0:T(8,128)}', space=vmem, size = 0x8000, scoped, tag = 'scratch operand']
  #allocation3 [shape = 'f32[8,8,32]{2,1,0:T(8,128)}', space=vmem, size = 0x8000, scoped, tag = 'scratch operand']
  #allocation4 [shape = 'f32[8,8,96]{2,1,0:T(8,128)}', space=vmem, size = 0x8000, scoped, tag = 'scratch operand']
  #allocation5 [shape = 'f32[8,8,96]{2,1,0:T(8,128)}', space=vmem, size = 0x8000, scoped, tag = 'scratch operand']
  %s0 = inlined_call_operand.hbm [shape: f32[1,8,8,32], index: 0, kind: input, shape index: {}]
  %s1 = inlined_call_operand.hbm [shape: f32[32,192], index: 1, kind: input, shape index: {}]
  %s2 = inlined_call_operand.vmem [shape: f32[1,192], index: 2, kind: input, shape index: {}]
  %s3 = inlined_call_operand.hbm [shape: f32[32,96], index: 3, kind: input, shape index: {}]
  %s4 = inlined_call_operand.hbm [shape: f32[32,96], index: 4, kind: input, shape index: {}]
  %s5 = inlined_call_operand.vmem [shape: f32[1,96], index: 5, kind: input, shape index: {}]
  %s6 = inlined_call_operand.vmem [shape: f32[1,96], index: 6, kind: input, shape index: {}]
  %s7 = inlined_call_operand.hbm [shape: f32[2,32,64], index: 7, kind: input, shape index: {}]
  %s8 = inlined_call_operand.vmem [shape: f32[1,64], index: 8, kind: input, shape index: {}]
  %s9 = inlined_call_operand.vmem [shape: f32[1,64], index: 9, kind: input, shape index: {}]
  %s10 = inlined_call_operand.hbm [shape: f32[1,8,1,64], index: 10, kind: output, shape index: {}]
  %s11 = sld [smem:[#allocation0]]
  $region70: #{tpu_custom_call.1} parent=0
    _
  %s13 = ssub.s32 1, %s11
  %s14 = scalar_select 0, %s13, %s11
  $region1: #{tpu_custom_call.1} parent=0
    #allocation6 [shape = 'u8[32768]{0}', space=vmem, size = 0x8000, scoped, tag = 'input window, operand 0, single buffered']
    #allocation7 [shape = 's32[1]{0}', space=sflag, size = 0x4, scoped, tag = 'scoped memory for tpu_custom_call.1']
    #allocation8 [shape = 's32[1]{0}', space=sflag, size = 0x4, scoped, tag = 'scoped memory for tpu_custom_call.1']
    #allocation9 [shape = 'u8[32768]{0}', space=vmem, size = 0x8000, scoped, tag = 'input window, operand 1, single buffered']
    #allocation10 [shape = 's32[1]{0}', space=sflag, size = 0x4, scoped, tag = 'scoped memory for tpu_custom_call.1']
    #allocation11 [shape = 'u8[16384]{0}', space=vmem, size = 0x4000, scoped, tag = 'input window, operand 3, single buffered']
    #allocation12 [shape = 'u8[16384]{0}', space=vmem, size = 0x4000, scoped, tag = 'input window, operand 4, single buffered']
    #allocation13 [shape = 's32[1]{0}', space=sflag, size = 0x4, scoped, tag = 'scoped memory for tpu_custom_call.1']
    #allocation14 [shape = 'u8[32768]{0}', space=vmem, size = 0x8000, scoped, tag = 'input window, operand 7, single buffered']
    #allocation15 [shape = 'u8[4096]{0}', space=vmem, size = 0x1000, scoped, tag = 'output window, operand 0, single buffered']
    %15 = vsyncpa [#allocation7], 0
    %16 = vsyncpa [#allocation10], 0
    %17 = vsyncpa [#allocation13], 0
    %18 = vsyncpa [#allocation8], 0
    // Predicated region
    $region2: #{tpu_custom_call.1} parent=1 // pred_check
      _
    $region3: #{tpu_custom_call.1} parent=1 // pred_check_branch
      %20 = sbr.rel (0) target = $region5
    $region4: #{tpu_custom_call.1} parent=1 // pred_region
      %s22 = ssub.s32 1024, 1024
      %23 = vsyncadd [#allocation7], %s22
      %s24 = sshll.u32 [#allocation6], 4
      %s25 = int_to_ptr.vmem [resolvable:$true] %s24
      %30 = dma.hbm_to_vmem [thread:$0]  %s0, 1024, %s25, [#allocation7], 128, 128, 8
    $region5: #{tpu_custom_call.1} parent=1 // pred_fallthru
      _
    // Predicated region
    $region6: #{tpu_custom_call.1} parent=1 // pred_check
      _
    $region7: #{tpu_custom_call.1} parent=1 // pred_check_branch
      %32 = sbr.rel (0) target = $region9
    $region8: #{tpu_custom_call.1} parent=1 // pred_region
      %s34 = ssub.s32 1024, 1024
      %35 = vsyncadd [#allocation10], %s34
      %s36 = sshll.u32 [#allocation9], 4
      %s37 = int_to_ptr.vmem [resolvable:$true] %s36
      %42 = dma.hbm_to_vmem [thread:$0]  %s1, 1024, %s37, [#allocation10], 256, 256, 16
    $region9: #{tpu_custom_call.1} parent=1 // pred_fallthru
      _
    // Predicated region
    $region10: #{tpu_custom_call.1} parent=1 // pred_check
      _
    $region11: #{tpu_custom_call.1} parent=1 // pred_check_branch
      %44 = sbr.rel (0) target = $region13
    $region12: #{tpu_custom_call.1} parent=1 // pred_region
      _
    $region13: #{tpu_custom_call.1} parent=1 // pred_fallthru
      _
    // Predicated region
    $region14: #{tpu_custom_call.1} parent=1 // pred_check
      _
    $region15: #{tpu_custom_call.1} parent=1 // pred_check_branch
      %46 = sbr.rel (0) target = $region17
    $region16: #{tpu_custom_call.1} parent=1 // pred_region
      %s48 = ssub.s32 512, 512
      %49 = vsyncadd [#allocation10], %s48
      %s50 = sshll.u32 [#allocation11], 4
      %s51 = int_to_ptr.vmem [resolvable:$true] %s50
      %56 = dma.hbm_to_vmem [thread:$0]  %s3, 512, %s51, [#allocation10], 128, 128, 8
    $region17: #{tpu_custom_call.1} parent=1 // pred_fallthru
      _
    // Predicated region
    $region18: #{tpu_custom_call.1} parent=1 // pred_check
      _
    $region19: #{tpu_custom_call.1} parent=1 // pred_check_branch
      %58 = sbr.rel (0) target = $region21
    $region20: #{tpu_custom_call.1} parent=1 // pred_region
      %s60 = ssub.s32 512, 512
      %61 = vsyncadd [#allocation13], %s60
      %s62 = sshll.u32 [#allocation12], 4
      %s63 = int_to_ptr.vmem [resolvable:$true] %s62
      %68 = dma.hbm_to_vmem [thread:$0]  %s4, 512, %s63, [#allocation13], 128, 128, 8
    $region21: #{tpu_custom_call.1} parent=1 // pred_fallthru
      _
    // Predicated region
    $region22: #{tpu_custom_call.1} parent=1 // pred_check
      _
    $region23: #{tpu_custom_call.1} parent=1 // pred_check_branch
      %70 = sbr.rel (0) target = $region25
    $region24: #{tpu_custom_call.1} parent=1 // pred_region
      _
    $region25: #{tpu_custom_call.1} parent=1 // pred_fallthru
      _
    // Predicated region
    $region26: #{tpu_custom_call.1} parent=1 // pred_check
      _
    $region27: #{tpu_custom_call.1} parent=1 // pred_check_branch
      %72 = sbr.rel (0) target = $region29
    $region28: #{tpu_custom_call.1} parent=1 // pred_region
      _
    $region29: #{tpu_custom_call.1} parent=1 // pred_fallthru
      _
    // Predicated region
    $region30: #{tpu_custom_call.1} parent=1 // pred_check
      _
    $region31: #{tpu_custom_call.1} parent=1 // pred_check_branch
      %74 = sbr.rel (0) target = $region33
    $region32: #{tpu_custom_call.1} parent=1 // pred_region
      %s76 = ssub.s32 1024, 1024
      %77 = vsyncadd [#allocation13], %s76
      %s78 = sshll.u32 [#allocation14], 4
      %s79 = int_to_ptr.vmem [resolvable:$true] %s78
      %84 = dma.hbm_to_vmem [thread:$0]  %s7, 1024, %s79, [#allocation13], 128, 128, 8
    $region33: #{tpu_custom_call.1} parent=1 // pred_fallthru
      _
    // Predicated region
    $region34: #{tpu_custom_call.1} parent=1 // pred_check
      _
    $region35: #{tpu_custom_call.1} parent=1 // pred_check_branch
      %86 = sbr.rel (0) target = $region37
    $region36: #{tpu_custom_call.1} parent=1 // pred_region
      _
    $region37: #{tpu_custom_call.1} parent=1 // pred_fallthru
      _
    // Predicated region
    $region38: #{tpu_custom_call.1} parent=1 // pred_check
      _
    $region39: #{tpu_custom_call.1} parent=1 // pred_check_branch
      %88 = sbr.rel (0) target = $region41
    $region40: #{tpu_custom_call.1} parent=1 // pred_region
      _
    $region41: #{tpu_custom_call.1} parent=1 // pred_fallthru
      _
    // Predicated region
    $region42: #{tpu_custom_call.1} parent=1 // pred_check
      _
    $region43: #{tpu_custom_call.1} parent=1 // pred_check_branch
      %90 = sbr.rel (0) target = $region45
    $region44: #{tpu_custom_call.1} parent=1 // pred_region
      %91 = dma.done [#allocation7], 1024
    $region45: #{tpu_custom_call.1} parent=1 // pred_fallthru
      _
    // Predicated region
    $region46: #{tpu_custom_call.1} parent=1 // pred_check
      _
    $region47: #{tpu_custom_call.1} parent=1 // pred_check_branch
      %93 = sbr.rel (0) target = $region49
    $region48: #{tpu_custom_call.1} parent=1 // pred_region
      %94 = dma.done [#allocation10], 1024
    $region49: #{tpu_custom_call.1} parent=1 // pred_fallthru
      _
    // Predicated region
    $region50: #{tpu_custom_call.1} parent=1 // pred_check
      _
    $region51: #{tpu_custom_call.1} parent=1 // pred_check_branch
      %96 = sbr.rel (0) target = $region53
    $region52: #{tpu_custom_call.1} parent=1 // pred_region
      %97 = dma.done [#allocation10], 512
    $region53: #{tpu_custom_call.1} parent=1 // pred_fallthru
      _
    // Predicated region
    $region54: #{tpu_custom_call.1} parent=1 // pred_check
      _
    $region55: #{tpu_custom_call.1} parent=1 // pred_check_branch
      %99 = sbr.rel (0) target = $region57
    $region56: #{tpu_custom_call.1} parent=1 // pred_region
      %100 = dma.done [#allocation13], 512
    $region57: #{tpu_custom_call.1} parent=1 // pred_fallthru
      _
    // Predicated region
    $region58: #{tpu_custom_call.1} parent=1 // pred_check
      _
    $region59: #{tpu_custom_call.1} parent=1 // pred_check_branch
      %102 = sbr.rel (0) target = $region61
    $region60: #{tpu_custom_call.1} parent=1 // pred_region
      %103 = dma.done [#allocation13], 1024
    $region61: #{tpu_custom_call.1} parent=1 // pred_fallthru
      _
    %v104 = vld [vmem:[#allocation6] sm:$0xff]
    %v105 = vld [vmem:[#allocation6 + $0x8] sm:$0xff]
    %v106 = vld [vmem:[#allocation6 + $0x10] sm:$0xff]
    %v107 = vld [vmem:[#allocation6 + $0x18] sm:$0xff]
    %v108 = vld [vmem:[#allocation6 + $0x20] sm:$0xff]
    %v109 = vld [vmem:[#allocation6 + $0x28] sm:$0xff]
    %v110 = vld [vmem:[#allocation6 + $0x30] sm:$0xff]
    %v111 = vld [vmem:[#allocation6 + $0x38] sm:$0xff]
    %v112 = vld [vmem:[#allocation9] sm:$0xff]
    %v113 = vld [vmem:[#allocation9 + $0x8] sm:$0xff]
    %v114 = vld [vmem:[#allocation9 + $0x10] sm:$0xff]
    %v115 = vld [vmem:[#allocation9 + $0x18] sm:$0xff]
    %v116 = vld [vmem:[#allocation9 + $0x20] sm:$0xff]
    %v117 = vld [vmem:[#allocation9 + $0x28] sm:$0xff]
    %v118 = vld [vmem:[#allocation9 + $0x30] sm:$0xff]
    %v119 = vld [vmem:[#allocation9 + $0x38] sm:$0xff]
    %v120 = vld [vmem:[%s2] sm:$0x3]
    %v122 = vlaneseq
    %v123 = vshrl.u32 %v122, 7
    %v124 = vsub.s32 0, %v123
    %v125 = vrot.slane %v120, %v124
    %v126 = vlaneseq
    %v127 = vshrl.u32 %v126, 7
    %v128 = vsub.s32 1, %v127
    %v129 = vrot.slane %v120, %v128
    %vm132 = vcmask 261120
    %v134 = vsel %vm132, %v104, 0
    %v137 = vsel %vm132, %v105, 0
    %v140 = vsel %vm132, %v106, 0
    %v143 = vsel %vm132, %v107, 0
    %v146 = vsel %vm132, %v108, 0
    %v149 = vsel %vm132, %v109, 0
    %v152 = vsel %vm132, %v110, 0
    %v155 = vsel %vm132, %v111, 0
    %157 = vmatprep.subr.mxu0 %v113
    %158 = vmatpush1.msra.mxu0 %v112
    %159 = vmatprep.subr.mxu0 %v115
    %160 = vmatpush1.msra.mxu0 %v114
    %161 = vmatprep.subr.mxu0 %v117
    %162 = vmatpush1.msra.mxu0 %v116
    %163 = vmatprep.subr.mxu0 %v119
    %164 = vmatpush1.msra.mxu0 %v118
    %165 = vmatprep.subr.mxu0 0.0
    %166 = vmatpush1.msra.mxu0 0.0
    %167 = vmatprep.subr.mxu0 0.0
    %168 = vmatpush1.msra.mxu0 0.0
    %169 = vmatprep.subr.mxu0 0.0
    %170 = vmatpush1.msra.mxu0 0.0
    %171 = vmatprep.subr.mxu0 0.0
    %172 = vmatpush1.msra.mxu0 0.0
    %173 = vmatprep.subr.mxu0 0.0
    %174 = vmatpush1.msra.mxu0 0.0
    %175 = vmatprep.subr.mxu0 0.0
    %176 = vmatpush1.msra.mxu0 0.0
    %177 = vmatprep.subr.mxu0 0.0
    %178 = vmatpush1.msra.mxu0 0.0
    %179 = vmatprep.subr.mxu0 0.0
    %180 = vmatpush1.msra.mxu0 0.0
    %181 = vmatprep.subr.mxu0 0.0
    %182 = vmatpush1.msra.mxu0 0.0
    %183 = vmatprep.subr.mxu0 0.0
    %184 = vmatpush1.msra.mxu0 0.0
    %185 = vmatprep.subr.mxu0 0.0
    %186 = vmatpush1.msra.mxu0 0.0
    %187 = vmatprep.subr.mxu0 0.0
    %188 = vmatpush1.msra.mxu0 0.0
    %189 = vmatprep.subr.mxu0 0.0
    %190 = vmatpush1.msra.mxu0 0.0
    %191 = vmatprep.subr.mxu0 0.0
    %192 = vmatpush1.msra.mxu0 0.0
    %193 = vmatprep.subr.mxu0 0.0
    %194 = vmatpush1.msra.mxu0 0.0
    %195 = vmatprep.subr.mxu0 0.0
    %196 = vmatpush1.msra.mxu0 0.0
    %197 = vmatprep.subr.mxu0 0.0
    %198 = vmatpush1.msra.mxu0 0.0
    %199 = vmatprep.subr.mxu0 0.0
    %200 = vmatpush1.msra.mxu0 0.0
    %201 = vmatprep.subr.mxu0 0.0
    %202 = vmatpush1.msra.mxu0 0.0
    %203 = vmatprep.subr.mxu0 0.0
    %204 = vmatpush1.msra.mxu0 0.0
    %205 = vmatprep.subr.mxu0 0.0
    %206 = vmatpush1.msra.mxu0 0.0
    %207 = vmatprep.subr.mxu0 0.0
    %208 = vmatpush1.msra.mxu0 0.0
    %209 = vmatprep.subr.mxu0 0.0
    %210 = vmatpush1.msra.mxu0 0.0
    %211 = vmatprep.subr.mxu0 0.0
    %212 = vmatpush1.msra.mxu0 0.0
    %213 = vmatprep.subr.mxu0 0.0
    %214 = vmatpush1.msra.mxu0 0.0
    %215 = vmatprep.subr.mxu0 0.0
    %216 = vmatpush1.msra.mxu0 0.0
    %217 = vmatprep.subr.mxu0 0.0
    %218 = vmatpush1.msra.mxu0 0.0
    %219 = vmatprep.subr.mxu0 0.0
    %220 = vmatpush1.msra.mxu0 0.0
    %221 = vmatprep.mubr.f32.mxu0 0.0
    %222 = vmatmul.mubr.f32.gmra.mrb[0].mxu0 %v134
    %v223 = vpop.f32.mrb[0].mxu0
    %v224 = vadd.f32 %v125, %v223
    %v225 = vpop.f32.mrb[0].mxu0
    %v226 = vadd.f32 %v129, %v225
    %227 = vmatprep.mubr.f32.mxu0 0.0
    %228 = vmatmul.mubr.f32.gmra.mrb[0].mxu0 %v137
    %v229 = vpop.f32.mrb[0].mxu0
    %v230 = vadd.f32 %v125, %v229
    %v231 = vpop.f32.mrb[0].mxu0
    %v232 = vadd.f32 %v129, %v231
    %233 = vmatprep.mubr.f32.mxu0 0.0
    %234 = vmatmul.mubr.f32.gmra.mrb[0].mxu0 %v140
    %v235 = vpop.f32.mrb[0].mxu0
    %v236 = vadd.f32 %v125, %v235
    %v237 = vpop.f32.mrb[0].mxu0
    %v238 = vadd.f32 %v129, %v237
    %239 = vmatprep.mubr.f32.mxu0 0.0
    %240 = vmatmul.mubr.f32.gmra.mrb[0].mxu0 %v143
    %v241 = vpop.f32.mrb[0].mxu0
    %v242 = vadd.f32 %v125, %v241
    %v243 = vpop.f32.mrb[0].mxu0
    %v244 = vadd.f32 %v129, %v243
    %245 = vmatprep.mubr.f32.mxu0 0.0
    %246 = vmatmul.mubr.f32.gmra.mrb[0].mxu0 %v146
    %v247 = vpop.f32.mrb[0].mxu0
    %v248 = vadd.f32 %v125, %v247
    %v249 = vpop.f32.mrb[0].mxu0
    %v250 = vadd.f32 %v129, %v249
    %251 = vmatprep.mubr.f32.mxu0 0.0
    %252 = vmatmul.mubr.f32.gmra.mrb[0].mxu0 %v149
    %v253 = vpop.f32.mrb[0].mxu0
    %v254 = vadd.f32 %v125, %v253
    %v255 = vpop.f32.mrb[0].mxu0
    %v256 = vadd.f32 %v129, %v255
    %257 = vmatprep.mubr.f32.mxu0 0.0
    %258 = vmatmul.mubr.f32.gmra.mrb[0].mxu0 %v152
    %v259 = vpop.f32.mrb[0].mxu0
    %v260 = vadd.f32 %v125, %v259
    %v261 = vpop.f32.mrb[0].mxu0
    %v262 = vadd.f32 %v129, %v261
    %263 = vmatprep.mubr.f32.mxu0 0.0
    %264 = vmatmul.mubr.f32.gmra.mrb[0].mxu0 %v155
    %v265 = vpop.f32.mrb[0].mxu0
    %v266 = vadd.f32 %v125, %v265
    %v267 = vpop.f32.mrb[0].mxu0
    %v268 = vadd.f32 %v129, %v267
    %269 = vdwg.mxu0
    %vm270 = vcmask 785408
    %271 = vst.msk [vmem:[#allocation4] sm:$0xff] %vm270, %v224
    %272 = vst.msk [vmem:[#allocation4 + $0x8] sm:$0xff] %vm270, %v230
    %273 = vst.msk [vmem:[#allocation4 + $0x10] sm:$0xff] %vm270, %v236
    %274 = vst.msk [vmem:[#allocation4 + $0x18] sm:$0xff] %vm270, %v242
    %275 = vst.msk [vmem:[#allocation4 + $0x20] sm:$0xff] %vm270, %v248
    %276 = vst.msk [vmem:[#allocation4 + $0x28] sm:$0xff] %vm270, %v254
    %277 = vst.msk [vmem:[#allocation4 + $0x30] sm:$0xff] %vm270, %v260
    %278 = vst.msk [vmem:[#allocation4 + $0x38] sm:$0xff] %vm270, %v266
    %295 = vrot.lane.b32.xlu0 %v224, 32
    %v296 = vpop.permute.xlu0 %295
    %297 = vrot.lane.b32.xlu0 %v226, 32
    %v298 = vpop.permute.xlu0 %297
    %299 = vrot.lane.b32.xlu0 %v230, 32
    %v300 = vpop.permute.xlu0 %299
    %301 = vrot.lane.b32.xlu0 %v232, 32
    %v302 = vpop.permute.xlu0 %301
    %303 = vrot.lane.b32.xlu0 %v236, 32
    %v304 = vpop.permute.xlu0 %303
    %305 = vrot.lane.b32.xlu0 %v238, 32
    %v306 = vpop.permute.xlu0 %305
    %307 = vrot.lane.b32.xlu0 %v242, 32
    %v308 = vpop.permute.xlu0 %307
    %309 = vrot.lane.b32.xlu0 %v244, 32
    %v310 = vpop.permute.xlu0 %309
    %311 = vrot.lane.b32.xlu0 %v248, 32
    %v312 = vpop.permute.xlu0 %311
    %313 = vrot.lane.b32.xlu0 %v250, 32
    %v314 = vpop.permute.xlu0 %313
    %315 = vrot.lane.b32.xlu0 %v254, 32
    %v316 = vpop.permute.xlu0 %315
    %317 = vrot.lane.b32.xlu0 %v256, 32
    %v318 = vpop.permute.xlu0 %317
    %319 = vrot.lane.b32.xlu0 %v260, 32
    %v320 = vpop.permute.xlu0 %319
    %321 = vrot.lane.b32.xlu0 %v262, 32
    %v322 = vpop.permute.xlu0 %321
    %323 = vrot.lane.b32.xlu0 %v266, 32
    %v324 = vpop.permute.xlu0 %323
    %325 = vrot.lane.b32.xlu0 %v268, 32
    %v326 = vpop.permute.xlu0 %325
    %v327 = vsel %vm132, %v296, %v298
    %v328 = vsel %vm132, %v300, %v302
    %v329 = vsel %vm132, %v304, %v306
    %v330 = vsel %vm132, %v308, %v310
    %v331 = vsel %vm132, %v312, %v314
    %v332 = vsel %vm132, %v316, %v318
    %v333 = vsel %vm132, %v320, %v322
    %v334 = vsel %vm132, %v324, %v326
    %343 = vst.msk [vmem:[#allocation5] sm:$0xff] %vm270, %v327
    %344 = vst.msk [vmem:[#allocation5 + $0x8] sm:$0xff] %vm270, %v328
    %345 = vst.msk [vmem:[#allocation5 + $0x10] sm:$0xff] %vm270, %v329
    %346 = vst.msk [vmem:[#allocation5 + $0x18] sm:$0xff] %vm270, %v330
    %347 = vst.msk [vmem:[#allocation5 + $0x20] sm:$0xff] %vm270, %v331
    %348 = vst.msk [vmem:[#allocation5 + $0x28] sm:$0xff] %vm270, %v332
    %349 = vst.msk [vmem:[#allocation5 + $0x30] sm:$0xff] %vm270, %v333
    %350 = vst.msk [vmem:[#allocation5 + $0x38] sm:$0xff] %vm270, %v334
    %v351 = vld [vmem:[#allocation11] sm:$0xff]
    %v352 = vld [vmem:[#allocation11 + $0x8] sm:$0xff]
    %v353 = vld [vmem:[#allocation11 + $0x10] sm:$0xff]
    %v354 = vld [vmem:[#allocation11 + $0x18] sm:$0xff]
    %v355 = vld [vmem:[#allocation12] sm:$0xff]
    %v356 = vld [vmem:[#allocation12 + $0x8] sm:$0xff]
    %v357 = vld [vmem:[#allocation12 + $0x10] sm:$0xff]
    %v358 = vld [vmem:[#allocation12 + $0x18] sm:$0xff]
    %v359 = vld [vmem:[%s5] sm:$0x1]
    %v361 = vlaneseq
    %v362 = vshrl.u32 %v361, 7
    %v363 = vsub.s32 0, %v362
    %v364 = vrot.slane %v359, %v363
    %v366 = vld [vmem:[%s6] sm:$0x1]
    %v368 = vlaneseq
    %v369 = vshrl.u32 %v368, 7
    %v370 = vsub.s32 0, %v369
    %v371 = vrot.slane %v366, %v370
    %v373 = vld [vmem:[#allocation4] sm:$0xff]
    %v375 = vsel %vm132, 0.0, 0
    %377 = vmatprep.subr.mxu0 0.0
    %378 = vmatpush1.msra.mxu0 %v351
    %379 = vmatprep.subr.mxu0 0.0
    %380 = vmatpush1.msra.mxu0 %v352
    %381 = vmatprep.subr.mxu0 0.0
    %382 = vmatpush1.msra.mxu0 %v353
    %383 = vmatprep.subr.mxu0 0.0
    %384 = vmatpush1.msra.mxu0 %v354
    %385 = vmatprep.subr.mxu0 0.0
    %386 = vmatpush1.msra.mxu0 0.0
    %387 = vmatprep.subr.mxu0 0.0
    %388 = vmatpush1.msra.mxu0 0.0
    %389 = vmatprep.subr.mxu0 0.0
    %390 = vmatpush1.msra.mxu0 0.0
    %391 = vmatprep.subr.mxu0 0.0
    %392 = vmatpush1.msra.mxu0 0.0
    %393 = vmatprep.subr.mxu0 0.0
    %394 = vmatpush1.msra.mxu0 0.0
    %395 = vmatprep.subr.mxu0 0.0
    %396 = vmatpush1.msra.mxu0 0.0
    %397 = vmatprep.subr.mxu0 0.0
    %398 = vmatpush1.msra.mxu0 0.0
    %399 = vmatprep.subr.mxu0 0.0
    %400 = vmatpush1.msra.mxu0 0.0
    %401 = vmatprep.subr.mxu0 0.0
    %402 = vmatpush1.msra.mxu0 0.0
    %403 = vmatprep.subr.mxu0 0.0
    %404 = vmatpush1.msra.mxu0 0.0
    %405 = vmatprep.subr.mxu0 0.0
    %406 = vmatpush1.msra.mxu0 0.0
    %407 = vmatprep.subr.mxu0 0.0
    %408 = vmatpush1.msra.mxu0 0.0
    %409 = vmatprep.subr.mxu0 0.0
    %410 = vmatpush1.msra.mxu0 0.0
    %411 = vmatprep.subr.mxu0 0.0
    %412 = vmatpush1.msra.mxu0 0.0
    %413 = vmatprep.subr.mxu0 0.0
    %414 = vmatpush1.msra.mxu0 0.0
    %415 = vmatprep.subr.mxu0 0.0
    %416 = vmatpush1.msra.mxu0 0.0
    %417 = vmatprep.subr.mxu0 0.0
    %418 = vmatpush1.msra.mxu0 0.0
    %419 = vmatprep.subr.mxu0 0.0
    %420 = vmatpush1.msra.mxu0 0.0
    %421 = vmatprep.subr.mxu0 0.0
    %422 = vmatpush1.msra.mxu0 0.0
    %423 = vmatprep.subr.mxu0 0.0
    %424 = vmatpush1.msra.mxu0 0.0
    %425 = vmatprep.subr.mxu0 0.0
    %426 = vmatpush1.msra.mxu0 0.0
    %427 = vmatprep.subr.mxu0 0.0
    %428 = vmatpush1.msra.mxu0 0.0
    %429 = vmatprep.subr.mxu0 0.0
    %430 = vmatpush1.msra.mxu0 0.0
    %431 = vmatprep.subr.mxu0 0.0
    %432 = vmatpush1.msra.mxu0 0.0
    %433 = vmatprep.subr.mxu0 0.0
    %434 = vmatpush1.msra.mxu0 0.0
    %435 = vmatprep.subr.mxu0 0.0
    %436 = vmatpush1.msra.mxu0 0.0
    %437 = vmatprep.subr.mxu0 0.0
    %438 = vmatpush1.msra.mxu0 0.0
    %439 = vmatprep.subr.mxu0 0.0
    %440 = vmatpush1.msra.mxu0 0.0
    %441 = vmatprep.mubr.f32.mxu0 0.0
    %442 = vmatmul.mubr.f32.gmra.mrb[0].mxu0 %v375
    %v443 = vpop.f32.mrb[0].mxu0
    %v444 = vadd.f32 %v364, %v443
    %v445 = vpop.f32.mrb[0].mxu0
    %446 = vdwg.mxu0
    %v447 = vadd.f32 %v373, %v444
    %v448 = vxor.u32 %v447, 2147483648
    %v449 = vmul.f32 %v448, 1.442695
    %v450 = vpow.pop %v449
    %v451 = vadd.f32 %v450, 1.0
    %v452 = vrcp.pop %v451
    %v453 = vmul.f32 1.0, %v452
    %455 = vrot.lane.b32.xlu0 %v444, 64
    %v456 = vpop.permute.xlu0 %455
    %v458 = vmul.f32 %v453, %v456
    %460 = vrot.lane.b32.xlu0 %v458, 64
    %v461 = vpop.permute.xlu0 %460
    %v463 = vadd.f32 %v373, %v461
    %v464 = vtanh.pop %v463
    %v465 = vsub.f32 0.0, %v464
    %467 = vrot.lane.b32.xlu0 %v465, 96
    %v468 = vpop.permute.xlu0 %467
    %v470 = vmul.f32 %v453, %v468
    %472 = vrot.lane.b32.xlu0 %v470, 32
    %v473 = vpop.permute.xlu0 %472
    %v475 = vadd.f32 %v464, %v473
    %s476 = scalar_lea.vmem [#allocation5], 56
    %v477 = vld [vmem:[%s476] sm:$0xff]
    %478 = vmatprep.subr.mxu0 0.0
    %479 = vmatpush1.msra.mxu0 %v355
    %480 = vmatprep.subr.mxu0 0.0
    %481 = vmatpush1.msra.mxu0 %v356
    %482 = vmatprep.subr.mxu0 0.0
    %483 = vmatpush1.msra.mxu0 %v357
    %484 = vmatprep.subr.mxu0 0.0
    %485 = vmatpush1.msra.mxu0 %v358
    %486 = vmatprep.subr.mxu0 0.0
    %487 = vmatpush1.msra.mxu0 0.0
    %488 = vmatprep.subr.mxu0 0.0
    %489 = vmatpush1.msra.mxu0 0.0
    %490 = vmatprep.subr.mxu0 0.0
    %491 = vmatpush1.msra.mxu0 0.0
    %492 = vmatprep.subr.mxu0 0.0
    %493 = vmatpush1.msra.mxu0 0.0
    %494 = vmatprep.subr.mxu0 0.0
    %495 = vmatpush1.msra.mxu0 0.0
    %496 = vmatprep.subr.mxu0 0.0
    %497 = vmatpush1.msra.mxu0 0.0
    %498 = vmatprep.subr.mxu0 0.0
    %499 = vmatpush1.msra.mxu0 0.0
    %500 = vmatprep.subr.mxu0 0.0
    %501 = vmatpush1.msra.mxu0 0.0
    %502 = vmatprep.subr.mxu0 0.0
    %503 = vmatpush1.msra.mxu0 0.0
    %504 = vmatprep.subr.mxu0 0.0
    %505 = vmatpush1.msra.mxu0 0.0
    %506 = vmatprep.subr.mxu0 0.0
    %507 = vmatpush1.msra.mxu0 0.0
    %508 = vmatprep.subr.mxu0 0.0
    %509 = vmatpush1.msra.mxu0 0.0
    %510 = vmatprep.subr.mxu0 0.0
    %511 = vmatpush1.msra.mxu0 0.0
    %512 = vmatprep.subr.mxu0 0.0
    %513 = vmatpush1.msra.mxu0 0.0
    %514 = vmatprep.subr.mxu0 0.0
    %515 = vmatpush1.msra.mxu0 0.0
    %516 = vmatprep.subr.mxu0 0.0
    %517 = vmatpush1.msra.mxu0 0.0
    %518 = vmatprep.subr.mxu0 0.0
    %519 = vmatpush1.msra.mxu0 0.0
    %520 = vmatprep.subr.mxu0 0.0
    %521 = vmatpush1.msra.mxu0 0.0
    %522 = vmatprep.subr.mxu0 0.0
    %523 = vmatpush1.msra.mxu0 0.0
    %524 = vmatprep.subr.mxu0 0.0
    %525 = vmatpush1.msra.mxu0 0.0
    %526 = vmatprep.subr.mxu0 0.0
    %527 = vmatpush1.msra.mxu0 0.0
    %528 = vmatprep.subr.mxu0 0.0
    %529 = vmatpush1.msra.mxu0 0.0
    %530 = vmatprep.subr.mxu0 0.0
    %531 = vmatpush1.msra.mxu0 0.0
    %532 = vmatprep.subr.mxu0 0.0
    %533 = vmatpush1.msra.mxu0 0.0
    %534 = vmatprep.subr.mxu0 0.0
    %535 = vmatpush1.msra.mxu0 0.0
    %536 = vmatprep.subr.mxu0 0.0
    %537 = vmatpush1.msra.mxu0 0.0
    %538 = vmatprep.subr.mxu0 0.0
    %539 = vmatpush1.msra.mxu0 0.0
    %540 = vmatprep.subr.mxu0 0.0
    %541 = vmatpush1.msra.mxu0 0.0
    %542 = vmatprep.mubr.f32.mxu0 0.0
    %543 = vmatmul.mubr.f32.gmra.mrb[0].mxu0 %v375
    %v544 = vpop.f32.mrb[0].mxu0
    %v545 = vadd.f32 %v371, %v544
    %v546 = vpop.f32.mrb[0].mxu0
    %547 = vdwg.mxu0
    %v548 = vadd.f32 %v477, %v545
    %v549 = vxor.u32 %v548, 2147483648
    %v550 = vmul.f32 %v549, 1.442695
    %v551 = vpow.pop %v550
    %v552 = vadd.f32 %v551, 1.0
    %v553 = vrcp.pop %v552
    %v554 = vmul.f32 1.0, %v553
    %556 = vrot.lane.b32.xlu0 %v545, 64
    %v557 = vpop.permute.xlu0 %556
    %v559 = vmul.f32 %v554, %v557
    %561 = vrot.lane.b32.xlu0 %v559, 64
    %v562 = vpop.permute.xlu0 %561
    %v564 = vadd.f32 %v477, %v562
    %v565 = vtanh.pop %v564
    %v566 = vsub.f32 0.0, %v565
    %568 = vrot.lane.b32.xlu0 %v566, 96
    %v569 = vpop.permute.xlu0 %568
    %v571 = vmul.f32 %v554, %v569
    %573 = vrot.lane.b32.xlu0 %v571, 32
    %v574 = vpop.permute.xlu0 %573
    %v576 = vadd.f32 %v565, %v574
    %578 = vrot.lane.b32.xlu0 %v475, 64
    %v579 = vpop.permute.xlu0 %578
    %581 = vst.msk [vmem:[#allocation2] sm:$0xff] %vm132, %v579
    %583 = vrot.lane.b32.xlu0 %v576, 64
    %v584 = vpop.permute.xlu0 %583
    %s586 = scalar_lea.vmem [#allocation3], 56
    %587 = vst.msk [vmem:[%s586] sm:$0xff] %vm132, %v584
    %s588 = scalar_lea.vmem [#allocation4], 8
    %v589 = vld [vmem:[%s588] sm:$0xff]
    %v590 = vsel %vm132, %v579, 0
    %592 = vmatprep.subr.mxu0 0.0
    %593 = vmatpush1.msra.mxu0 %v351
    %594 = vmatprep.subr.mxu0 0.0
    %595 = vmatpush1.msra.mxu0 %v352
    %596 = vmatprep.subr.mxu0 0.0
    %597 = vmatpush1.msra.mxu0 %v353
    %598 = vmatprep.subr.mxu0 0.0
    %599 = vmatpush1.msra.mxu0 %v354
    %600 = vmatprep.subr.mxu0 0.0
    %601 = vmatpush1.msra.mxu0 0.0
    %602 = vmatprep.subr.mxu0 0.0
    %603 = vmatpush1.msra.mxu0 0.0
    %604 = vmatprep.subr.mxu0 0.0
    %605 = vmatpush1.msra.mxu0 0.0
    %606 = vmatprep.subr.mxu0 0.0
    %607 = vmatpush1.msra.mxu0 0.0
    %608 = vmatprep.subr.mxu0 0.0
    %609 = vmatpush1.msra.mxu0 0.0
    %610 = vmatprep.subr.mxu0 0.0
    %611 = vmatpush1.msra.mxu0 0.0
    %612 = vmatprep.subr.mxu0 0.0
    %613 = vmatpush1.msra.mxu0 0.0
    %614 = vmatprep.subr.mxu0 0.0
    %615 = vmatpush1.msra.mxu0 0.0
    %616 = vmatprep.subr.mxu0 0.0
    %617 = vmatpush1.msra.mxu0 0.0
    %618 = vmatprep.subr.mxu0 0.0
    %619 = vmatpush1.msra.mxu0 0.0
    %620 = vmatprep.subr.mxu0 0.0
    %621 = vmatpush1.msra.mxu0 0.0
    %622 = vmatprep.subr.mxu0 0.0
    %623 = vmatpush1.msra.mxu0 0.0
    %624 = vmatprep.subr.mxu0 0.0
    %625 = vmatpush1.msra.mxu0 0.0
    %626 = vmatprep.subr.mxu0 0.0
    %627 = vmatpush1.msra.mxu0 0.0
    %628 = vmatprep.subr.mxu0 0.0
    %629 = vmatpush1.msra.mxu0 0.0
    %630 = vmatprep.subr.mxu0 0.0
    %631 = vmatpush1.msra.mxu0 0.0
    %632 = vmatprep.subr.mxu0 0.0
    %633 = vmatpush1.msra.mxu0 0.0
    %634 = vmatprep.subr.mxu0 0.0
    %635 = vmatpush1.msra.mxu0 0.0
    %636 = vmatprep.subr.mxu0 0.0
    %637 = vmatpush1.msra.mxu0 0.0
    %638 = vmatprep.subr.mxu0 0.0
    %639 = vmatpush1.msra.mxu0 0.0
    %640 = vmatprep.subr.mxu0 0.0
    %641 = vmatpush1.msra.mxu0 0.0
    %642 = vmatprep.subr.mxu0 0.0
    %643 = vmatpush1.msra.mxu0 0.0
    %644 = vmatprep.subr.mxu0 0.0
    %645 = vmatpush1.msra.mxu0 0.0
    %646 = vmatprep.subr.mxu0 0.0
    %647 = vmatpush1.msra.mxu0 0.0
    %648 = vmatprep.subr.mxu0 0.0
    %649 = vmatpush1.msra.mxu0 0.0
    %650 = vmatprep.subr.mxu0 0.0
    %651 = vmatpush1.msra.mxu0 0.0
    %652 = vmatprep.subr.mxu0 0.0
    %653 = vmatpush1.msra.mxu0 0.0
    %654 = vmatprep.subr.mxu0 0.0
    %655 = vmatpush1.msra.mxu0 0.0
    %656 = vmatprep.mubr.f32.mxu0 0.0
    %657 = vmatmul.mubr.f32.gmra.mrb[0].mxu0 %v590
    %v658 = vpop.f32.mrb[0].mxu0
    %v659 = vadd.f32 %v364, %v658
    %v660 = vpop.f32.mrb[0].mxu0
    %661 = vdwg.mxu0
    %v662 = vadd.f32 %v589, %v659
    %v663 = vxor.u32 %v662, 2147483648
    %v664 = vmul.f32 %v663, 1.442695
    %v665 = vpow.pop %v664
    %v666 = vadd.f32 %v665, 1.0
    %v667 = vrcp.pop %v666
    %v668 = vmul.f32 1.0, %v667
    %670 = vrot.lane.b32.xlu0 %v659, 64
    %v671 = vpop.permute.xlu0 %670
    %v673 = vmul.f32 %v668, %v671
    %675 = vrot.lane.b32.xlu0 %v673, 64
    %v676 = vpop.permute.xlu0 %675
    %v678 = vadd.f32 %v589, %v676
    %v679 = vtanh.pop %v678
    %v680 = vsub.f32 %v475, %v679
    %682 = vrot.lane.b32.xlu0 %v680, 96
    %v683 = vpop.permute.xlu0 %682
    %v685 = vmul.f32 %v668, %v683
    %687 = vrot.lane.b32.xlu0 %v685, 32
    %v688 = vpop.permute.xlu0 %687
    %v690 = vadd.f32 %v679, %v688
    %s691 = scalar_lea.vmem [#allocation5], 48
    %v692 = vld [vmem:[%s691] sm:$0xff]
    %v693 = vsel %vm132, %v584, 0
    %695 = vmatprep.subr.mxu0 0.0
    %696 = vmatpush1.msra.mxu0 %v355
    %697 = vmatprep.subr.mxu0 0.0
    %698 = vmatpush1.msra.mxu0 %v356
    %699 = vmatprep.subr.mxu0 0.0
    %700 = vmatpush1.msra.mxu0 %v357
    %701 = vmatprep.subr.mxu0 0.0
    %702 = vmatpush1.msra.mxu0 %v358
    %703 = vmatprep.subr.mxu0 0.0
    %704 = vmatpush1.msra.mxu0 0.0
    %705 = vmatprep.subr.mxu0 0.0
    %706 = vmatpush1.msra.mxu0 0.0
    %707 = vmatprep.subr.mxu0 0.0
    %708 = vmatpush1.msra.mxu0 0.0
    %709 = vmatprep.subr.mxu0 0.0
    %710 = vmatpush1.msra.mxu0 0.0
    %711 = vmatprep.subr.mxu0 0.0
    %712 = vmatpush1.msra.mxu0 0.0
    %713 = vmatprep.subr.mxu0 0.0
    %714 = vmatpush1.msra.mxu0 0.0
    %715 = vmatprep.subr.mxu0 0.0
    %716 = vmatpush1.msra.mxu0 0.0
    %717 = vmatprep.subr.mxu0 0.0
    %718 = vmatpush1.msra.mxu0 0.0
    %719 = vmatprep.subr.mxu0 0.0
    %720 = vmatpush1.msra.mxu0 0.0
    %721 = vmatprep.subr.mxu0 0.0
    %722 = vmatpush1.msra.mxu0 0.0
    %723 = vmatprep.subr.mxu0 0.0
    %724 = vmatpush1.msra.mxu0 0.0
    %725 = vmatprep.subr.mxu0 0.0
    %726 = vmatpush1.msra.mxu0 0.0
    %727 = vmatprep.subr.mxu0 0.0
    %728 = vmatpush1.msra.mxu0 0.0
    %729 = vmatprep.subr.mxu0 0.0
    %730 = vmatpush1.msra.mxu0 0.0
    %731 = vmatprep.subr.mxu0 0.0
    %732 = vmatpush1.msra.mxu0 0.0
    %733 = vmatprep.subr.mxu0 0.0
    %734 = vmatpush1.msra.mxu0 0.0
    %735 = vmatprep.subr.mxu0 0.0
    %736 = vmatpush1.msra.mxu0 0.0
    %737 = vmatprep.subr.mxu0 0.0
    %738 = vmatpush1.msra.mxu0 0.0
    %739 = vmatprep.subr.mxu0 0.0
    %740 = vmatpush1.msra.mxu0 0.0
    %741 = vmatprep.subr.mxu0 0.0
    %742 = vmatpush1.msra.mxu0 0.0
    %743 = vmatprep.subr.mxu0 0.0
    %744 = vmatpush1.msra.mxu0 0.0
    %745 = vmatprep.subr.mxu0 0.0
    %746 = vmatpush1.msra.mxu0 0.0
    %747 = vmatprep.subr.mxu0 0.0
    %748 = vmatpush1.msra.mxu0 0.0
    %749 = vmatprep.subr.mxu0 0.0
    %750 = vmatpush1.msra.mxu0 0.0
    %751 = vmatprep.subr.mxu0 0.0
    %752 = vmatpush1.msra.mxu0 0.0
    %753 = vmatprep.subr.mxu0 0.0
    %754 = vmatpush1.msra.mxu0 0.0
    %755 = vmatprep.subr.mxu0 0.0
    %756 = vmatpush1.msra.mxu0 0.0
    %757 = vmatprep.subr.mxu0 0.0
    %758 = vmatpush1.msra.mxu0 0.0
    %759 = vmatprep.mubr.f32.mxu0 0.0
    %760 = vmatmul.mubr.f32.gmra.mrb[0].mxu0 %v693
    %v761 = vpop.f32.mrb[0].mxu0
    %v762 = vadd.f32 %v371, %v761
    %v763 = vpop.f32.mrb[0].mxu0
    %764 = vdwg.mxu0
    %v765 = vadd.f32 %v692, %v762
    %v766 = vxor.u32 %v765, 2147483648
    %v767 = vmul.f32 %v766, 1.442695
    %v768 = vpow.pop %v767
    %v769 = vadd.f32 %v768, 1.0
    %v770 = vrcp.pop %v769
    %v771 = vmul.f32 1.0, %v770
    %773 = vrot.lane.b32.xlu0 %v762, 64
    %v774 = vpop.permute.xlu0 %773
    %v776 = vmul.f32 %v771, %v774
    %778 = vrot.lane.b32.xlu0 %v776, 64
    %v779 = vpop.permute.xlu0 %778
    %v781 = vadd.f32 %v692, %v779
    %v782 = vtanh.pop %v781
    %v783 = vsub.f32 %v576, %v782
    %785 = vrot.lane.b32.xlu0 %v783, 96
    %v786 = vpop.permute.xlu0 %785
    %v788 = vmul.f32 %v771, %v786
    %790 = vrot.lane.b32.xlu0 %v788, 32
    %v791 = vpop.permute.xlu0 %790
    %v793 = vadd.f32 %v782, %v791
    %795 = vrot.lane.b32.xlu0 %v690, 64
    %v796 = vpop.permute.xlu0 %795
    %s798 = scalar_lea.vmem [#allocation2], 8
    %799 = vst.msk [vmem:[%s798] sm:$0xff] %vm132, %v796
    %801 = vrot.lane.b32.xlu0 %v793, 64
    %v802 = vpop.permute.xlu0 %801
    %s804 = scalar_lea.vmem [#allocation3], 48
    %805 = vst.msk [vmem:[%s804] sm:$0xff] %vm132, %v802
    %s806 = scalar_lea.vmem [#allocation4], 16
    %v807 = vld [vmem:[%s806] sm:$0xff]
    %v808 = vsel %vm132, %v796, 0
    %810 = vmatprep.subr.mxu0 0.0
    %811 = vmatpush1.msra.mxu0 %v351
    %812 = vmatprep.subr.mxu0 0.0
    %813 = vmatpush1.msra.mxu0 %v352
    %814 = vmatprep.subr.mxu0 0.0
    %815 = vmatpush1.msra.mxu0 %v353
    %816 = vmatprep.subr.mxu0 0.0
    %817 = vmatpush1.msra.mxu0 %v354
    %818 = vmatprep.subr.mxu0 0.0
    %819 = vmatpush1.msra.mxu0 0.0
    %820 = vmatprep.subr.mxu0 0.0
    %821 = vmatpush1.msra.mxu0 0.0
    %822 = vmatprep.subr.mxu0 0.0
    %823 = vmatpush1.msra.mxu0 0.0
    %824 = vmatprep.subr.mxu0 0.0
    %825 = vmatpush1.msra.mxu0 0.0
    %826 = vmatprep.subr.mxu0 0.0
    %827 = vmatpush1.msra.mxu0 0.0
    %828 = vmatprep.subr.mxu0 0.0
    %829 = vmatpush1.msra.mxu0 0.0
    %830 = vmatprep.subr.mxu0 0.0
    %831 = vmatpush1.msra.mxu0 0.0
    %832 = vmatprep.subr.mxu0 0.0
    %833 = vmatpush1.msra.mxu0 0.0
    %834 = vmatprep.subr.mxu0 0.0
    %835 = vmatpush1.msra.mxu0 0.0
    %836 = vmatprep.subr.mxu0 0.0
    %837 = vmatpush1.msra.mxu0 0.0
    %838 = vmatprep.subr.mxu0 0.0
    %839 = vmatpush1.msra.mxu0 0.0
    %840 = vmatprep.subr.mxu0 0.0
    %841 = vmatpush1.msra.mxu0 0.0
    %842 = vmatprep.subr.mxu0 0.0
    %843 = vmatpush1.msra.mxu0 0.0
    %844 = vmatprep.subr.mxu0 0.0
    %845 = vmatpush1.msra.mxu0 0.0
    %846 = vmatprep.subr.mxu0 0.0
    %847 = vmatpush1.msra.mxu0 0.0
    %848 = vmatprep.subr.mxu0 0.0
    %849 = vmatpush1.msra.mxu0 0.0
    %850 = vmatprep.subr.mxu0 0.0
    %851 = vmatpush1.msra.mxu0 0.0
    %852 = vmatprep.subr.mxu0 0.0
    %853 = vmatpush1.msra.mxu0 0.0
    %854 = vmatprep.subr.mxu0 0.0
    %855 = vmatpush1.msra.mxu0 0.0
    %856 = vmatprep.subr.mxu0 0.0
    %857 = vmatpush1.msra.mxu0 0.0
    %858 = vmatprep.subr.mxu0 0.0
    %859 = vmatpush1.msra.mxu0 0.0
    %860 = vmatprep.subr.mxu0 0.0
    %861 = vmatpush1.msra.mxu0 0.0
    %862 = vmatprep.subr.mxu0 0.0
    %863 = vmatpush1.msra.mxu0 0.0
    %864 = vmatprep.subr.mxu0 0.0
    %865 = vmatpush1.msra.mxu0 0.0
    %866 = vmatprep.subr.mxu0 0.0
    %867 = vmatpush1.msra.mxu0 0.0
    %868 = vmatprep.subr.mxu0 0.0
    %869 = vmatpush1.msra.mxu0 0.0
    %870 = vmatprep.subr.mxu0 0.0
    %871 = vmatpush1.msra.mxu0 0.0
    %872 = vmatprep.subr.mxu0 0.0
    %873 = vmatpush1.msra.mxu0 0.0
    %874 = vmatprep.mubr.f32.mxu0 0.0
    %875 = vmatmul.mubr.f32.gmra.mrb[0].mxu0 %v808
    %v876 = vpop.f32.mrb[0].mxu0
    %v877 = vadd.f32 %v364, %v876
    %v878 = vpop.f32.mrb[0].mxu0
    %879 = vdwg.mxu0
    %v880 = vadd.f32 %v807, %v877
    %v881 = vxor.u32 %v880, 2147483648
    %v882 = vmul.f32 %v881, 1.442695
    %v883 = vpow.pop %v882
    %v884 = vadd.f32 %v883, 1.0
    %v885 = vrcp.pop %v884
    %v886 = vmul.f32 1.0, %v885
    %888 = vrot.lane.b32.xlu0 %v877, 64
    %v889 = vpop.permute.xlu0 %888
    %v891 = vmul.f32 %v886, %v889
    %893 = vrot.lane.b32.xlu0 %v891, 64
    %v894 = vpop.permute.xlu0 %893
    %v896 = vadd.f32 %v807, %v894
    %v897 = vtanh.pop %v896
    %v898 = vsub.f32 %v690, %v897
    %900 = vrot.lane.b32.xlu0 %v898, 96
    %v901 = vpop.permute.xlu0 %900
    %v903 = vmul.f32 %v886, %v901
    %905 = vrot.lane.b32.xlu0 %v903, 32
    %v906 = vpop.permute.xlu0 %905
    %v908 = vadd.f32 %v897, %v906
    %s909 = scalar_lea.vmem [#allocation5], 40
    %v910 = vld [vmem:[%s909] sm:$0xff]
    %v911 = vsel %vm132, %v802, 0
    %913 = vmatprep.subr.mxu0 0.0
    %914 = vmatpush1.msra.mxu0 %v355
    %915 = vmatprep.subr.mxu0 0.0
    %916 = vmatpush1.msra.mxu0 %v356
    %917 = vmatprep.subr.mxu0 0.0
    %918 = vmatpush1.msra.mxu0 %v357
    %919 = vmatprep.subr.mxu0 0.0
    %920 = vmatpush1.msra.mxu0 %v358
    %921 = vmatprep.subr.mxu0 0.0
    %922 = vmatpush1.msra.mxu0 0.0
    %923 = vmatprep.subr.mxu0 0.0
    %924 = vmatpush1.msra.mxu0 0.0
    %925 = vmatprep.subr.mxu0 0.0
    %926 = vmatpush1.msra.mxu0 0.0
    %927 = vmatprep.subr.mxu0 0.0
    %928 = vmatpush1.msra.mxu0 0.0
    %929 = vmatprep.subr.mxu0 0.0
    %930 = vmatpush1.msra.mxu0 0.0
    %931 = vmatprep.subr.mxu0 0.0
    %932 = vmatpush1.msra.mxu0 0.0
    %933 = vmatprep.subr.mxu0 0.0
    %934 = vmatpush1.msra.mxu0 0.0
    %935 = vmatprep.subr.mxu0 0.0
    %936 = vmatpush1.msra.mxu0 0.0
    %937 = vmatprep.subr.mxu0 0.0
    %938 = vmatpush1.msra.mxu0 0.0
    %939 = vmatprep.subr.mxu0 0.0
    %940 = vmatpush1.msra.mxu0 0.0
    %941 = vmatprep.subr.mxu0 0.0
    %942 = vmatpush1.msra.mxu0 0.0
    %943 = vmatprep.subr.mxu0 0.0
    %944 = vmatpush1.msra.mxu0 0.0
    %945 = vmatprep.subr.mxu0 0.0
    %946 = vmatpush1.msra.mxu0 0.0
    %947 = vmatprep.subr.mxu0 0.0
    %948 = vmatpush1.msra.mxu0 0.0
    %949 = vmatprep.subr.mxu0 0.0
    %950 = vmatpush1.msra.mxu0 0.0
    %951 = vmatprep.subr.mxu0 0.0
    %952 = vmatpush1.msra.mxu0 0.0
    %953 = vmatprep.subr.mxu0 0.0
    %954 = vmatpush1.msra.mxu0 0.0
    %955 = vmatprep.subr.mxu0 0.0
    %956 = vmatpush1.msra.mxu0 0.0
    %957 = vmatprep.subr.mxu0 0.0
    %958 = vmatpush1.msra.mxu0 0.0
    %959 = vmatprep.subr.mxu0 0.0
    %960 = vmatpush1.msra.mxu0 0.0
    %961 = vmatprep.subr.mxu0 0.0
    %962 = vmatpush1.msra.mxu0 0.0
    %963 = vmatprep.subr.mxu0 0.0
    %964 = vmatpush1.msra.mxu0 0.0
    %965 = vmatprep.subr.mxu0 0.0
    %966 = vmatpush1.msra.mxu0 0.0
    %967 = vmatprep.subr.mxu0 0.0
    %968 = vmatpush1.msra.mxu0 0.0
    %969 = vmatprep.subr.mxu0 0.0
    %970 = vmatpush1.msra.mxu0 0.0
    %971 = vmatprep.subr.mxu0 0.0
    %972 = vmatpush1.msra.mxu0 0.0
    %973 = vmatprep.subr.mxu0 0.0
    %974 = vmatpush1.msra.mxu0 0.0
    %975 = vmatprep.subr.mxu0 0.0
    %976 = vmatpush1.msra.mxu0 0.0
    %977 = vmatprep.mubr.f32.mxu0 0.0
    %978 = vmatmul.mubr.f32.gmra.mrb[0].mxu0 %v911
    %v979 = vpop.f32.mrb[0].mxu0
    %v980 = vadd.f32 %v371, %v979
    %v981 = vpop.f32.mrb[0].mxu0
    %982 = vdwg.mxu0
    %v983 = vadd.f32 %v910, %v980
    %v984 = vxor.u32 %v983, 2147483648
    %v985 = vmul.f32 %v984, 1.442695
    %v986 = vpow.pop %v985
    %v987 = vadd.f32 %v986, 1.0
    %v988 = vrcp.pop %v987
    %v989 = vmul.f32 1.0, %v988
    %991 = vrot.lane.b32.xlu0 %v980, 64
    %v992 = vpop.permute.xlu0 %991
    %v994 = vmul.f32 %v989, %v992
    %996 = vrot.lane.b32.xlu0 %v994, 64
    %v997 = vpop.permute.xlu0 %996
    %v999 = vadd.f32 %v910, %v997
    %v1000 = vtanh.pop %v999
    %v1001 = vsub.f32 %v793, %v1000
    %1003 = vrot.lane.b32.xlu0 %v1001, 96
    %v1004 = vpop.permute.xlu0 %1003
    %v1006 = vmul.f32 %v989, %v1004
    %1008 = vrot.lane.b32.xlu0 %v1006, 32
    %v1009 = vpop.permute.xlu0 %1008
    %v1011 = vadd.f32 %v1000, %v1009
    %1013 = vrot.lane.b32.xlu0 %v908, 64
    %v1014 = vpop.permute.xlu0 %1013
    %s1016 = scalar_lea.vmem [#allocation2], 16
    %1017 = vst.msk [vmem:[%s1016] sm:$0xff] %vm132, %v1014
    %1019 = vrot.lane.b32.xlu0 %v1011, 64
    %v1020 = vpop.permute.xlu0 %1019
    %s1022 = scalar_lea.vmem [#allocation3], 40
    %1023 = vst.msk [vmem:[%s1022] sm:$0xff] %vm132, %v1020
    %s1024 = scalar_lea.vmem [#allocation4], 24
    %v1025 = vld [vmem:[%s1024] sm:$0xff]
    %v1026 = vsel %vm132, %v1014, 0
    %1028 = vmatprep.subr.mxu0 0.0
    %1029 = vmatpush1.msra.mxu0 %v351
    %1030 = vmatprep.subr.mxu0 0.0
    %1031 = vmatpush1.msra.mxu0 %v352
    %1032 = vmatprep.subr.mxu0 0.0
    %1033 = vmatpush1.msra.mxu0 %v353
    %1034 = vmatprep.subr.mxu0 0.0
    %1035 = vmatpush1.msra.mxu0 %v354
    %1036 = vmatprep.subr.mxu0 0.0
    %1037 = vmatpush1.msra.mxu0 0.0
    %1038 = vmatprep.subr.mxu0 0.0
    %1039 = vmatpush1.msra.mxu0 0.0
    %1040 = vmatprep.subr.mxu0 0.0
    %1041 = vmatpush1.msra.mxu0 0.0
    %1042 = vmatprep.subr.mxu0 0.0
    %1043 = vmatpush1.msra.mxu0 0.0
    %1044 = vmatprep.subr.mxu0 0.0
    %1045 = vmatpush1.msra.mxu0 0.0
    %1046 = vmatprep.subr.mxu0 0.0
    %1047 = vmatpush1.msra.mxu0 0.0
    %1048 = vmatprep.subr.mxu0 0.0
    %1049 = vmatpush1.msra.mxu0 0.0
    %1050 = vmatprep.subr.mxu0 0.0
    %1051 = vmatpush1.msra.mxu0 0.0
    %1052 = vmatprep.subr.mxu0 0.0
    %1053 = vmatpush1.msra.mxu0 0.0
    %1054 = vmatprep.subr.mxu0 0.0
    %1055 = vmatpush1.msra.mxu0 0.0
    %1056 = vmatprep.subr.mxu0 0.0
    %1057 = vmatpush1.msra.mxu0 0.0
    %1058 = vmatprep.subr.mxu0 0.0
    %1059 = vmatpush1.msra.mxu0 0.0
    %1060 = vmatprep.subr.mxu0 0.0
    %1061 = vmatpush1.msra.mxu0 0.0
    %1062 = vmatprep.subr.mxu0 0.0
    %1063 = vmatpush1.msra.mxu0 0.0
    %1064 = vmatprep.subr.mxu0 0.0
    %1065 = vmatpush1.msra.mxu0 0.0
    %1066 = vmatprep.subr.mxu0 0.0
    %1067 = vmatpush1.msra.mxu0 0.0
    %1068 = vmatprep.subr.mxu0 0.0
    %1069 = vmatpush1.msra.mxu0 0.0
    %1070 = vmatprep.subr.mxu0 0.0
    %1071 = vmatpush1.msra.mxu0 0.0
    %1072 = vmatprep.subr.mxu0 0.0
    %1073 = vmatpush1.msra.mxu0 0.0
    %1074 = vmatprep.subr.mxu0 0.0
    %1075 = vmatpush1.msra.mxu0 0.0
    %1076 = vmatprep.subr.mxu0 0.0
    %1077 = vmatpush1.msra.mxu0 0.0
    %1078 = vmatprep.subr.mxu0 0.0
    %1079 = vmatpush1.msra.mxu0 0.0
    %1080 = vmatprep.subr.mxu0 0.0
    %1081 = vmatpush1.msra.mxu0 0.0
    %1082 = vmatprep.subr.mxu0 0.0
    %1083 = vmatpush1.msra.mxu0 0.0
    %1084 = vmatprep.subr.mxu0 0.0
    %1085 = vmatpush1.msra.mxu0 0.0
    %1086 = vmatprep.subr.mxu0 0.0
    %1087 = vmatpush1.msra.mxu0 0.0
    %1088 = vmatprep.subr.mxu0 0.0
    %1089 = vmatpush1.msra.mxu0 0.0
    %1090 = vmatprep.subr.mxu0 0.0
    %1091 = vmatpush1.msra.mxu0 0.0
    %1092 = vmatprep.mubr.f32.mxu0 0.0
    %1093 = vmatmul.mubr.f32.gmra.mrb[0].mxu0 %v1026
    %v1094 = vpop.f32.mrb[0].mxu0
    %v1095 = vadd.f32 %v364, %v1094
    %v1096 = vpop.f32.mrb[0].mxu0
    %1097 = vdwg.mxu0
    %v1098 = vadd.f32 %v1025, %v1095
    %v1099 = vxor.u32 %v1098, 2147483648
    %v1100 = vmul.f32 %v1099, 1.442695
    %v1101 = vpow.pop %v1100
    %v1102 = vadd.f32 %v1101, 1.0
    %v1103 = vrcp.pop %v1102
    %v1104 = vmul.f32 1.0, %v1103
    %1106 = vrot.lane.b32.xlu0 %v1095, 64
    %v1107 = vpop.permute.xlu0 %1106
    %v1109 = vmul.f32 %v1104, %v1107
    %1111 = vrot.lane.b32.xlu0 %v1109, 64
    %v1112 = vpop.permute.xlu0 %1111
    %v1114 = vadd.f32 %v1025, %v1112
    %v1115 = vtanh.pop %v1114
    %v1116 = vsub.f32 %v908, %v1115
    %1118 = vrot.lane.b32.xlu0 %v1116, 96
    %v1119 = vpop.permute.xlu0 %1118
    %v1121 = vmul.f32 %v1104, %v1119
    %1123 = vrot.lane.b32.xlu0 %v1121, 32
    %v1124 = vpop.permute.xlu0 %1123
    %v1126 = vadd.f32 %v1115, %v1124
    %s1127 = scalar_lea.vmem [#allocation5], 32
    %v1128 = vld [vmem:[%s1127] sm:$0xff]
    %v1129 = vsel %vm132, %v1020, 0
    %1131 = vmatprep.subr.mxu0 0.0
    %1132 = vmatpush1.msra.mxu0 %v355
    %1133 = vmatprep.subr.mxu0 0.0
    %1134 = vmatpush1.msra.mxu0 %v356
    %1135 = vmatprep.subr.mxu0 0.0
    %1136 = vmatpush1.msra.mxu0 %v357
    %1137 = vmatprep.subr.mxu0 0.0
    %1138 = vmatpush1.msra.mxu0 %v358
    %1139 = vmatprep.subr.mxu0 0.0
    %1140 = vmatpush1.msra.mxu0 0.0
    %1141 = vmatprep.subr.mxu0 0.0
    %1142 = vmatpush1.msra.mxu0 0.0
    %1143 = vmatprep.subr.mxu0 0.0
    %1144 = vmatpush1.msra.mxu0 0.0
    %1145 = vmatprep.subr.mxu0 0.0
    %1146 = vmatpush1.msra.mxu0 0.0
    %1147 = vmatprep.subr.mxu0 0.0
    %1148 = vmatpush1.msra.mxu0 0.0
    %1149 = vmatprep.subr.mxu0 0.0
    %1150 = vmatpush1.msra.mxu0 0.0
    %1151 = vmatprep.subr.mxu0 0.0
    %1152 = vmatpush1.msra.mxu0 0.0
    %1153 = vmatprep.subr.mxu0 0.0
    %1154 = vmatpush1.msra.mxu0 0.0
    %1155 = vmatprep.subr.mxu0 0.0
    %1156 = vmatpush1.msra.mxu0 0.0
    %1157 = vmatprep.subr.mxu0 0.0
    %1158 = vmatpush1.msra.mxu0 0.0
    %1159 = vmatprep.subr.mxu0 0.0
    %1160 = vmatpush1.msra.mxu0 0.0
    %1161 = vmatprep.subr.mxu0 0.0
    %1162 = vmatpush1.msra.mxu0 0.0
    %1163 = vmatprep.subr.mxu0 0.0
    %1164 = vmatpush1.msra.mxu0 0.0
    %1165 = vmatprep.subr.mxu0 0.0
    %1166 = vmatpush1.msra.mxu0 0.0
    %1167 = vmatprep.subr.mxu0 0.0
    %1168 = vmatpush1.msra.mxu0 0.0
    %1169 = vmatprep.subr.mxu0 0.0
    %1170 = vmatpush1.msra.mxu0 0.0
    %1171 = vmatprep.subr.mxu0 0.0
    %1172 = vmatpush1.msra.mxu0 0.0
    %1173 = vmatprep.subr.mxu0 0.0
    %1174 = vmatpush1.msra.mxu0 0.0
    %1175 = vmatprep.subr.mxu0 0.0
    %1176 = vmatpush1.msra.mxu0 0.0
    %1177 = vmatprep.subr.mxu0 0.0
    %1178 = vmatpush1.msra.mxu0 0.0
    %1179 = vmatprep.subr.mxu0 0.0
    %1180 = vmatpush1.msra.mxu0 0.0
    %1181 = vmatprep.subr.mxu0 0.0
    %1182 = vmatpush1.msra.mxu0 0.0
    %1183 = vmatprep.subr.mxu0 0.0
    %1184 = vmatpush1.msra.mxu0 0.0
    %1185 = vmatprep.subr.mxu0 0.0
    %1186 = vmatpush1.msra.mxu0 0.0
    %1187 = vmatprep.subr.mxu0 0.0
    %1188 = vmatpush1.msra.mxu0 0.0
    %1189 = vmatprep.subr.mxu0 0.0
    %1190 = vmatpush1.msra.mxu0 0.0
    %1191 = vmatprep.subr.mxu0 0.0
    %1192 = vmatpush1.msra.mxu0 0.0
    %1193 = vmatprep.subr.mxu0 0.0
    %1194 = vmatpush1.msra.mxu0 0.0
    %1195 = vmatprep.mubr.f32.mxu0 0.0
    %1196 = vmatmul.mubr.f32.gmra.mrb[0].mxu0 %v1129
    %v1197 = vpop.f32.mrb[0].mxu0
    %v1198 = vadd.f32 %v371, %v1197
    %v1199 = vpop.f32.mrb[0].mxu0
    %1200 = vdwg.mxu0
    %v1201 = vadd.f32 %v1128, %v1198
    %v1202 = vxor.u32 %v1201, 2147483648
    %v1203 = vmul.f32 %v1202, 1.442695
    %v1204 = vpow.pop %v1203
    %v1205 = vadd.f32 %v1204, 1.0
    %v1206 = vrcp.pop %v1205
    %v1207 = vmul.f32 1.0, %v1206
    %1209 = vrot.lane.b32.xlu0 %v1198, 64
    %v1210 = vpop.permute.xlu0 %1209
    %v1212 = vmul.f32 %v1207, %v1210
    %1214 = vrot.lane.b32.xlu0 %v1212, 64
    %v1215 = vpop.permute.xlu0 %1214
    %v1217 = vadd.f32 %v1128, %v1215
    %v1218 = vtanh.pop %v1217
    %v1219 = vsub.f32 %v1011, %v1218
    %1221 = vrot.lane.b32.xlu0 %v1219, 96
    %v1222 = vpop.permute.xlu0 %1221
    %v1224 = vmul.f32 %v1207, %v1222
    %1226 = vrot.lane.b32.xlu0 %v1224, 32
    %v1227 = vpop.permute.xlu0 %1226
    %v1229 = vadd.f32 %v1218, %v1227
    %1231 = vrot.lane.b32.xlu0 %v1126, 64
    %v1232 = vpop.permute.xlu0 %1231
    %s1234 = scalar_lea.vmem [#allocation2], 24
    %1235 = vst.msk [vmem:[%s1234] sm:$0xff] %vm132, %v1232
    %1237 = vrot.lane.b32.xlu0 %v1229, 64
    %v1238 = vpop.permute.xlu0 %1237
    %s1240 = scalar_lea.vmem [#allocation3], 32
    %1241 = vst.msk [vmem:[%s1240] sm:$0xff] %vm132, %v1238
    %s1242 = scalar_lea.vmem [#allocation4], 32
    %v1243 = vld [vmem:[%s1242] sm:$0xff]
    %v1244 = vsel %vm132, %v1232, 0
    %1246 = vmatprep.subr.mxu0 0.0
    %1247 = vmatpush1.msra.mxu0 %v351
    %1248 = vmatprep.subr.mxu0 0.0
    %1249 = vmatpush1.msra.mxu0 %v352
    %1250 = vmatprep.subr.mxu0 0.0
    %1251 = vmatpush1.msra.mxu0 %v353
    %1252 = vmatprep.subr.mxu0 0.0
    %1253 = vmatpush1.msra.mxu0 %v354
    %1254 = vmatprep.subr.mxu0 0.0
    %1255 = vmatpush1.msra.mxu0 0.0
    %1256 = vmatprep.subr.mxu0 0.0
    %1257 = vmatpush1.msra.mxu0 0.0
    %1258 = vmatprep.subr.mxu0 0.0
    %1259 = vmatpush1.msra.mxu0 0.0
    %1260 = vmatprep.subr.mxu0 0.0
    %1261 = vmatpush1.msra.mxu0 0.0
    %1262 = vmatprep.subr.mxu0 0.0
    %1263 = vmatpush1.msra.mxu0 0.0
    %1264 = vmatprep.subr.mxu0 0.0
    %1265 = vmatpush1.msra.mxu0 0.0
    %1266 = vmatprep.subr.mxu0 0.0
    %1267 = vmatpush1.msra.mxu0 0.0
    %1268 = vmatprep.subr.mxu0 0.0
    %1269 = vmatpush1.msra.mxu0 0.0
    %1270 = vmatprep.subr.mxu0 0.0
    %1271 = vmatpush1.msra.mxu0 0.0
    %1272 = vmatprep.subr.mxu0 0.0
    %1273 = vmatpush1.msra.mxu0 0.0
    %1274 = vmatprep.subr.mxu0 0.0
    %1275 = vmatpush1.msra.mxu0 0.0
    %1276 = vmatprep.subr.mxu0 0.0
    %1277 = vmatpush1.msra.mxu0 0.0
    %1278 = vmatprep.subr.mxu0 0.0
    %1279 = vmatpush1.msra.mxu0 0.0
    %1280 = vmatprep.subr.mxu0 0.0
    %1281 = vmatpush1.msra.mxu0 0.0
    %1282 = vmatprep.subr.mxu0 0.0
    %1283 = vmatpush1.msra.mxu0 0.0
    %1284 = vmatprep.subr.mxu0 0.0
    %1285 = vmatpush1.msra.mxu0 0.0
    %1286 = vmatprep.subr.mxu0 0.0
    %1287 = vmatpush1.msra.mxu0 0.0
    %1288 = vmatprep.subr.mxu0 0.0
    %1289 = vmatpush1.msra.mxu0 0.0
    %1290 = vmatprep.subr.mxu0 0.0
    %1291 = vmatpush1.msra.mxu0 0.0
    %1292 = vmatprep.subr.mxu0 0.0
    %1293 = vmatpush1.msra.mxu0 0.0
    %1294 = vmatprep.subr.mxu0 0.0
    %1295 = vmatpush1.msra.mxu0 0.0
    %1296 = vmatprep.subr.mxu0 0.0
    %1297 = vmatpush1.msra.mxu0 0.0
    %1298 = vmatprep.subr.mxu0 0.0
    %1299 = vmatpush1.msra.mxu0 0.0
    %1300 = vmatprep.subr.mxu0 0.0
    %1301 = vmatpush1.msra.mxu0 0.0
    %1302 = vmatprep.subr.mxu0 0.0
    %1303 = vmatpush1.msra.mxu0 0.0
    %1304 = vmatprep.subr.mxu0 0.0
    %1305 = vmatpush1.msra.mxu0 0.0
    %1306 = vmatprep.subr.mxu0 0.0
    %1307 = vmatpush1.msra.mxu0 0.0
    %1308 = vmatprep.subr.mxu0 0.0
    %1309 = vmatpush1.msra.mxu0 0.0
    %1310 = vmatprep.mubr.f32.mxu0 0.0
    %1311 = vmatmul.mubr.f32.gmra.mrb[0].mxu0 %v1244
    %v1312 = vpop.f32.mrb[0].mxu0
    %v1313 = vadd.f32 %v364, %v1312
    %v1314 = vpop.f32.mrb[0].mxu0
    %1315 = vdwg.mxu0
    %v1316 = vadd.f32 %v1243, %v1313
    %v1317 = vxor.u32 %v1316, 2147483648
    %v1318 = vmul.f32 %v1317, 1.442695
    %v1319 = vpow.pop %v1318
    %v1320 = vadd.f32 %v1319, 1.0
    %v1321 = vrcp.pop %v1320
    %v1322 = vmul.f32 1.0, %v1321
    %1324 = vrot.lane.b32.xlu0 %v1313, 64
    %v1325 = vpop.permute.xlu0 %1324
    %v1327 = vmul.f32 %v1322, %v1325
    %1329 = vrot.lane.b32.xlu0 %v1327, 64
    %v1330 = vpop.permute.xlu0 %1329
    %v1332 = vadd.f32 %v1243, %v1330
    %v1333 = vtanh.pop %v1332
    %v1334 = vsub.f32 %v1126, %v1333
    %1336 = vrot.lane.b32.xlu0 %v1334, 96
    %v1337 = vpop.permute.xlu0 %1336
    %v1339 = vmul.f32 %v1322, %v1337
    %1341 = vrot.lane.b32.xlu0 %v1339, 32
    %v1342 = vpop.permute.xlu0 %1341
    %v1344 = vadd.f32 %v1333, %v1342
    %s1345 = scalar_lea.vmem [#allocation5], 24
    %v1346 = vld [vmem:[%s1345] sm:$0xff]
    %v1347 = vsel %vm132, %v1238, 0
    %1349 = vmatprep.subr.mxu0 0.0
    %1350 = vmatpush1.msra.mxu0 %v355
    %1351 = vmatprep.subr.mxu0 0.0
    %1352 = vmatpush1.msra.mxu0 %v356
    %1353 = vmatprep.subr.mxu0 0.0
    %1354 = vmatpush1.msra.mxu0 %v357
    %1355 = vmatprep.subr.mxu0 0.0
    %1356 = vmatpush1.msra.mxu0 %v358
    %1357 = vmatprep.subr.mxu0 0.0
    %1358 = vmatpush1.msra.mxu0 0.0
    %1359 = vmatprep.subr.mxu0 0.0
    %1360 = vmatpush1.msra.mxu0 0.0
    %1361 = vmatprep.subr.mxu0 0.0
    %1362 = vmatpush1.msra.mxu0 0.0
    %1363 = vmatprep.subr.mxu0 0.0
    %1364 = vmatpush1.msra.mxu0 0.0
    %1365 = vmatprep.subr.mxu0 0.0
    %1366 = vmatpush1.msra.mxu0 0.0
    %1367 = vmatprep.subr.mxu0 0.0
    %1368 = vmatpush1.msra.mxu0 0.0
    %1369 = vmatprep.subr.mxu0 0.0
    %1370 = vmatpush1.msra.mxu0 0.0
    %1371 = vmatprep.subr.mxu0 0.0
    %1372 = vmatpush1.msra.mxu0 0.0
    %1373 = vmatprep.subr.mxu0 0.0
    %1374 = vmatpush1.msra.mxu0 0.0
    %1375 = vmatprep.subr.mxu0 0.0
    %1376 = vmatpush1.msra.mxu0 0.0
    %1377 = vmatprep.subr.mxu0 0.0
    %1378 = vmatpush1.msra.mxu0 0.0
    %1379 = vmatprep.subr.mxu0 0.0
    %1380 = vmatpush1.msra.mxu0 0.0
    %1381 = vmatprep.subr.mxu0 0.0
    %1382 = vmatpush1.msra.mxu0 0.0
    %1383 = vmatprep.subr.mxu0 0.0
    %1384 = vmatpush1.msra.mxu0 0.0
    %1385 = vmatprep.subr.mxu0 0.0
    %1386 = vmatpush1.msra.mxu0 0.0
    %1387 = vmatprep.subr.mxu0 0.0
    %1388 = vmatpush1.msra.mxu0 0.0
    %1389 = vmatprep.subr.mxu0 0.0
    %1390 = vmatpush1.msra.mxu0 0.0
    %1391 = vmatprep.subr.mxu0 0.0
    %1392 = vmatpush1.msra.mxu0 0.0
    %1393 = vmatprep.subr.mxu0 0.0
    %1394 = vmatpush1.msra.mxu0 0.0
    %1395 = vmatprep.subr.mxu0 0.0
    %1396 = vmatpush1.msra.mxu0 0.0
    %1397 = vmatprep.subr.mxu0 0.0
    %1398 = vmatpush1.msra.mxu0 0.0
    %1399 = vmatprep.subr.mxu0 0.0
    %1400 = vmatpush1.msra.mxu0 0.0
    %1401 = vmatprep.subr.mxu0 0.0
    %1402 = vmatpush1.msra.mxu0 0.0
    %1403 = vmatprep.subr.mxu0 0.0
    %1404 = vmatpush1.msra.mxu0 0.0
    %1405 = vmatprep.subr.mxu0 0.0
    %1406 = vmatpush1.msra.mxu0 0.0
    %1407 = vmatprep.subr.mxu0 0.0
    %1408 = vmatpush1.msra.mxu0 0.0
    %1409 = vmatprep.subr.mxu0 0.0
    %1410 = vmatpush1.msra.mxu0 0.0
    %1411 = vmatprep.subr.mxu0 0.0
    %1412 = vmatpush1.msra.mxu0 0.0
    %1413 = vmatprep.mubr.f32.mxu0 0.0
    %1414 = vmatmul.mubr.f32.gmra.mrb[0].mxu0 %v1347
    %v1415 = vpop.f32.mrb[0].mxu0
    %v1416 = vadd.f32 %v371, %v1415
    %v1417 = vpop.f32.mrb[0].mxu0
    %1418 = vdwg.mxu0
    %v1419 = vadd.f32 %v1346, %v1416
    %v1420 = vxor.u32 %v1419, 2147483648
    %v1421 = vmul.f32 %v1420, 1.442695
    %v1422 = vpow.pop %v1421
    %v1423 = vadd.f32 %v1422, 1.0
    %v1424 = vrcp.pop %v1423
    %v1425 = vmul.f32 1.0, %v1424
    %1427 = vrot.lane.b32.xlu0 %v1416, 64
    %v1428 = vpop.permute.xlu0 %1427
    %v1430 = vmul.f32 %v1425, %v1428
    %1432 = vrot.lane.b32.xlu0 %v1430, 64
    %v1433 = vpop.permute.xlu0 %1432
    %v1435 = vadd.f32 %v1346, %v1433
    %v1436 = vtanh.pop %v1435
    %v1437 = vsub.f32 %v1229, %v1436
    %1439 = vrot.lane.b32.xlu0 %v1437, 96
    %v1440 = vpop.permute.xlu0 %1439
    %v1442 = vmul.f32 %v1425, %v1440
    %1444 = vrot.lane.b32.xlu0 %v1442, 32
    %v1445 = vpop.permute.xlu0 %1444
    %v1447 = vadd.f32 %v1436, %v1445
    %1449 = vrot.lane.b32.xlu0 %v1344, 64
    %v1450 = vpop.permute.xlu0 %1449
    %s1452 = scalar_lea.vmem [#allocation2], 32
    %1453 = vst.msk [vmem:[%s1452] sm:$0xff] %vm132, %v1450
    %1455 = vrot.lane.b32.xlu0 %v1447, 64
    %v1456 = vpop.permute.xlu0 %1455
    %s1458 = scalar_lea.vmem [#allocation3], 24
    %1459 = vst.msk [vmem:[%s1458] sm:$0xff] %vm132, %v1456
    %s1460 = scalar_lea.vmem [#allocation4], 40
    %v1461 = vld [vmem:[%s1460] sm:$0xff]
    %v1462 = vsel %vm132, %v1450, 0
    %1464 = vmatprep.subr.mxu0 0.0
    %1465 = vmatpush1.msra.mxu0 %v351
    %1466 = vmatprep.subr.mxu0 0.0
    %1467 = vmatpush1.msra.mxu0 %v352
    %1468 = vmatprep.subr.mxu0 0.0
    %1469 = vmatpush1.msra.mxu0 %v353
    %1470 = vmatprep.subr.mxu0 0.0
    %1471 = vmatpush1.msra.mxu0 %v354
    %1472 = vmatprep.subr.mxu0 0.0
    %1473 = vmatpush1.msra.mxu0 0.0
    %1474 = vmatprep.subr.mxu0 0.0
    %1475 = vmatpush1.msra.mxu0 0.0
    %1476 = vmatprep.subr.mxu0 0.0
    %1477 = vmatpush1.msra.mxu0 0.0
    %1478 = vmatprep.subr.mxu0 0.0
    %1479 = vmatpush1.msra.mxu0 0.0
    %1480 = vmatprep.subr.mxu0 0.0
    %1481 = vmatpush1.msra.mxu0 0.0
    %1482 = vmatprep.subr.mxu0 0.0
    %1483 = vmatpush1.msra.mxu0 0.0
    %1484 = vmatprep.subr.mxu0 0.0
    %1485 = vmatpush1.msra.mxu0 0.0
    %1486 = vmatprep.subr.mxu0 0.0
    %1487 = vmatpush1.msra.mxu0 0.0
    %1488 = vmatprep.subr.mxu0 0.0
    %1489 = vmatpush1.msra.mxu0 0.0
    %1490 = vmatprep.subr.mxu0 0.0
    %1491 = vmatpush1.msra.mxu0 0.0
    %1492 = vmatprep.subr.mxu0 0.0
    %1493 = vmatpush1.msra.mxu0 0.0
    %1494 = vmatprep.subr.mxu0 0.0
    %1495 = vmatpush1.msra.mxu0 0.0
    %1496 = vmatprep.subr.mxu0 0.0
    %1497 = vmatpush1.msra.mxu0 0.0
    %1498 = vmatprep.subr.mxu0 0.0
    %1499 = vmatpush1.msra.mxu0 0.0
    %1500 = vmatprep.subr.mxu0 0.0
    %1501 = vmatpush1.msra.mxu0 0.0
    %1502 = vmatprep.subr.mxu0 0.0
    %1503 = vmatpush1.msra.mxu0 0.0
    %1504 = vmatprep.subr.mxu0 0.0
    %1505 = vmatpush1.msra.mxu0 0.0
    %1506 = vmatprep.subr.mxu0 0.0
    %1507 = vmatpush1.msra.mxu0 0.0
    %1508 = vmatprep.subr.mxu0 0.0
    %1509 = vmatpush1.msra.mxu0 0.0
    %1510 = vmatprep.subr.mxu0 0.0
    %1511 = vmatpush1.msra.mxu0 0.0
    %1512 = vmatprep.subr.mxu0 0.0
    %1513 = vmatpush1.msra.mxu0 0.0
    %1514 = vmatprep.subr.mxu0 0.0
    %1515 = vmatpush1.msra.mxu0 0.0
    %1516 = vmatprep.subr.mxu0 0.0
    %1517 = vmatpush1.msra.mxu0 0.0
    %1518 = vmatprep.subr.mxu0 0.0
    %1519 = vmatpush1.msra.mxu0 0.0
    %1520 = vmatprep.subr.mxu0 0.0
    %1521 = vmatpush1.msra.mxu0 0.0
    %1522 = vmatprep.subr.mxu0 0.0
    %1523 = vmatpush1.msra.mxu0 0.0
    %1524 = vmatprep.subr.mxu0 0.0
    %1525 = vmatpush1.msra.mxu0 0.0
    %1526 = vmatprep.subr.mxu0 0.0
    %1527 = vmatpush1.msra.mxu0 0.0
    %1528 = vmatprep.mubr.f32.mxu0 0.0
    %1529 = vmatmul.mubr.f32.gmra.mrb[0].mxu0 %v1462
    %v1530 = vpop.f32.mrb[0].mxu0
    %v1531 = vadd.f32 %v364, %v1530
    %v1532 = vpop.f32.mrb[0].mxu0
    %1533 = vdwg.mxu0
    %v1534 = vadd.f32 %v1461, %v1531
    %v1535 = vxor.u32 %v1534, 2147483648
    %v1536 = vmul.f32 %v1535, 1.442695
    %v1537 = vpow.pop %v1536
    %v1538 = vadd.f32 %v1537, 1.0
    %v1539 = vrcp.pop %v1538
    %v1540 = vmul.f32 1.0, %v1539
    %1542 = vrot.lane.b32.xlu0 %v1531, 64
    %v1543 = vpop.permute.xlu0 %1542
    %v1545 = vmul.f32 %v1540, %v1543
    %1547 = vrot.lane.b32.xlu0 %v1545, 64
    %v1548 = vpop.permute.xlu0 %1547
    %v1550 = vadd.f32 %v1461, %v1548
    %v1551 = vtanh.pop %v1550
    %v1552 = vsub.f32 %v1344, %v1551
    %1554 = vrot.lane.b32.xlu0 %v1552, 96
    %v1555 = vpop.permute.xlu0 %1554
    %v1557 = vmul.f32 %v1540, %v1555
    %1559 = vrot.lane.b32.xlu0 %v1557, 32
    %v1560 = vpop.permute.xlu0 %1559
    %v1562 = vadd.f32 %v1551, %v1560
    %s1563 = scalar_lea.vmem [#allocation5], 16
    %v1564 = vld [vmem:[%s1563] sm:$0xff]
    %v1565 = vsel %vm132, %v1456, 0
    %1567 = vmatprep.subr.mxu0 0.0
    %1568 = vmatpush1.msra.mxu0 %v355
    %1569 = vmatprep.subr.mxu0 0.0
    %1570 = vmatpush1.msra.mxu0 %v356
    %1571 = vmatprep.subr.mxu0 0.0
    %1572 = vmatpush1.msra.mxu0 %v357
    %1573 = vmatprep.subr.mxu0 0.0
    %1574 = vmatpush1.msra.mxu0 %v358
    %1575 = vmatprep.subr.mxu0 0.0
    %1576 = vmatpush1.msra.mxu0 0.0
    %1577 = vmatprep.subr.mxu0 0.0
    %1578 = vmatpush1.msra.mxu0 0.0
    %1579 = vmatprep.subr.mxu0 0.0
    %1580 = vmatpush1.msra.mxu0 0.0
    %1581 = vmatprep.subr.mxu0 0.0
    %1582 = vmatpush1.msra.mxu0 0.0
    %1583 = vmatprep.subr.mxu0 0.0
    %1584 = vmatpush1.msra.mxu0 0.0
    %1585 = vmatprep.subr.mxu0 0.0
    %1586 = vmatpush1.msra.mxu0 0.0
    %1587 = vmatprep.subr.mxu0 0.0
    %1588 = vmatpush1.msra.mxu0 0.0
    %1589 = vmatprep.subr.mxu0 0.0
    %1590 = vmatpush1.msra.mxu0 0.0
    %1591 = vmatprep.subr.mxu0 0.0
    %1592 = vmatpush1.msra.mxu0 0.0
    %1593 = vmatprep.subr.mxu0 0.0
    %1594 = vmatpush1.msra.mxu0 0.0
    %1595 = vmatprep.subr.mxu0 0.0
    %1596 = vmatpush1.msra.mxu0 0.0
    %1597 = vmatprep.subr.mxu0 0.0
    %1598 = vmatpush1.msra.mxu0 0.0
    %1599 = vmatprep.subr.mxu0 0.0
    %1600 = vmatpush1.msra.mxu0 0.0
    %1601 = vmatprep.subr.mxu0 0.0
    %1602 = vmatpush1.msra.mxu0 0.0
    %1603 = vmatprep.subr.mxu0 0.0
    %1604 = vmatpush1.msra.mxu0 0.0
    %1605 = vmatprep.subr.mxu0 0.0
    %1606 = vmatpush1.msra.mxu0 0.0
    %1607 = vmatprep.subr.mxu0 0.0
    %1608 = vmatpush1.msra.mxu0 0.0
    %1609 = vmatprep.subr.mxu0 0.0
    %1610 = vmatpush1.msra.mxu0 0.0
    %1611 = vmatprep.subr.mxu0 0.0
    %1612 = vmatpush1.msra.mxu0 0.0
    %1613 = vmatprep.subr.mxu0 0.0
    %1614 = vmatpush1.msra.mxu0 0.0
    %1615 = vmatprep.subr.mxu0 0.0
    %1616 = vmatpush1.msra.mxu0 0.0
    %1617 = vmatprep.subr.mxu0 0.0
    %1618 = vmatpush1.msra.mxu0 0.0
    %1619 = vmatprep.subr.mxu0 0.0
    %1620 = vmatpush1.msra.mxu0 0.0
    %1621 = vmatprep.subr.mxu0 0.0
    %1622 = vmatpush1.msra.mxu0 0.0
    %1623 = vmatprep.subr.mxu0 0.0
    %1624 = vmatpush1.msra.mxu0 0.0
    %1625 = vmatprep.subr.mxu0 0.0
    %1626 = vmatpush1.msra.mxu0 0.0
    %1627 = vmatprep.subr.mxu0 0.0
    %1628 = vmatpush1.msra.mxu0 0.0
    %1629 = vmatprep.subr.mxu0 0.0
    %1630 = vmatpush1.msra.mxu0 0.0
    %1631 = vmatprep.mubr.f32.mxu0 0.0
    %1632 = vmatmul.mubr.f32.gmra.mrb[0].mxu0 %v1565
    %v1633 = vpop.f32.mrb[0].mxu0
    %v1634 = vadd.f32 %v371, %v1633
    %v1635 = vpop.f32.mrb[0].mxu0
    %1636 = vdwg.mxu0
    %v1637 = vadd.f32 %v1564, %v1634
    %v1638 = vxor.u32 %v1637, 2147483648
    %v1639 = vmul.f32 %v1638, 1.442695
    %v1640 = vpow.pop %v1639
    %v1641 = vadd.f32 %v1640, 1.0
    %v1642 = vrcp.pop %v1641
    %v1643 = vmul.f32 1.0, %v1642
    %1645 = vrot.lane.b32.xlu0 %v1634, 64
    %v1646 = vpop.permute.xlu0 %1645
    %v1648 = vmul.f32 %v1643, %v1646
    %1650 = vrot.lane.b32.xlu0 %v1648, 64
    %v1651 = vpop.permute.xlu0 %1650
    %v1653 = vadd.f32 %v1564, %v1651
    %v1654 = vtanh.pop %v1653
    %v1655 = vsub.f32 %v1447, %v1654
    %1657 = vrot.lane.b32.xlu0 %v1655, 96
    %v1658 = vpop.permute.xlu0 %1657
    %v1660 = vmul.f32 %v1643, %v1658
    %1662 = vrot.lane.b32.xlu0 %v1660, 32
    %v1663 = vpop.permute.xlu0 %1662
    %v1665 = vadd.f32 %v1654, %v1663
    %1667 = vrot.lane.b32.xlu0 %v1562, 64
    %v1668 = vpop.permute.xlu0 %1667
    %s1670 = scalar_lea.vmem [#allocation2], 40
    %1671 = vst.msk [vmem:[%s1670] sm:$0xff] %vm132, %v1668
    %1673 = vrot.lane.b32.xlu0 %v1665, 64
    %v1674 = vpop.permute.xlu0 %1673
    %s1676 = scalar_lea.vmem [#allocation3], 16
    %1677 = vst.msk [vmem:[%s1676] sm:$0xff] %vm132, %v1674
    %s1678 = scalar_lea.vmem [#allocation4], 48
    %v1679 = vld [vmem:[%s1678] sm:$0xff]
    %v1680 = vsel %vm132, %v1668, 0
    %1682 = vmatprep.subr.mxu0 0.0
    %1683 = vmatpush1.msra.mxu0 %v351
    %1684 = vmatprep.subr.mxu0 0.0
    %1685 = vmatpush1.msra.mxu0 %v352
    %1686 = vmatprep.subr.mxu0 0.0
    %1687 = vmatpush1.msra.mxu0 %v353
    %1688 = vmatprep.subr.mxu0 0.0
    %1689 = vmatpush1.msra.mxu0 %v354
    %1690 = vmatprep.subr.mxu0 0.0
    %1691 = vmatpush1.msra.mxu0 0.0
    %1692 = vmatprep.subr.mxu0 0.0
    %1693 = vmatpush1.msra.mxu0 0.0
    %1694 = vmatprep.subr.mxu0 0.0
    %1695 = vmatpush1.msra.mxu0 0.0
    %1696 = vmatprep.subr.mxu0 0.0
    %1697 = vmatpush1.msra.mxu0 0.0
    %1698 = vmatprep.subr.mxu0 0.0
    %1699 = vmatpush1.msra.mxu0 0.0
    %1700 = vmatprep.subr.mxu0 0.0
    %1701 = vmatpush1.msra.mxu0 0.0
    %1702 = vmatprep.subr.mxu0 0.0
    %1703 = vmatpush1.msra.mxu0 0.0
    %1704 = vmatprep.subr.mxu0 0.0
    %1705 = vmatpush1.msra.mxu0 0.0
    %1706 = vmatprep.subr.mxu0 0.0
    %1707 = vmatpush1.msra.mxu0 0.0
    %1708 = vmatprep.subr.mxu0 0.0
    %1709 = vmatpush1.msra.mxu0 0.0
    %1710 = vmatprep.subr.mxu0 0.0
    %1711 = vmatpush1.msra.mxu0 0.0
    %1712 = vmatprep.subr.mxu0 0.0
    %1713 = vmatpush1.msra.mxu0 0.0
    %1714 = vmatprep.subr.mxu0 0.0
    %1715 = vmatpush1.msra.mxu0 0.0
    %1716 = vmatprep.subr.mxu0 0.0
    %1717 = vmatpush1.msra.mxu0 0.0
    %1718 = vmatprep.subr.mxu0 0.0
    %1719 = vmatpush1.msra.mxu0 0.0
    %1720 = vmatprep.subr.mxu0 0.0
    %1721 = vmatpush1.msra.mxu0 0.0
    %1722 = vmatprep.subr.mxu0 0.0
    %1723 = vmatpush1.msra.mxu0 0.0
    %1724 = vmatprep.subr.mxu0 0.0
    %1725 = vmatpush1.msra.mxu0 0.0
    %1726 = vmatprep.subr.mxu0 0.0
    %1727 = vmatpush1.msra.mxu0 0.0
    %1728 = vmatprep.subr.mxu0 0.0
    %1729 = vmatpush1.msra.mxu0 0.0
    %1730 = vmatprep.subr.mxu0 0.0
    %1731 = vmatpush1.msra.mxu0 0.0
    %1732 = vmatprep.subr.mxu0 0.0
    %1733 = vmatpush1.msra.mxu0 0.0
    %1734 = vmatprep.subr.mxu0 0.0
    %1735 = vmatpush1.msra.mxu0 0.0
    %1736 = vmatprep.subr.mxu0 0.0
    %1737 = vmatpush1.msra.mxu0 0.0
    %1738 = vmatprep.subr.mxu0 0.0
    %1739 = vmatpush1.msra.mxu0 0.0
    %1740 = vmatprep.subr.mxu0 0.0
    %1741 = vmatpush1.msra.mxu0 0.0
    %1742 = vmatprep.subr.mxu0 0.0
    %1743 = vmatpush1.msra.mxu0 0.0
    %1744 = vmatprep.subr.mxu0 0.0
    %1745 = vmatpush1.msra.mxu0 0.0
    %1746 = vmatprep.mubr.f32.mxu0 0.0
    %1747 = vmatmul.mubr.f32.gmra.mrb[0].mxu0 %v1680
    %v1748 = vpop.f32.mrb[0].mxu0
    %v1749 = vadd.f32 %v364, %v1748
    %v1750 = vpop.f32.mrb[0].mxu0
    %1751 = vdwg.mxu0
    %v1752 = vadd.f32 %v1679, %v1749
    %v1753 = vxor.u32 %v1752, 2147483648
    %v1754 = vmul.f32 %v1753, 1.442695
    %v1755 = vpow.pop %v1754
    %v1756 = vadd.f32 %v1755, 1.0
    %v1757 = vrcp.pop %v1756
    %v1758 = vmul.f32 1.0, %v1757
    %1760 = vrot.lane.b32.xlu0 %v1749, 64
    %v1761 = vpop.permute.xlu0 %1760
    %v1763 = vmul.f32 %v1758, %v1761
    %1765 = vrot.lane.b32.xlu0 %v1763, 64
    %v1766 = vpop.permute.xlu0 %1765
    %v1768 = vadd.f32 %v1679, %v1766
    %v1769 = vtanh.pop %v1768
    %v1770 = vsub.f32 %v1562, %v1769
    %1772 = vrot.lane.b32.xlu0 %v1770, 96
    %v1773 = vpop.permute.xlu0 %1772
    %v1775 = vmul.f32 %v1758, %v1773
    %1777 = vrot.lane.b32.xlu0 %v1775, 32
    %v1778 = vpop.permute.xlu0 %1777
    %v1780 = vadd.f32 %v1769, %v1778
    %s1781 = scalar_lea.vmem [#allocation5], 8
    %v1782 = vld [vmem:[%s1781] sm:$0xff]
    %v1783 = vsel %vm132, %v1674, 0
    %1785 = vmatprep.subr.mxu0 0.0
    %1786 = vmatpush1.msra.mxu0 %v355
    %1787 = vmatprep.subr.mxu0 0.0
    %1788 = vmatpush1.msra.mxu0 %v356
    %1789 = vmatprep.subr.mxu0 0.0
    %1790 = vmatpush1.msra.mxu0 %v357
    %1791 = vmatprep.subr.mxu0 0.0
    %1792 = vmatpush1.msra.mxu0 %v358
    %1793 = vmatprep.subr.mxu0 0.0
    %1794 = vmatpush1.msra.mxu0 0.0
    %1795 = vmatprep.subr.mxu0 0.0
    %1796 = vmatpush1.msra.mxu0 0.0
    %1797 = vmatprep.subr.mxu0 0.0
    %1798 = vmatpush1.msra.mxu0 0.0
    %1799 = vmatprep.subr.mxu0 0.0
    %1800 = vmatpush1.msra.mxu0 0.0
    %1801 = vmatprep.subr.mxu0 0.0
    %1802 = vmatpush1.msra.mxu0 0.0
    %1803 = vmatprep.subr.mxu0 0.0
    %1804 = vmatpush1.msra.mxu0 0.0
    %1805 = vmatprep.subr.mxu0 0.0
    %1806 = vmatpush1.msra.mxu0 0.0
    %1807 = vmatprep.subr.mxu0 0.0
    %1808 = vmatpush1.msra.mxu0 0.0
    %1809 = vmatprep.subr.mxu0 0.0
    %1810 = vmatpush1.msra.mxu0 0.0
    %1811 = vmatprep.subr.mxu0 0.0
    %1812 = vmatpush1.msra.mxu0 0.0
    %1813 = vmatprep.subr.mxu0 0.0
    %1814 = vmatpush1.msra.mxu0 0.0
    %1815 = vmatprep.subr.mxu0 0.0
    %1816 = vmatpush1.msra.mxu0 0.0
    %1817 = vmatprep.subr.mxu0 0.0
    %1818 = vmatpush1.msra.mxu0 0.0
    %1819 = vmatprep.subr.mxu0 0.0
    %1820 = vmatpush1.msra.mxu0 0.0
    %1821 = vmatprep.subr.mxu0 0.0
    %1822 = vmatpush1.msra.mxu0 0.0
    %1823 = vmatprep.subr.mxu0 0.0
    %1824 = vmatpush1.msra.mxu0 0.0
    %1825 = vmatprep.subr.mxu0 0.0
    %1826 = vmatpush1.msra.mxu0 0.0
    %1827 = vmatprep.subr.mxu0 0.0
    %1828 = vmatpush1.msra.mxu0 0.0
    %1829 = vmatprep.subr.mxu0 0.0
    %1830 = vmatpush1.msra.mxu0 0.0
    %1831 = vmatprep.subr.mxu0 0.0
    %1832 = vmatpush1.msra.mxu0 0.0
    %1833 = vmatprep.subr.mxu0 0.0
    %1834 = vmatpush1.msra.mxu0 0.0
    %1835 = vmatprep.subr.mxu0 0.0
    %1836 = vmatpush1.msra.mxu0 0.0
    %1837 = vmatprep.subr.mxu0 0.0
    %1838 = vmatpush1.msra.mxu0 0.0
    %1839 = vmatprep.subr.mxu0 0.0
    %1840 = vmatpush1.msra.mxu0 0.0
    %1841 = vmatprep.subr.mxu0 0.0
    %1842 = vmatpush1.msra.mxu0 0.0
    %1843 = vmatprep.subr.mxu0 0.0
    %1844 = vmatpush1.msra.mxu0 0.0
    %1845 = vmatprep.subr.mxu0 0.0
    %1846 = vmatpush1.msra.mxu0 0.0
    %1847 = vmatprep.subr.mxu0 0.0
    %1848 = vmatpush1.msra.mxu0 0.0
    %1849 = vmatprep.mubr.f32.mxu0 0.0
    %1850 = vmatmul.mubr.f32.gmra.mrb[0].mxu0 %v1783
    %v1851 = vpop.f32.mrb[0].mxu0
    %v1852 = vadd.f32 %v371, %v1851
    %v1853 = vpop.f32.mrb[0].mxu0
    %1854 = vdwg.mxu0
    %v1855 = vadd.f32 %v1782, %v1852
    %v1856 = vxor.u32 %v1855, 2147483648
    %v1857 = vmul.f32 %v1856, 1.442695
    %v1858 = vpow.pop %v1857
    %v1859 = vadd.f32 %v1858, 1.0
    %v1860 = vrcp.pop %v1859
    %v1861 = vmul.f32 1.0, %v1860
    %1863 = vrot.lane.b32.xlu0 %v1852, 64
    %v1864 = vpop.permute.xlu0 %1863
    %v1866 = vmul.f32 %v1861, %v1864
    %1868 = vrot.lane.b32.xlu0 %v1866, 64
    %v1869 = vpop.permute.xlu0 %1868
    %v1871 = vadd.f32 %v1782, %v1869
    %v1872 = vtanh.pop %v1871
    %v1873 = vsub.f32 %v1665, %v1872
    %1875 = vrot.lane.b32.xlu0 %v1873, 96
    %v1876 = vpop.permute.xlu0 %1875
    %v1878 = vmul.f32 %v1861, %v1876
    %1880 = vrot.lane.b32.xlu0 %v1878, 32
    %v1881 = vpop.permute.xlu0 %1880
    %v1883 = vadd.f32 %v1872, %v1881
    %1885 = vrot.lane.b32.xlu0 %v1780, 64
    %v1886 = vpop.permute.xlu0 %1885
    %s1888 = scalar_lea.vmem [#allocation2], 48
    %1889 = vst.msk [vmem:[%s1888] sm:$0xff] %vm132, %v1886
    %1891 = vrot.lane.b32.xlu0 %v1883, 64
    %v1892 = vpop.permute.xlu0 %1891
    %s1894 = scalar_lea.vmem [#allocation3], 8
    %1895 = vst.msk [vmem:[%s1894] sm:$0xff] %vm132, %v1892
    %s1896 = scalar_lea.vmem [#allocation4], 56
    %v1897 = vld [vmem:[%s1896] sm:$0xff]
    %v1898 = vsel %vm132, %v1886, 0
    %1900 = vmatprep.subr.mxu0 0.0
    %1901 = vmatpush1.msra.mxu0 %v351
    %1902 = vmatprep.subr.mxu0 0.0
    %1903 = vmatpush1.msra.mxu0 %v352
    %1904 = vmatprep.subr.mxu0 0.0
    %1905 = vmatpush1.msra.mxu0 %v353
    %1906 = vmatprep.subr.mxu0 0.0
    %1907 = vmatpush1.msra.mxu0 %v354
    %1908 = vmatprep.subr.mxu0 0.0
    %1909 = vmatpush1.msra.mxu0 0.0
    %1910 = vmatprep.subr.mxu0 0.0
    %1911 = vmatpush1.msra.mxu0 0.0
    %1912 = vmatprep.subr.mxu0 0.0
    %1913 = vmatpush1.msra.mxu0 0.0
    %1914 = vmatprep.subr.mxu0 0.0
    %1915 = vmatpush1.msra.mxu0 0.0
    %1916 = vmatprep.subr.mxu0 0.0
    %1917 = vmatpush1.msra.mxu0 0.0
    %1918 = vmatprep.subr.mxu0 0.0
    %1919 = vmatpush1.msra.mxu0 0.0
    %1920 = vmatprep.subr.mxu0 0.0
    %1921 = vmatpush1.msra.mxu0 0.0
    %1922 = vmatprep.subr.mxu0 0.0
    %1923 = vmatpush1.msra.mxu0 0.0
    %1924 = vmatprep.subr.mxu0 0.0
    %1925 = vmatpush1.msra.mxu0 0.0
    %1926 = vmatprep.subr.mxu0 0.0
    %1927 = vmatpush1.msra.mxu0 0.0
    %1928 = vmatprep.subr.mxu0 0.0
    %1929 = vmatpush1.msra.mxu0 0.0
    %1930 = vmatprep.subr.mxu0 0.0
    %1931 = vmatpush1.msra.mxu0 0.0
    %1932 = vmatprep.subr.mxu0 0.0
    %1933 = vmatpush1.msra.mxu0 0.0
    %1934 = vmatprep.subr.mxu0 0.0
    %1935 = vmatpush1.msra.mxu0 0.0
    %1936 = vmatprep.subr.mxu0 0.0
    %1937 = vmatpush1.msra.mxu0 0.0
    %1938 = vmatprep.subr.mxu0 0.0
    %1939 = vmatpush1.msra.mxu0 0.0
    %1940 = vmatprep.subr.mxu0 0.0
    %1941 = vmatpush1.msra.mxu0 0.0
    %1942 = vmatprep.subr.mxu0 0.0
    %1943 = vmatpush1.msra.mxu0 0.0
    %1944 = vmatprep.subr.mxu0 0.0
    %1945 = vmatpush1.msra.mxu0 0.0
    %1946 = vmatprep.subr.mxu0 0.0
    %1947 = vmatpush1.msra.mxu0 0.0
    %1948 = vmatprep.subr.mxu0 0.0
    %1949 = vmatpush1.msra.mxu0 0.0
    %1950 = vmatprep.subr.mxu0 0.0
    %1951 = vmatpush1.msra.mxu0 0.0
    %1952 = vmatprep.subr.mxu0 0.0
    %1953 = vmatpush1.msra.mxu0 0.0
    %1954 = vmatprep.subr.mxu0 0.0
    %1955 = vmatpush1.msra.mxu0 0.0
    %1956 = vmatprep.subr.mxu0 0.0
    %1957 = vmatpush1.msra.mxu0 0.0
    %1958 = vmatprep.subr.mxu0 0.0
    %1959 = vmatpush1.msra.mxu0 0.0
    %1960 = vmatprep.subr.mxu0 0.0
    %1961 = vmatpush1.msra.mxu0 0.0
    %1962 = vmatprep.subr.mxu0 0.0
    %1963 = vmatpush1.msra.mxu0 0.0
    %1964 = vmatprep.mubr.f32.mxu0 0.0
    %1965 = vmatmul.mubr.f32.gmra.mrb[0].mxu0 %v1898
    %v1966 = vpop.f32.mrb[0].mxu0
    %v1967 = vadd.f32 %v364, %v1966
    %v1968 = vpop.f32.mrb[0].mxu0
    %1969 = vdwg.mxu0
    %v1970 = vadd.f32 %v1897, %v1967
    %v1971 = vxor.u32 %v1970, 2147483648
    %v1972 = vmul.f32 %v1971, 1.442695
    %v1973 = vpow.pop %v1972
    %v1974 = vadd.f32 %v1973, 1.0
    %v1975 = vrcp.pop %v1974
    %v1976 = vmul.f32 1.0, %v1975
    %1978 = vrot.lane.b32.xlu0 %v1967, 64
    %v1979 = vpop.permute.xlu0 %1978
    %v1981 = vmul.f32 %v1976, %v1979
    %1983 = vrot.lane.b32.xlu0 %v1981, 64
    %v1984 = vpop.permute.xlu0 %1983
    %v1986 = vadd.f32 %v1897, %v1984
    %v1987 = vtanh.pop %v1986
    %v1988 = vsub.f32 %v1780, %v1987
    %1990 = vrot.lane.b32.xlu0 %v1988, 96
    %v1991 = vpop.permute.xlu0 %1990
    %v1993 = vmul.f32 %v1976, %v1991
    %1995 = vrot.lane.b32.xlu0 %v1993, 32
    %v1996 = vpop.permute.xlu0 %1995
    %v1998 = vadd.f32 %v1987, %v1996
    %v1999 = vld [vmem:[#allocation5] sm:$0xff]
    %v2000 = vsel %vm132, %v1892, 0
    %2002 = vmatprep.subr.mxu0 0.0
    %2003 = vmatpush1.msra.mxu0 %v355
    %2004 = vmatprep.subr.mxu0 0.0
    %2005 = vmatpush1.msra.mxu0 %v356
    %2006 = vmatprep.subr.mxu0 0.0
    %2007 = vmatpush1.msra.mxu0 %v357
    %2008 = vmatprep.subr.mxu0 0.0
    %2009 = vmatpush1.msra.mxu0 %v358
    %2010 = vmatprep.subr.mxu0 0.0
    %2011 = vmatpush1.msra.mxu0 0.0
    %2012 = vmatprep.subr.mxu0 0.0
    %2013 = vmatpush1.msra.mxu0 0.0
    %2014 = vmatprep.subr.mxu0 0.0
    %2015 = vmatpush1.msra.mxu0 0.0
    %2016 = vmatprep.subr.mxu0 0.0
    %2017 = vmatpush1.msra.mxu0 0.0
    %2018 = vmatprep.subr.mxu0 0.0
    %2019 = vmatpush1.msra.mxu0 0.0
    %2020 = vmatprep.subr.mxu0 0.0
    %2021 = vmatpush1.msra.mxu0 0.0
    %2022 = vmatprep.subr.mxu0 0.0
    %2023 = vmatpush1.msra.mxu0 0.0
    %2024 = vmatprep.subr.mxu0 0.0
    %2025 = vmatpush1.msra.mxu0 0.0
    %2026 = vmatprep.subr.mxu0 0.0
    %2027 = vmatpush1.msra.mxu0 0.0
    %2028 = vmatprep.subr.mxu0 0.0
    %2029 = vmatpush1.msra.mxu0 0.0
    %2030 = vmatprep.subr.mxu0 0.0
    %2031 = vmatpush1.msra.mxu0 0.0
    %2032 = vmatprep.subr.mxu0 0.0
    %2033 = vmatpush1.msra.mxu0 0.0
    %2034 = vmatprep.subr.mxu0 0.0
    %2035 = vmatpush1.msra.mxu0 0.0
    %2036 = vmatprep.subr.mxu0 0.0
    %2037 = vmatpush1.msra.mxu0 0.0
    %2038 = vmatprep.subr.mxu0 0.0
    %2039 = vmatpush1.msra.mxu0 0.0
    %2040 = vmatprep.subr.mxu0 0.0
    %2041 = vmatpush1.msra.mxu0 0.0
    %2042 = vmatprep.subr.mxu0 0.0
    %2043 = vmatpush1.msra.mxu0 0.0
    %2044 = vmatprep.subr.mxu0 0.0
    %2045 = vmatpush1.msra.mxu0 0.0
    %2046 = vmatprep.subr.mxu0 0.0
    %2047 = vmatpush1.msra.mxu0 0.0
    %2048 = vmatprep.subr.mxu0 0.0
    %2049 = vmatpush1.msra.mxu0 0.0
    %2050 = vmatprep.subr.mxu0 0.0
    %2051 = vmatpush1.msra.mxu0 0.0
    %2052 = vmatprep.subr.mxu0 0.0
    %2053 = vmatpush1.msra.mxu0 0.0
    %2054 = vmatprep.subr.mxu0 0.0
    %2055 = vmatpush1.msra.mxu0 0.0
    %2056 = vmatprep.subr.mxu0 0.0
    %2057 = vmatpush1.msra.mxu0 0.0
    %2058 = vmatprep.subr.mxu0 0.0
    %2059 = vmatpush1.msra.mxu0 0.0
    %2060 = vmatprep.subr.mxu0 0.0
    %2061 = vmatpush1.msra.mxu0 0.0
    %2062 = vmatprep.subr.mxu0 0.0
    %2063 = vmatpush1.msra.mxu0 0.0
    %2064 = vmatprep.subr.mxu0 0.0
    %2065 = vmatpush1.msra.mxu0 0.0
    %2066 = vmatprep.mubr.f32.mxu0 0.0
    %2067 = vmatmul.mubr.f32.gmra.mrb[0].mxu0 %v2000
    %v2068 = vpop.f32.mrb[0].mxu0
    %v2069 = vadd.f32 %v371, %v2068
    %v2070 = vpop.f32.mrb[0].mxu0
    %2071 = vdwg.mxu0
    %v2072 = vadd.f32 %v1999, %v2069
    %v2073 = vxor.u32 %v2072, 2147483648
    %v2074 = vmul.f32 %v2073, 1.442695
    %v2075 = vpow.pop %v2074
    %v2076 = vadd.f32 %v2075, 1.0
    %v2077 = vrcp.pop %v2076
    %v2078 = vmul.f32 1.0, %v2077
    %2080 = vrot.lane.b32.xlu0 %v2069, 64
    %v2081 = vpop.permute.xlu0 %2080
    %v2083 = vmul.f32 %v2078, %v2081
    %2085 = vrot.lane.b32.xlu0 %v2083, 64
    %v2086 = vpop.permute.xlu0 %2085
    %v2088 = vadd.f32 %v1999, %v2086
    %v2089 = vtanh.pop %v2088
    %v2090 = vsub.f32 %v1883, %v2089
    %2092 = vrot.lane.b32.xlu0 %v2090, 96
    %v2093 = vpop.permute.xlu0 %2092
    %v2095 = vmul.f32 %v2078, %v2093
    %2097 = vrot.lane.b32.xlu0 %v2095, 32
    %v2098 = vpop.permute.xlu0 %2097
    %v2100 = vadd.f32 %v2089, %v2098
    %2102 = vrot.lane.b32.xlu0 %v1998, 64
    %v2103 = vpop.permute.xlu0 %2102
    %s2105 = scalar_lea.vmem [#allocation2], 56
    %2106 = vst.msk [vmem:[%s2105] sm:$0xff] %vm132, %v2103
    %2108 = vrot.lane.b32.xlu0 %v2100, 64
    %v2109 = vpop.permute.xlu0 %2108
    %2111 = vst.msk [vmem:[#allocation3] sm:$0xff] %vm132, %v2109
    %v2112 = vld [vmem:[#allocation2] sm:$0xff]
    %v2113 = vld [vmem:[#allocation2 + $0x8] sm:$0xff]
    %v2114 = vld [vmem:[#allocation2 + $0x10] sm:$0xff]
    %v2115 = vld [vmem:[#allocation2 + $0x18] sm:$0xff]
    %v2116 = vld [vmem:[#allocation2 + $0x20] sm:$0xff]
    %v2117 = vld [vmem:[#allocation2 + $0x28] sm:$0xff]
    %v2118 = vld [vmem:[#allocation2 + $0x30] sm:$0xff]
    %v2119 = vld [vmem:[#allocation2 + $0x38] sm:$0xff]
    %v2120 = vld [vmem:[#allocation3] sm:$0xff]
    %v2121 = vld [vmem:[#allocation3 + $0x8] sm:$0xff]
    %v2122 = vld [vmem:[#allocation3 + $0x10] sm:$0xff]
    %v2123 = vld [vmem:[#allocation3 + $0x18] sm:$0xff]
    %v2124 = vld [vmem:[#allocation3 + $0x20] sm:$0xff]
    %v2125 = vld [vmem:[#allocation3 + $0x28] sm:$0xff]
    %v2126 = vld [vmem:[#allocation3 + $0x30] sm:$0xff]
    %v2127 = vld [vmem:[#allocation3 + $0x38] sm:$0xff]
    %v2128 = vld [vmem:[#allocation14] sm:$0xff]
    %v2129 = vld [vmem:[#allocation14 + $0x8] sm:$0xff]
    %v2130 = vld [vmem:[#allocation14 + $0x10] sm:$0xff]
    %v2131 = vld [vmem:[#allocation14 + $0x18] sm:$0xff]
    %s2132 = scalar_lea.vmem [#allocation14], 32
    %v2133 = vld [vmem:[%s2132] sm:$0xff]
    %v2134 = vld [vmem:[%s2132 + $0x8] sm:$0xff]
    %v2135 = vld [vmem:[%s2132 + $0x10] sm:$0xff]
    %v2136 = vld [vmem:[%s2132 + $0x18] sm:$0xff]
    %v2138 = vsel %vm132, %v2120, 0
    %v2141 = vsel %vm132, %v2121, 0
    %v2144 = vsel %vm132, %v2122, 0
    %v2147 = vsel %vm132, %v2123, 0
    %v2150 = vsel %vm132, %v2124, 0
    %v2153 = vsel %vm132, %v2125, 0
    %v2156 = vsel %vm132, %v2126, 0
    %v2159 = vsel %vm132, %v2127, 0
    %2161 = vmatprep.subr.mxu0 0.0
    %2162 = vmatpush1.msra.mxu0 %v2133
    %2163 = vmatprep.subr.mxu0 0.0
    %2164 = vmatpush1.msra.mxu0 %v2134
    %2165 = vmatprep.subr.mxu0 0.0
    %2166 = vmatpush1.msra.mxu0 %v2135
    %2167 = vmatprep.subr.mxu0 0.0
    %2168 = vmatpush1.msra.mxu0 %v2136
    %2169 = vmatprep.subr.mxu0 0.0
    %2170 = vmatpush1.msra.mxu0 0.0
    %2171 = vmatprep.subr.mxu0 0.0
    %2172 = vmatpush1.msra.mxu0 0.0
    %2173 = vmatprep.subr.mxu0 0.0
    %2174 = vmatpush1.msra.mxu0 0.0
    %2175 = vmatprep.subr.mxu0 0.0
    %2176 = vmatpush1.msra.mxu0 0.0
    %2177 = vmatprep.subr.mxu0 0.0
    %2178 = vmatpush1.msra.mxu0 0.0
    %2179 = vmatprep.subr.mxu0 0.0
    %2180 = vmatpush1.msra.mxu0 0.0
    %2181 = vmatprep.subr.mxu0 0.0
    %2182 = vmatpush1.msra.mxu0 0.0
    %2183 = vmatprep.subr.mxu0 0.0
    %2184 = vmatpush1.msra.mxu0 0.0
    %2185 = vmatprep.subr.mxu0 0.0
    %2186 = vmatpush1.msra.mxu0 0.0
    %2187 = vmatprep.subr.mxu0 0.0
    %2188 = vmatpush1.msra.mxu0 0.0
    %2189 = vmatprep.subr.mxu0 0.0
    %2190 = vmatpush1.msra.mxu0 0.0
    %2191 = vmatprep.subr.mxu0 0.0
    %2192 = vmatpush1.msra.mxu0 0.0
    %2193 = vmatprep.subr.mxu0 0.0
    %2194 = vmatpush1.msra.mxu0 0.0
    %2195 = vmatprep.subr.mxu0 0.0
    %2196 = vmatpush1.msra.mxu0 0.0
    %2197 = vmatprep.subr.mxu0 0.0
    %2198 = vmatpush1.msra.mxu0 0.0
    %2199 = vmatprep.subr.mxu0 0.0
    %2200 = vmatpush1.msra.mxu0 0.0
    %2201 = vmatprep.subr.mxu0 0.0
    %2202 = vmatpush1.msra.mxu0 0.0
    %2203 = vmatprep.subr.mxu0 0.0
    %2204 = vmatpush1.msra.mxu0 0.0
    %2205 = vmatprep.subr.mxu0 0.0
    %2206 = vmatpush1.msra.mxu0 0.0
    %2207 = vmatprep.subr.mxu0 0.0
    %2208 = vmatpush1.msra.mxu0 0.0
    %2209 = vmatprep.subr.mxu0 0.0
    %2210 = vmatpush1.msra.mxu0 0.0
    %2211 = vmatprep.subr.mxu0 0.0
    %2212 = vmatpush1.msra.mxu0 0.0
    %2213 = vmatprep.subr.mxu0 0.0
    %2214 = vmatpush1.msra.mxu0 0.0
    %2215 = vmatprep.subr.mxu0 0.0
    %2216 = vmatpush1.msra.mxu0 0.0
    %2217 = vmatprep.subr.mxu0 0.0
    %2218 = vmatpush1.msra.mxu0 0.0
    %2219 = vmatprep.subr.mxu0 0.0
    %2220 = vmatpush1.msra.mxu0 0.0
    %2221 = vmatprep.subr.mxu0 0.0
    %2222 = vmatpush1.msra.mxu0 0.0
    %2223 = vmatprep.subr.mxu0 0.0
    %2224 = vmatpush1.msra.mxu0 0.0
    %2225 = vmatprep.mubr.f32.mxu0 0.0
    %2226 = vmatmul.mubr.f32.gmra.mrb[0].mxu0 %v2138
    %v2227 = vpop.f32.mrb[0].mxu0
    %v2228 = vadd.f32 0.0, %v2227
    %v2229 = vpop.f32.mrb[0].mxu0
    %2230 = vmatprep.mubr.f32.mxu0 0.0
    %2231 = vmatmul.mubr.f32.gmra.mrb[0].mxu0 %v2141
    %v2232 = vpop.f32.mrb[0].mxu0
    %v2233 = vadd.f32 0.0, %v2232
    %v2234 = vpop.f32.mrb[0].mxu0
    %2235 = vmatprep.mubr.f32.mxu0 0.0
    %2236 = vmatmul.mubr.f32.gmra.mrb[0].mxu0 %v2144
    %v2237 = vpop.f32.mrb[0].mxu0
    %v2238 = vadd.f32 0.0, %v2237
    %v2239 = vpop.f32.mrb[0].mxu0
    %2240 = vmatprep.mubr.f32.mxu0 0.0
    %2241 = vmatmul.mubr.f32.gmra.mrb[0].mxu0 %v2147
    %v2242 = vpop.f32.mrb[0].mxu0
    %v2243 = vadd.f32 0.0, %v2242
    %v2244 = vpop.f32.mrb[0].mxu0
    %2245 = vmatprep.mubr.f32.mxu0 0.0
    %2246 = vmatmul.mubr.f32.gmra.mrb[0].mxu0 %v2150
    %v2247 = vpop.f32.mrb[0].mxu0
    %v2248 = vadd.f32 0.0, %v2247
    %v2249 = vpop.f32.mrb[0].mxu0
    %2250 = vmatprep.mubr.f32.mxu0 0.0
    %2251 = vmatmul.mubr.f32.gmra.mrb[0].mxu0 %v2153
    %v2252 = vpop.f32.mrb[0].mxu0
    %v2253 = vadd.f32 0.0, %v2252
    %v2254 = vpop.f32.mrb[0].mxu0
    %2255 = vmatprep.mubr.f32.mxu0 0.0
    %2256 = vmatmul.mubr.f32.gmra.mrb[0].mxu0 %v2156
    %v2257 = vpop.f32.mrb[0].mxu0
    %v2258 = vadd.f32 0.0, %v2257
    %v2259 = vpop.f32.mrb[0].mxu0
    %2260 = vmatprep.mubr.f32.mxu0 0.0
    %2261 = vmatmul.mubr.f32.gmra.mrb[0].mxu0 %v2159
    %v2262 = vpop.f32.mrb[0].mxu0
    %v2263 = vadd.f32 0.0, %v2262
    %v2264 = vpop.f32.mrb[0].mxu0
    %2265 = vdwg.mxu0
    %v2267 = vsel %vm132, %v2112, 0
    %v2270 = vsel %vm132, %v2113, 0
    %v2273 = vsel %vm132, %v2114, 0
    %v2276 = vsel %vm132, %v2115, 0
    %v2279 = vsel %vm132, %v2116, 0
    %v2282 = vsel %vm132, %v2117, 0
    %v2285 = vsel %vm132, %v2118, 0
    %v2288 = vsel %vm132, %v2119, 0
    %2290 = vmatprep.subr.mxu0 0.0
    %2291 = vmatpush1.msra.mxu0 %v2128
    %2292 = vmatprep.subr.mxu0 0.0
    %2293 = vmatpush1.msra.mxu0 %v2129
    %2294 = vmatprep.subr.mxu0 0.0
    %2295 = vmatpush1.msra.mxu0 %v2130
    %2296 = vmatprep.subr.mxu0 0.0
    %2297 = vmatpush1.msra.mxu0 %v2131
    %2298 = vmatprep.subr.mxu0 0.0
    %2299 = vmatpush1.msra.mxu0 0.0
    %2300 = vmatprep.subr.mxu0 0.0
    %2301 = vmatpush1.msra.mxu0 0.0
    %2302 = vmatprep.subr.mxu0 0.0
    %2303 = vmatpush1.msra.mxu0 0.0
    %2304 = vmatprep.subr.mxu0 0.0
    %2305 = vmatpush1.msra.mxu0 0.0
    %2306 = vmatprep.subr.mxu0 0.0
    %2307 = vmatpush1.msra.mxu0 0.0
    %2308 = vmatprep.subr.mxu0 0.0
    %2309 = vmatpush1.msra.mxu0 0.0
    %2310 = vmatprep.subr.mxu0 0.0
    %2311 = vmatpush1.msra.mxu0 0.0
    %2312 = vmatprep.subr.mxu0 0.0
    %2313 = vmatpush1.msra.mxu0 0.0
    %2314 = vmatprep.subr.mxu0 0.0
    %2315 = vmatpush1.msra.mxu0 0.0
    %2316 = vmatprep.subr.mxu0 0.0
    %2317 = vmatpush1.msra.mxu0 0.0
    %2318 = vmatprep.subr.mxu0 0.0
    %2319 = vmatpush1.msra.mxu0 0.0
    %2320 = vmatprep.subr.mxu0 0.0
    %2321 = vmatpush1.msra.mxu0 0.0
    %2322 = vmatprep.subr.mxu0 0.0
    %2323 = vmatpush1.msra.mxu0 0.0
    %2324 = vmatprep.subr.mxu0 0.0
    %2325 = vmatpush1.msra.mxu0 0.0
    %2326 = vmatprep.subr.mxu0 0.0
    %2327 = vmatpush1.msra.mxu0 0.0
    %2328 = vmatprep.subr.mxu0 0.0
    %2329 = vmatpush1.msra.mxu0 0.0
    %2330 = vmatprep.subr.mxu0 0.0
    %2331 = vmatpush1.msra.mxu0 0.0
    %2332 = vmatprep.subr.mxu0 0.0
    %2333 = vmatpush1.msra.mxu0 0.0
    %2334 = vmatprep.subr.mxu0 0.0
    %2335 = vmatpush1.msra.mxu0 0.0
    %2336 = vmatprep.subr.mxu0 0.0
    %2337 = vmatpush1.msra.mxu0 0.0
    %2338 = vmatprep.subr.mxu0 0.0
    %2339 = vmatpush1.msra.mxu0 0.0
    %2340 = vmatprep.subr.mxu0 0.0
    %2341 = vmatpush1.msra.mxu0 0.0
    %2342 = vmatprep.subr.mxu0 0.0
    %2343 = vmatpush1.msra.mxu0 0.0
    %2344 = vmatprep.subr.mxu0 0.0
    %2345 = vmatpush1.msra.mxu0 0.0
    %2346 = vmatprep.subr.mxu0 0.0
    %2347 = vmatpush1.msra.mxu0 0.0
    %2348 = vmatprep.subr.mxu0 0.0
    %2349 = vmatpush1.msra.mxu0 0.0
    %2350 = vmatprep.subr.mxu0 0.0
    %2351 = vmatpush1.msra.mxu0 0.0
    %2352 = vmatprep.subr.mxu0 0.0
    %2353 = vmatpush1.msra.mxu0 0.0
    %2354 = vmatprep.mubr.f32.mxu0 0.0
    %2355 = vmatmul.mubr.f32.gmra.mrb[0].mxu0 %v2267
    %v2356 = vpop.f32.mrb[0].mxu0
    %v2357 = vadd.f32 %v2228, %v2356
    %v2358 = vpop.f32.mrb[0].mxu0
    %2359 = vmatprep.mubr.f32.mxu0 0.0
    %2360 = vmatmul.mubr.f32.gmra.mrb[0].mxu0 %v2270
    %v2361 = vpop.f32.mrb[0].mxu0
    %v2362 = vadd.f32 %v2233, %v2361
    %v2363 = vpop.f32.mrb[0].mxu0
    %2364 = vmatprep.mubr.f32.mxu0 0.0
    %2365 = vmatmul.mubr.f32.gmra.mrb[0].mxu0 %v2273
    %v2366 = vpop.f32.mrb[0].mxu0
    %v2367 = vadd.f32 %v2238, %v2366
    %v2368 = vpop.f32.mrb[0].mxu0
    %2369 = vmatprep.mubr.f32.mxu0 0.0
    %2370 = vmatmul.mubr.f32.gmra.mrb[0].mxu0 %v2276
    %v2371 = vpop.f32.mrb[0].mxu0
    %v2372 = vadd.f32 %v2243, %v2371
    %v2373 = vpop.f32.mrb[0].mxu0
    %2374 = vmatprep.mubr.f32.mxu0 0.0
    %2375 = vmatmul.mubr.f32.gmra.mrb[0].mxu0 %v2279
    %v2376 = vpop.f32.mrb[0].mxu0
    %v2377 = vadd.f32 %v2248, %v2376
    %v2378 = vpop.f32.mrb[0].mxu0
    %2379 = vmatprep.mubr.f32.mxu0 0.0
    %2380 = vmatmul.mubr.f32.gmra.mrb[0].mxu0 %v2282
    %v2381 = vpop.f32.mrb[0].mxu0
    %v2382 = vadd.f32 %v2253, %v2381
    %v2383 = vpop.f32.mrb[0].mxu0
    %2384 = vmatprep.mubr.f32.mxu0 0.0
    %2385 = vmatmul.mubr.f32.gmra.mrb[0].mxu0 %v2285
    %v2386 = vpop.f32.mrb[0].mxu0
    %v2387 = vadd.f32 %v2258, %v2386
    %v2388 = vpop.f32.mrb[0].mxu0
    %2389 = vmatprep.mubr.f32.mxu0 0.0
    %2390 = vmatmul.mubr.f32.gmra.mrb[0].mxu0 %v2288
    %v2391 = vpop.f32.mrb[0].mxu0
    %v2392 = vadd.f32 %v2263, %v2391
    %v2393 = vpop.f32.mrb[0].mxu0
    %2394 = vdwg.mxu0
    %v2395 = vld [vmem:[%s8] sm:$0x1]
    %v2397 = vlaneseq
    %v2398 = vshrl.u32 %v2397, 7
    %v2399 = vsub.s32 0, %v2398
    %v2400 = vrot.slane %v2395, %v2399
    %v2402 = vadd.f32 %v2357, %v2400
    %v2403 = vadd.f32 %v2362, %v2400
    %v2404 = vadd.f32 %v2367, %v2400
    %v2405 = vadd.f32 %v2372, %v2400
    %v2406 = vadd.f32 %v2377, %v2400
    %v2407 = vadd.f32 %v2382, %v2400
    %v2408 = vadd.f32 %v2387, %v2400
    %v2409 = vadd.f32 %v2392, %v2400
    %v2410 = vtanh.pop %v2402
    %v2411 = vtanh.pop %v2403
    %v2412 = vtanh.pop %v2404
    %v2413 = vtanh.pop %v2405
    %v2414 = vtanh.pop %v2406
    %v2415 = vtanh.pop %v2407
    %v2416 = vtanh.pop %v2408
    %v2417 = vtanh.pop %v2409
    %v2418 = vld [vmem:[%s9] sm:$0x1]
    %v2420 = vlaneseq
    %v2421 = vshrl.u32 %v2420, 7
    %v2422 = vsub.s32 0, %v2421
    %v2423 = vrot.slane %v2418, %v2422
    %v2425 = vmul.f32 %v2410, %v2423
    %v2426 = vmul.f32 %v2411, %v2423
    %v2427 = vmul.f32 %v2412, %v2423
    %v2428 = vmul.f32 %v2413, %v2423
    %v2429 = vmul.f32 %v2414, %v2423
    %v2430 = vmul.f32 %v2415, %v2423
    %v2431 = vmul.f32 %v2416, %v2423
    %v2432 = vmul.f32 %v2417, %v2423
    %vm2433 = vcmask 523264
    %v2434 = vsel %vm2433, %v2425, 0.0
    %2435 = vadd.xlane.f32.xlu0 %v2434
    %v2436 = vpop.xlane.xlu0 %2435
    %v2437 = vsel %vm2433, %v2426, 0.0
    %2438 = vadd.xlane.f32.xlu0 %v2437
    %v2439 = vpop.xlane.xlu0 %2438
    %v2440 = vsel %vm2433, %v2427, 0.0
    %2441 = vadd.xlane.f32.xlu0 %v2440
    %v2442 = vpop.xlane.xlu0 %2441
    %v2443 = vsel %vm2433, %v2428, 0.0
    %2444 = vadd.xlane.f32.xlu0 %v2443
    %v2445 = vpop.xlane.xlu0 %2444
    %v2446 = vsel %vm2433, %v2429, 0.0
    %2447 = vadd.xlane.f32.xlu0 %v2446
    %v2448 = vpop.xlane.xlu0 %2447
    %v2449 = vsel %vm2433, %v2430, 0.0
    %2450 = vadd.xlane.f32.xlu0 %v2449
    %v2451 = vpop.xlane.xlu0 %2450
    %v2452 = vsel %vm2433, %v2431, 0.0
    %2453 = vadd.xlane.f32.xlu0 %v2452
    %v2454 = vpop.xlane.xlu0 %2453
    %v2455 = vsel %vm2433, %v2432, 0.0
    %2456 = vadd.xlane.f32.xlu0 %v2455
    %v2457 = vpop.xlane.xlu0 %2456
    %v2458 = vrot.slane %v2436, 4
    %v2459 = vmax.f32 %v2436, %v2458
    %v2460 = vrot.slane %v2459, 2
    %v2461 = vmax.f32 %v2459, %v2460
    %v2462 = vrot.slane %v2461, 1
    %v2463 = vmax.f32 %v2461, %v2462
    %v2464 = vrot.slane %v2439, 4
    %v2465 = vmax.f32 %v2439, %v2464
    %v2466 = vrot.slane %v2465, 2
    %v2467 = vmax.f32 %v2465, %v2466
    %v2468 = vrot.slane %v2467, 1
    %v2469 = vmax.f32 %v2467, %v2468
    %v2470 = vrot.slane %v2442, 4
    %v2471 = vmax.f32 %v2442, %v2470
    %v2472 = vrot.slane %v2471, 2
    %v2473 = vmax.f32 %v2471, %v2472
    %v2474 = vrot.slane %v2473, 1
    %v2475 = vmax.f32 %v2473, %v2474
    %v2476 = vrot.slane %v2445, 4
    %v2477 = vmax.f32 %v2445, %v2476
    %v2478 = vrot.slane %v2477, 2
    %v2479 = vmax.f32 %v2477, %v2478
    %v2480 = vrot.slane %v2479, 1
    %v2481 = vmax.f32 %v2479, %v2480
    %v2482 = vrot.slane %v2448, 4
    %v2483 = vmax.f32 %v2448, %v2482
    %v2484 = vrot.slane %v2483, 2
    %v2485 = vmax.f32 %v2483, %v2484
    %v2486 = vrot.slane %v2485, 1
    %v2487 = vmax.f32 %v2485, %v2486
    %v2488 = vrot.slane %v2451, 4
    %v2489 = vmax.f32 %v2451, %v2488
    %v2490 = vrot.slane %v2489, 2
    %v2491 = vmax.f32 %v2489, %v2490
    %v2492 = vrot.slane %v2491, 1
    %v2493 = vmax.f32 %v2491, %v2492
    %v2494 = vrot.slane %v2454, 4
    %v2495 = vmax.f32 %v2454, %v2494
    %v2496 = vrot.slane %v2495, 2
    %v2497 = vmax.f32 %v2495, %v2496
    %v2498 = vrot.slane %v2497, 1
    %v2499 = vmax.f32 %v2497, %v2498
    %v2500 = vrot.slane %v2457, 4
    %v2501 = vmax.f32 %v2457, %v2500
    %v2502 = vrot.slane %v2501, 2
    %v2503 = vmax.f32 %v2501, %v2502
    %v2504 = vrot.slane %v2503, 1
    %v2505 = vmax.f32 %v2503, %v2504
    %v2506 = vsub.f32 %v2436, %v2463
    %v2507 = vsub.f32 %v2439, %v2469
    %v2508 = vsub.f32 %v2442, %v2475
    %v2509 = vsub.f32 %v2445, %v2481
    %v2510 = vsub.f32 %v2448, %v2487
    %v2511 = vsub.f32 %v2451, %v2493
    %v2512 = vsub.f32 %v2454, %v2499
    %v2513 = vsub.f32 %v2457, %v2505
    %v2514 = vmul.f32 %v2506, 1.442695
    %v2515 = vpow.pop %v2514
    %v2516 = vmul.f32 %v2507, 1.442695
    %v2517 = vpow.pop %v2516
    %v2518 = vmul.f32 %v2508, 1.442695
    %v2519 = vpow.pop %v2518
    %v2520 = vmul.f32 %v2509, 1.442695
    %v2521 = vpow.pop %v2520
    %v2522 = vmul.f32 %v2510, 1.442695
    %v2523 = vpow.pop %v2522
    %v2524 = vmul.f32 %v2511, 1.442695
    %v2525 = vpow.pop %v2524
    %v2526 = vmul.f32 %v2512, 1.442695
    %v2527 = vpow.pop %v2526
    %v2528 = vmul.f32 %v2513, 1.442695
    %v2529 = vpow.pop %v2528
    %v2530 = vrot.slane %v2515, 4
    %v2531 = vadd.f32 %v2515, %v2530
    %v2532 = vrot.slane %v2531, 2
    %v2533 = vadd.f32 %v2531, %v2532
    %v2534 = vrot.slane %v2533, 1
    %v2535 = vadd.f32 %v2533, %v2534
    %v2536 = vrot.slane %v2517, 4
    %v2537 = vadd.f32 %v2517, %v2536
    %v2538 = vrot.slane %v2537, 2
    %v2539 = vadd.f32 %v2537, %v2538
    %v2540 = vrot.slane %v2539, 1
    %v2541 = vadd.f32 %v2539, %v2540
    %v2542 = vrot.slane %v2519, 4
    %v2543 = vadd.f32 %v2519, %v2542
    %v2544 = vrot.slane %v2543, 2
    %v2545 = vadd.f32 %v2543, %v2544
    %v2546 = vrot.slane %v2545, 1
    %v2547 = vadd.f32 %v2545, %v2546
    %v2548 = vrot.slane %v2521, 4
    %v2549 = vadd.f32 %v2521, %v2548
    %v2550 = vrot.slane %v2549, 2
    %v2551 = vadd.f32 %v2549, %v2550
    %v2552 = vrot.slane %v2551, 1
    %v2553 = vadd.f32 %v2551, %v2552
    %v2554 = vrot.slane %v2523, 4
    %v2555 = vadd.f32 %v2523, %v2554
    %v2556 = vrot.slane %v2555, 2
    %v2557 = vadd.f32 %v2555, %v2556
    %v2558 = vrot.slane %v2557, 1
    %v2559 = vadd.f32 %v2557, %v2558
    %v2560 = vrot.slane %v2525, 4
    %v2561 = vadd.f32 %v2525, %v2560
    %v2562 = vrot.slane %v2561, 2
    %v2563 = vadd.f32 %v2561, %v2562
    %v2564 = vrot.slane %v2563, 1
    %v2565 = vadd.f32 %v2563, %v2564
    %v2566 = vrot.slane %v2527, 4
    %v2567 = vadd.f32 %v2527, %v2566
    %v2568 = vrot.slane %v2567, 2
    %v2569 = vadd.f32 %v2567, %v2568
    %v2570 = vrot.slane %v2569, 1
    %v2571 = vadd.f32 %v2569, %v2570
    %v2572 = vrot.slane %v2529, 4
    %v2573 = vadd.f32 %v2529, %v2572
    %v2574 = vrot.slane %v2573, 2
    %v2575 = vadd.f32 %v2573, %v2574
    %v2576 = vrot.slane %v2575, 1
    %v2577 = vadd.f32 %v2575, %v2576
    %v2578 = vrcp.pop %v2535
    %v2579 = vmul.f32 %v2515, %v2578
    %v2580 = vrcp.pop %v2541
    %v2581 = vmul.f32 %v2517, %v2580
    %v2582 = vrcp.pop %v2547
    %v2583 = vmul.f32 %v2519, %v2582
    %v2584 = vrcp.pop %v2553
    %v2585 = vmul.f32 %v2521, %v2584
    %v2586 = vrcp.pop %v2559
    %v2587 = vmul.f32 %v2523, %v2586
    %v2588 = vrcp.pop %v2565
    %v2589 = vmul.f32 %v2525, %v2588
    %v2590 = vrcp.pop %v2571
    %v2591 = vmul.f32 %v2527, %v2590
    %v2592 = vrcp.pop %v2577
    %v2593 = vmul.f32 %v2529, %v2592
    %v2594 = vmul.f32 %v2112, %v2579
    %v2595 = vmul.f32 %v2113, %v2581
    %v2596 = vmul.f32 %v2114, %v2583
    %v2597 = vmul.f32 %v2115, %v2585
    %v2598 = vmul.f32 %v2116, %v2587
    %v2599 = vmul.f32 %v2117, %v2589
    %v2600 = vmul.f32 %v2118, %v2591
    %v2601 = vmul.f32 %v2119, %v2593
    %v2602 = vsel %vm132, %v2594, 0.0
    %v2603 = vrot.slane %v2602, 4
    %v2604 = vadd.f32 %v2602, %v2603
    %v2605 = vrot.slane %v2604, 2
    %v2606 = vadd.f32 %v2604, %v2605
    %v2607 = vrot.slane %v2606, 1
    %v2608 = vadd.f32 %v2606, %v2607
    %v2609 = vsel %vm132, %v2595, 0.0
    %v2610 = vrot.slane %v2609, 4
    %v2611 = vadd.f32 %v2609, %v2610
    %v2612 = vrot.slane %v2611, 2
    %v2613 = vadd.f32 %v2611, %v2612
    %v2614 = vrot.slane %v2613, 1
    %v2615 = vadd.f32 %v2613, %v2614
    %v2616 = vsel %vm132, %v2596, 0.0
    %v2617 = vrot.slane %v2616, 4
    %v2618 = vadd.f32 %v2616, %v2617
    %v2619 = vrot.slane %v2618, 2
    %v2620 = vadd.f32 %v2618, %v2619
    %v2621 = vrot.slane %v2620, 1
    %v2622 = vadd.f32 %v2620, %v2621
    %v2623 = vsel %vm132, %v2597, 0.0
    %v2624 = vrot.slane %v2623, 4
    %v2625 = vadd.f32 %v2623, %v2624
    %v2626 = vrot.slane %v2625, 2
    %v2627 = vadd.f32 %v2625, %v2626
    %v2628 = vrot.slane %v2627, 1
    %v2629 = vadd.f32 %v2627, %v2628
    %v2630 = vsel %vm132, %v2598, 0.0
    %v2631 = vrot.slane %v2630, 4
    %v2632 = vadd.f32 %v2630, %v2631
    %v2633 = vrot.slane %v2632, 2
    %v2634 = vadd.f32 %v2632, %v2633
    %v2635 = vrot.slane %v2634, 1
    %v2636 = vadd.f32 %v2634, %v2635
    %v2637 = vsel %vm132, %v2599, 0.0
    %v2638 = vrot.slane %v2637, 4
    %v2639 = vadd.f32 %v2637, %v2638
    %v2640 = vrot.slane %v2639, 2
    %v2641 = vadd.f32 %v2639, %v2640
    %v2642 = vrot.slane %v2641, 1
    %v2643 = vadd.f32 %v2641, %v2642
    %v2644 = vsel %vm132, %v2600, 0.0
    %v2645 = vrot.slane %v2644, 4
    %v2646 = vadd.f32 %v2644, %v2645
    %v2647 = vrot.slane %v2646, 2
    %v2648 = vadd.f32 %v2646, %v2647
    %v2649 = vrot.slane %v2648, 1
    %v2650 = vadd.f32 %v2648, %v2649
    %v2651 = vsel %vm132, %v2601, 0.0
    %v2652 = vrot.slane %v2651, 4
    %v2653 = vadd.f32 %v2651, %v2652
    %v2654 = vrot.slane %v2653, 2
    %v2655 = vadd.f32 %v2653, %v2654
    %v2656 = vrot.slane %v2655, 1
    %v2657 = vadd.f32 %v2655, %v2656
    %v2658 = vmul.f32 %v2120, %v2579
    %v2659 = vmul.f32 %v2121, %v2581
    %v2660 = vmul.f32 %v2122, %v2583
    %v2661 = vmul.f32 %v2123, %v2585
    %v2662 = vmul.f32 %v2124, %v2587
    %v2663 = vmul.f32 %v2125, %v2589
    %v2664 = vmul.f32 %v2126, %v2591
    %v2665 = vmul.f32 %v2127, %v2593
    %v2666 = vsel %vm132, %v2658, 0.0
    %v2667 = vrot.slane %v2666, 4
    %v2668 = vadd.f32 %v2666, %v2667
    %v2669 = vrot.slane %v2668, 2
    %v2670 = vadd.f32 %v2668, %v2669
    %v2671 = vrot.slane %v2670, 1
    %v2672 = vadd.f32 %v2670, %v2671
    %v2673 = vsel %vm132, %v2659, 0.0
    %v2674 = vrot.slane %v2673, 4
    %v2675 = vadd.f32 %v2673, %v2674
    %v2676 = vrot.slane %v2675, 2
    %v2677 = vadd.f32 %v2675, %v2676
    %v2678 = vrot.slane %v2677, 1
    %v2679 = vadd.f32 %v2677, %v2678
    %v2680 = vsel %vm132, %v2660, 0.0
    %v2681 = vrot.slane %v2680, 4
    %v2682 = vadd.f32 %v2680, %v2681
    %v2683 = vrot.slane %v2682, 2
    %v2684 = vadd.f32 %v2682, %v2683
    %v2685 = vrot.slane %v2684, 1
    %v2686 = vadd.f32 %v2684, %v2685
    %v2687 = vsel %vm132, %v2661, 0.0
    %v2688 = vrot.slane %v2687, 4
    %v2689 = vadd.f32 %v2687, %v2688
    %v2690 = vrot.slane %v2689, 2
    %v2691 = vadd.f32 %v2689, %v2690
    %v2692 = vrot.slane %v2691, 1
    %v2693 = vadd.f32 %v2691, %v2692
    %v2694 = vsel %vm132, %v2662, 0.0
    %v2695 = vrot.slane %v2694, 4
    %v2696 = vadd.f32 %v2694, %v2695
    %v2697 = vrot.slane %v2696, 2
    %v2698 = vadd.f32 %v2696, %v2697
    %v2699 = vrot.slane %v2698, 1
    %v2700 = vadd.f32 %v2698, %v2699
    %v2701 = vsel %vm132, %v2663, 0.0
    %v2702 = vrot.slane %v2701, 4
    %v2703 = vadd.f32 %v2701, %v2702
    %v2704 = vrot.slane %v2703, 2
    %v2705 = vadd.f32 %v2703, %v2704
    %v2706 = vrot.slane %v2705, 1
    %v2707 = vadd.f32 %v2705, %v2706
    %v2708 = vsel %vm132, %v2664, 0.0
    %v2709 = vrot.slane %v2708, 4
    %v2710 = vadd.f32 %v2708, %v2709
    %v2711 = vrot.slane %v2710, 2
    %v2712 = vadd.f32 %v2710, %v2711
    %v2713 = vrot.slane %v2712, 1
    %v2714 = vadd.f32 %v2712, %v2713
    %v2715 = vsel %vm132, %v2665, 0.0
    %v2716 = vrot.slane %v2715, 4
    %v2717 = vadd.f32 %v2715, %v2716
    %v2718 = vrot.slane %v2717, 2
    %v2719 = vadd.f32 %v2717, %v2718
    %v2720 = vrot.slane %v2719, 1
    %v2721 = vadd.f32 %v2719, %v2720
    %vm2722 = vcmask 253952
    %2723 = vst.msk [vmem:[#allocation15] sm:$0x1] %vm2722, %v2608
    %2724 = vst.msk [vmem:[#allocation15 + $0x1] sm:$0x1] %vm2722, %v2615
    %2725 = vst.msk [vmem:[#allocation15 + $0x2] sm:$0x1] %vm2722, %v2622
    %2726 = vst.msk [vmem:[#allocation15 + $0x3] sm:$0x1] %vm2722, %v2629
    %2727 = vst.msk [vmem:[#allocation15 + $0x4] sm:$0x1] %vm2722, %v2636
    %2728 = vst.msk [vmem:[#allocation15 + $0x5] sm:$0x1] %vm2722, %v2643
    %2729 = vst.msk [vmem:[#allocation15 + $0x6] sm:$0x1] %vm2722, %v2650
    %2730 = vst.msk [vmem:[#allocation15 + $0x7] sm:$0x1] %vm2722, %v2657
    %2739 = vrot.lane.b32.xlu0 %v2672, 32
    %v2740 = vpop.permute.xlu0 %2739
    %2741 = vrot.lane.b32.xlu0 %v2679, 32
    %v2742 = vpop.permute.xlu0 %2741
    %2743 = vrot.lane.b32.xlu0 %v2686, 32
    %v2744 = vpop.permute.xlu0 %2743
    %2745 = vrot.lane.b32.xlu0 %v2693, 32
    %v2746 = vpop.permute.xlu0 %2745
    %2747 = vrot.lane.b32.xlu0 %v2700, 32
    %v2748 = vpop.permute.xlu0 %2747
    %2749 = vrot.lane.b32.xlu0 %v2707, 32
    %v2750 = vpop.permute.xlu0 %2749
    %2751 = vrot.lane.b32.xlu0 %v2714, 32
    %v2752 = vpop.permute.xlu0 %2751
    %2753 = vrot.lane.b32.xlu0 %v2721, 32
    %v2754 = vpop.permute.xlu0 %2753
    %vm2763 = vcmask 516352
    %2764 = vst.msk [vmem:[#allocation15] sm:$0x1] %vm2763, %v2740
    %2765 = vst.msk [vmem:[#allocation15 + $0x1] sm:$0x1] %vm2763, %v2742
    %2766 = vst.msk [vmem:[#allocation15 + $0x2] sm:$0x1] %vm2763, %v2744
    %2767 = vst.msk [vmem:[#allocation15 + $0x3] sm:$0x1] %vm2763, %v2746
    %2768 = vst.msk [vmem:[#allocation15 + $0x4] sm:$0x1] %vm2763, %v2748
    %2769 = vst.msk [vmem:[#allocation15 + $0x5] sm:$0x1] %vm2763, %v2750
    %2770 = vst.msk [vmem:[#allocation15 + $0x6] sm:$0x1] %vm2763, %v2752
    %2771 = vst.msk [vmem:[#allocation15 + $0x7] sm:$0x1] %vm2763, %v2754
    // Predicated region
    $region62: #{tpu_custom_call.1} parent=1 // pred_check
      _
    $region63: #{tpu_custom_call.1} parent=1 // pred_check_branch
      %2773 = sbr.rel (0) target = $region65
    $region64: #{tpu_custom_call.1} parent=1 // pred_region
      %s2775 = ssub.s32 128, 128
      %2776 = vsyncadd [#allocation8], %s2775
      %s2777 = sshll.u32 [#allocation15], 4
      %s2778 = int_to_ptr.vmem [resolvable:$true] %s2777
      %2783 = dma.vmem_to_hbm [thread:$0]  %s2778, 128, %s10, [#allocation8], 16, 16, 1
    $region65: #{tpu_custom_call.1} parent=1 // pred_fallthru
      _
    // Predicated region
    $region66: #{tpu_custom_call.1} parent=1 // pred_check
      _
    $region67: #{tpu_custom_call.1} parent=1 // pred_check_branch
      %2785 = sbr.rel (0) target = $region69
    $region68: #{tpu_custom_call.1} parent=1 // pred_region
      %2786 = dma.done [#allocation8], 128
    $region69: #{tpu_custom_call.1} parent=1 // pred_fallthru
      _
    %2787 = vsyncpa [#allocation7], 1
    %2788 = vsyncpa [#allocation10], 1
    %2789 = vsyncpa [#allocation13], 1
    %2790 = vsyncpa [#allocation8], 1

</llo_original>
